<compile_context>
chip_gen: v5e
topology: v5e:2x2
jax: 0.10.0
libtpu: 0.0.40
codegen_flags: <defaults>
</compile_context>

<pallas_src>
import functools
import math

import jax
import jax.numpy as jnp
from jax import lax
from jax.experimental import pallas as pl
from jax.experimental.pallas import tpu as pltpu


_STATIC_KV_UNROLL = 4          # fully unroll the KV-tile loop when n_kv <= this
_SINGLE_BUFFER_OK = [True]     # cached: does this JAX support pl.Buffered(1)?


def _mha_kernel(xenc_ref, xdec_ref,
                wq_ref, bq_ref, wk_ref, bk_ref, wv_ref, bv_ref,
                wo_ref, bo_ref,
                out_ref,
                k_scr, v_scr, *ctx_scr,
                n_head, dim_head, kv_tile, fuse_out_proj):
    """One (batch element, q-row tile) per grid step.

    Refs:
      xenc_ref : (1, S,  D)      encoder tokens (K/V source)
      xdec_ref : (1, Tq, D)      decoder q-row tile
      wq/wk/wv : (H, D, dh)      head-major, pre-transposed (x @ W)
      bq/bk/bv : (H, 1, dh)      f32
      wo_ref   : (H, dh, D), or (D, D) when fuse_out_proj
      bo_ref   : (1, D)          f32
      out_ref  : (1, Tq, D)
      k_scr/v_scr : VMEM (H, S, dh) scratch (activation dtype); written once
                    per batch element (qi == 0), reused by every q tile.
      ctx_scr  : optional VMEM (Tq, D) scratch (only when fuse_out_proj).
    """
    mm_dtype = xdec_ref.dtype                     # MXU operand dtype (f32 acc)
    seq_len = xenc_ref.shape[1]
    tq = xdec_ref.shape[1]
    d_model = out_ref.shape[-1]
    scale = 1.0 / math.sqrt(dim_head)
    n_kv = seq_len // kv_tile

    # ---- K/V projections: once per batch element, reused across q tiles ----
    @pl.when(pl.program_id(1) == 0)
    def _project_kv():
        xe = xenc_ref[0]                                              # (S, D)
        for h in range(n_head):
            k_scr[h] = (jnp.dot(xe, wk_ref[h],
                                preferred_element_type=jnp.float32)
                        + bk_ref[h]).astype(mm_dtype)
            v_scr[h] = (jnp.dot(xe, wv_ref[h],
                                preferred_element_type=jnp.float32)
                        + bv_ref[h]).astype(mm_dtype)

    xd = xdec_ref[0]                                                  # (Tq, D)
    acc_out = None if fuse_out_proj else jnp.zeros((tq, d_model), jnp.float32)

    # Contract dh of Q against dh of K directly (no explicit K^T / vxpose).
    qk_dims = (((1,), (1,)), ((), ()))

    for h in range(n_head):
        # Per-head Q projection; 1/sqrt(dh) folded into Q once.
        q_h = ((jnp.dot(xd, wq_ref[h], preferred_element_type=jnp.float32)
                + bq_ref[h]) * scale).astype(mm_dtype)                # (Tq, dh)

        def kv_step(start, carry, h=h, q_h=q_h):
            m_p, l_p, a_p = carry
            k_t = k_scr[h, pl.ds(start, kv_tile), :]                  # (Tk, dh)
            v_t = v_scr[h, pl.ds(start, kv_tile), :]
            s = lax.dot_general(q_h, k_t, qk_dims,
                                preferred_element_type=jnp.float32)   # (Tq, Tk)
            m_n = jnp.maximum(m_p, jnp.max(s, axis=-1, keepdims=True))
            alpha = jnp.exp(m_p - m_n)
            p = jnp.exp(s - m_n)                                      # f32 EUP
            l_n = alpha * l_p + jnp.sum(p, axis=-1, keepdims=True)
            a_n = alpha * a_p + jnp.dot(p.astype(mm_dtype), v_t,
                                        preferred_element_type=jnp.float32)
            return m_n, l_n, a_n

        carry = (jnp.full((tq, 1), -jnp.inf, jnp.float32),
                 jnp.zeros((tq, 1), jnp.float32),
                 jnp.zeros((tq, dim_head), jnp.float32))
        if n_kv <= _STATIC_KV_UNROLL:
            for i in range(n_kv):
                carry = kv_step(i * kv_tile, carry)
        else:
            carry = lax.fori_loop(
                0, n_kv,
                lambda i, c: kv_step(pl.multiple_of(i * kv_tile, kv_tile), c),
                carry)
        _, l_f, acc_h = carry

        ctx = acc_h * (1.0 / l_f)            # exact softmax norm, (Tq,1) recip

        if fuse_out_proj:
            # dh % 128 == 0: lane-aligned slice store, one deep-K GEMM later.
            ctx_scr[0][:, h * dim_head:(h + 1) * dim_head] = ctx.astype(mm_dtype)
        else:
            acc_out = acc_out + jnp.dot(ctx.astype(mm_dtype), wo_ref[h],
                                        preferred_element_type=jnp.float32)

    if fuse_out_proj:
        out = jnp.dot(ctx_scr[0][...], wo_ref[...],
                      preferred_element_type=jnp.float32) + bo_ref[...]
    else:
        out = acc_out + bo_ref[...]
    out_ref[0] = out.astype(out_ref.dtype)


def _pick_tile(n, cap):
    """Largest tile t <= cap with n % t == 0 and t % 8 == 0 (or t == n)."""
    if n <= cap:
        return n
    for t in range(cap, 7, -1):
        if n % t == 0 and t % 8 == 0:
            return t
    # TODO(synk): ragged sequence lengths need a masked last tile; fall back
    # to a single full-length tile (correct, but loses pipelining).
    return n


def _make_compiler_params(**kw):
    cls = (getattr(pltpu, "CompilerParams", None)
           or getattr(pltpu, "TPUCompilerParams", None))
    return cls(**kw) if cls is not None else None


def _vmem_limit_bytes(est_bytes):
    phys = 64 * 1024 * 1024                    # conservative default (v7x)
    try:
        phys = int(pltpu.get_tpu_info().vmem_capacity_bytes)
    except Exception:
        pass
    cap = int(phys * 0.78)                     # headroom below physical VMEM
    return int(min(cap, max(32 * 1024 * 1024, int(est_bytes * 1.5))))


def mh_attention(xenc, xdec, params, n_head, *, q_tile=256, kv_tile=512):
    """Multi-head attention matching MHAttention.forward (mask=None)."""
    B, S, D = xenc.shape
    assert xdec.shape == (B, S, D)
    assert D % n_head == 0
    dh = D // n_head

    tq = _pick_tile(S, q_tile)
    n_q = S // tq
    tk = _pick_tile(S, kv_tile)

    act_dtype = xdec.dtype
    f32 = jnp.float32

    # Head-major, pre-transposed weights: x @ w[h] == head h's projection.
    # (nn.Linear does x @ W.T; head h owns output columns [h*dh, (h+1)*dh).)
    def head_major(w):                         # (D_out, D_in) -> (H, D_in, dh)
        return w.T.reshape(D, n_head, dh).transpose(1, 0, 2).astype(act_dtype)

    wq = head_major(params["wq"])
    wk = head_major(params["wk"])
    wv = head_major(params["wv"])
    # Biases stay f32: they are added into f32 accumulators.
    bq = params["bq"].reshape(n_head, 1, dh).astype(f32)
    bk = params["bk"].reshape(n_head, 1, dh).astype(f32)
    bv = params["bv"].reshape(n_head, 1, dh).astype(f32)
    bo = params["bo"].reshape(1, D).astype(f32)

    fuse_out_proj = (dh % 128 == 0)
    if fuse_out_proj:
        wo = params["wo"].T.astype(act_dtype)                        # (D, D)
        wo_shape = (D, D)
    else:
        wo = params["wo"].T.reshape(n_head, dh, D).astype(act_dtype)  # (H,dh,D)
        wo_shape = (n_head, dh, D)

    kernel = functools.partial(_mha_kernel, n_head=n_head, dim_head=dh,
                               kv_tile=tk, fuse_out_proj=fuse_out_proj)

    # Rough per-step VMEM footprint -> explicit scoped-VMEM limit w/ headroom.
    ab = jnp.dtype(act_dtype).itemsize
    est = (2 * S * D * ab                    # enc block (double-buffered)
           + 4 * tq * D * ab                 # dec + out blocks (double-buffered)
           + 2 * 4 * D * D * ab + 4 * D * 4  # weights (worst case 2x) + biases
           + 2 * S * D * ab                  # K/V scratch
           + (tq * D * ab if fuse_out_proj else 0)
           + (tq * tk + 2 * tq * D + tq * dh) * 4)   # f32 transients
    vmem_limit = _vmem_limit_bytes(est)

    scratch = [pltpu.VMEM((n_head, S, dh), act_dtype),
               pltpu.VMEM((n_head, S, dh), act_dtype)]
    if fuse_out_proj:
        scratch.append(pltpu.VMEM((tq, D), act_dtype))

    def const_spec(shape, single_buffer):
        ndim = len(shape)

        def index_map(b, qi):
            return (0,) * ndim

        if single_buffer:
            # Constant-index blocks do not need double buffering.
            return pl.BlockSpec(shape, index_map, pipeline_mode=pl.Buffered(1))
        return pl.BlockSpec(shape, index_map)

    def run(single_buffer):
        wspec = lambda shp: const_spec(shp, single_buffer)
        in_specs = [
            pl.BlockSpec((1, S, D), lambda b, qi: (b, 0, 0)),     # xenc
            pl.BlockSpec((1, tq, D), lambda b, qi: (b, qi, 0)),   # xdec
            wspec((n_head, D, dh)), wspec((n_head, 1, dh)),       # wq, bq
            wspec((n_head, D, dh)), wspec((n_head, 1, dh)),       # wk, bk
            wspec((n_head, D, dh)), wspec((n_head, 1, dh)),       # wv, bv
            wspec(wo_shape), wspec((1, D)),                       # wo, bo
        ]
        out_spec = pl.BlockSpec((1, tq, D), lambda b, qi: (b, qi, 0))

        grid_spec = pltpu.PrefetchScalarGridSpec(
            num_scalar_prefetch=0,
            grid=(B, n_q),
            in_specs=in_specs,
            out_specs=out_spec,
            scratch_shapes=scratch,
        )
        # qi must be "arbitrary": K/V scratch is carried across q tiles.
        # B stays "parallel" so megacore (v7x: 2 TCs) still has work.
        cp = _make_compiler_params(
            dimension_semantics=("parallel", "arbitrary"),
            vmem_limit_bytes=vmem_limit,
        )
        return pl.pallas_call(
            kernel,
            out_shape=jax.ShapeDtypeStruct((B, S, D), act_dtype),
            grid_spec=grid_spec,
            compiler_params=cp,
        )(xenc, xdec, wq, bq, wk, bk, wv, bv, wo, bo)

    if _SINGLE_BUFFER_OK[0]:
        try:
            return run(single_buffer=True)
        except Exception:
            # pl.Buffered(1) not supported by this JAX/Mosaic combination;
            # fall back to default (double-buffered) pipelining.
            _SINGLE_BUFFER_OK[0] = False
    return run(single_buffer=False)


def _reference(xenc, xdec, params, n_head):
    """Pure-JAX f32 reference mirroring the PyTorch forward exactly."""
    B, S, D = xenc.shape
    dh = D // n_head
    q = xdec @ params["wq"].T + params["bq"]
    k = xenc @ params["wk"].T + params["bk"]
    v = xenc @ params["wv"].T + params["bv"]
    q = q.reshape(B, S, n_head, dh).transpose(0, 2, 1, 3)
    k = k.reshape(B, S, n_head, dh).transpose(0, 2, 1, 3)
    v = v.reshape(B, S, n_head, dh).transpose(0, 2, 1, 3)
    score = (q @ k.transpose(0, 1, 3, 2)) / math.sqrt(dh)
    score = jax.nn.softmax(score, axis=-1) @ v
    score = score.transpose(0, 2, 1, 3).reshape(B, S, D)
    return score @ params["wo"].T + params["bo"]


def init_params(key, dim_model):
    """Init mimicking PyTorch nn.Linear defaults (U(+-1/sqrt(fan_in)))."""
    bound = 1.0 / math.sqrt(dim_model)
    keys = jax.random.split(key, 8)
    u = lambda k, shape: jax.random.uniform(k, shape, jnp.float32, -bound, bound)
    return {
        "wq": u(keys[0], (dim_model, dim_model)), "bq": u(keys[1], (dim_model,)),
        "wk": u(keys[2], (dim_model, dim_model)), "bk": u(keys[3], (dim_model,)),
        "wv": u(keys[4], (dim_model, dim_model)), "bv": u(keys[5], (dim_model,)),
        "wo": u(keys[6], (dim_model, dim_model)), "bo": u(keys[7], (dim_model,)),
    }


if __name__ == "__main__":
    def run_case(B, S, D, H, q_tile, kv_tile, seed):
        key = jax.random.PRNGKey(seed)
        kp, ke, kd = jax.random.split(key, 3)
        params = init_params(kp, D)
        xenc = jax.random.normal(ke, (B, S, D), jnp.float32)
        xdec = jax.random.normal(kd, (B, S, D), jnp.float32)
        out = jax.block_until_ready(
            mh_attention(xenc, xdec, params, H, q_tile=q_tile, kv_tile=kv_tile))
        with jax.default_matmul_precision("highest"):
            ref = _reference(xenc, xdec, params, H)
        assert out.shape == (B, S, D)
        assert jnp.allclose(out, ref, atol=5e-3, rtol=5e-3), \
            f"f32 mismatch vs reference at {(B, S, D, H)}"
        return xenc, xdec, params, ref

    # Base config (single q tile, single KV tile).
    B, S, D, H = 2, 8, 32, 4
    xenc, xdec, params, ref = run_case(B, S, D, H, q_tile=256, kv_tile=512, seed=0)

    # Multiple q tiles (K/V scratch reused across q tiles) and multiple KV
    # tiles (statically unrolled online-softmax path).
    run_case(2, 16, 32, 4, q_tile=8, kv_tile=8, seed=1)

    # Longer sequence exercising the lax.fori_loop KV path (n_kv > unroll cap)
    # and K/V-scratch reuse across 4 q tiles.
    run_case(2, 64, 32, 4, q_tile=16, kv_tile=8, seed=2)

    # bf16 path on the base config: bf16 MXU operands, f32 accumulation,
    # f32 biases and f32 softmax (loose sanity check vs the f32 reference).
    out_bf16 = jax.block_until_ready(
        mh_attention(xenc.astype(jnp.bfloat16), xdec.astype(jnp.bfloat16), params, H))
    assert out_bf16.dtype == jnp.bfloat16
    diff = float(jnp.max(jnp.abs(out_bf16.astype(jnp.float32) - ref)))
    assert math.isfinite(diff) and diff < 0.25, "bf16 path sanity check failed"

    print("KERNEL_OK")
</pallas_src>

<mosaic_0001>
module attributes {stable_mosaic.version = 11 : i64} {
  func.func @_mha_kernel(%arg0: i32, %arg1: i32, %arg2: memref<1x8x32xf32, #tpu.memory_space<vmem>>, %arg3: memref<1x8x32xf32, #tpu.memory_space<vmem>>, %arg4: memref<4x32x8xf32, #tpu.memory_space<vmem>>, %arg5: memref<4x1x8xf32, #tpu.memory_space<vmem>>, %arg6: memref<4x32x8xf32, #tpu.memory_space<vmem>>, %arg7: memref<4x1x8xf32, #tpu.memory_space<vmem>>, %arg8: memref<4x32x8xf32, #tpu.memory_space<vmem>>, %arg9: memref<4x1x8xf32, #tpu.memory_space<vmem>>, %arg10: memref<4x8x32xf32, #tpu.memory_space<vmem>>, %arg11: memref<1x32xf32, #tpu.memory_space<vmem>>, %arg12: memref<1x8x32xf32, #tpu.memory_space<vmem>>, %arg13: memref<4x8x8xf32, #tpu.memory_space<vmem>>, %arg14: memref<4x8x8xf32, #tpu.memory_space<vmem>>) attributes {dimension_semantics = [#tpu.dimension_semantics<parallel>, #tpu.dimension_semantics<arbitrary>], iteration_bounds = array<i64: 2, 1>, scalar_prefetch = 0 : i64, scratch_operands = 2 : i64, tpu.core_type = #tpu.core_type<tc>, window_params = [{transform_indices = @transform_0, window_bounds = array<i64: 1, 8, 32>}, {transform_indices = @transform_1, window_bounds = array<i64: 1, 8, 32>}, {pipeline_mode = #tpu.pipeline_mode<synchronous>, transform_indices = @transform_2, window_bounds = array<i64: 4, 32, 8>}, {pipeline_mode = #tpu.pipeline_mode<synchronous>, transform_indices = @transform_3, window_bounds = array<i64: 4, 1, 8>}, {pipeline_mode = #tpu.pipeline_mode<synchronous>, transform_indices = @transform_4, window_bounds = array<i64: 4, 32, 8>}, {pipeline_mode = #tpu.pipeline_mode<synchronous>, transform_indices = @transform_5, window_bounds = array<i64: 4, 1, 8>}, {pipeline_mode = #tpu.pipeline_mode<synchronous>, transform_indices = @transform_6, window_bounds = array<i64: 4, 32, 8>}, {pipeline_mode = #tpu.pipeline_mode<synchronous>, transform_indices = @transform_7, window_bounds = array<i64: 4, 1, 8>}, {pipeline_mode = #tpu.pipeline_mode<synchronous>, transform_indices = @transform_8, window_bounds = array<i64: 4, 8, 32>}, {pipeline_mode = #tpu.pipeline_mode<synchronous>, transform_indices = @transform_9, window_bounds = array<i64: 1, 32>}, {transform_indices = @transform_10, window_bounds = array<i64: 1, 8, 32>}]} {
    %c0_i32 = arith.constant 0 : i32
    %0 = arith.cmpi eq, %arg1, %c0_i32 : i32
    %1 = arith.extui %0 : i1 to i32
    %c0_i32_0 = arith.constant 0 : i32
    %2 = arith.cmpi ne, %1, %c0_i32_0 : i32
    scf.if %2 {
      %c0_109 = arith.constant 0 : index
      %c0_110 = arith.constant 0 : index
      %c0_111 = arith.constant 0 : index
      %176 = vector.load %arg2[%c0_109, %c0_110, %c0_111] : memref<1x8x32xf32, #tpu.memory_space<vmem>>, vector<1x8x32xf32>
      %177 = vector.shape_cast %176 : vector<1x8x32xf32> to vector<8x32xf32>
      %c0_112 = arith.constant 0 : index
      %c0_113 = arith.constant 0 : index
      %c0_114 = arith.constant 0 : index
      %178 = vector.load %arg6[%c0_112, %c0_113, %c0_114] : memref<4x32x8xf32, #tpu.memory_space<vmem>>, vector<1x32x8xf32>
      %179 = vector.shape_cast %178 : vector<1x32x8xf32> to vector<32x8xf32>
      %cst_115 = arith.constant dense<0.000000e+00> : vector<8x8xf32>
      %180 = tpu.matmul %177, %179, %cst_115 {dimension_numbers = #tpu.dot_dimension_numbers<[1], [0], [0], [1], [0, 0, 1, 1], [], []>} : vector<8x32xf32>, vector<32x8xf32>, vector<8x8xf32> -> vector<8x8xf32>
      %c0_116 = arith.constant 0 : index
      %c0_117 = arith.constant 0 : index
      %c0_118 = arith.constant 0 : index
      %181 = vector.load %arg7[%c0_116, %c0_117, %c0_118] : memref<4x1x8xf32, #tpu.memory_space<vmem>>, vector<1x1x8xf32>
      %182 = vector.shape_cast %181 : vector<1x1x8xf32> to vector<1x8xf32>
      %183 = vector.broadcast %182 : vector<1x8xf32> to vector<8x8xf32>
      %184 = arith.addf %180, %183 : vector<8x8xf32>
      %c0_119 = arith.constant 0 : index
      %c0_120 = arith.constant 0 : index
      %c0_121 = arith.constant 0 : index
      %185 = vector.load %arg13[%c0_119, %c0_120, %c0_121] : memref<4x8x8xf32, #tpu.memory_space<vmem>>, vector<1x8x8xf32>
      %186 = vector.shape_cast %185 : vector<1x8x8xf32> to vector<8x8xf32>
      %187 = vector.shape_cast %184 : vector<8x8xf32> to vector<1x8x8xf32>
      tpu.vector_store %arg13[%c0_119, %c0_120, %c0_121], %187 {strides = array<i32>} : memref<4x8x8xf32, #tpu.memory_space<vmem>>, vector<1x8x8xf32>,
      %c0_122 = arith.constant 0 : index
      %c0_123 = arith.constant 0 : index
      %c0_124 = arith.constant 0 : index
      %188 = vector.load %arg8[%c0_122, %c0_123, %c0_124] : memref<4x32x8xf32, #tpu.memory_space<vmem>>, vector<1x32x8xf32>
      %189 = vector.shape_cast %188 : vector<1x32x8xf32> to vector<32x8xf32>
      %cst_125 = arith.constant dense<0.000000e+00> : vector<8x8xf32>
      %190 = tpu.matmul %177, %189, %cst_125 {dimension_numbers = #tpu.dot_dimension_numbers<[1], [0], [0], [1], [0, 0, 1, 1], [], []>} : vector<8x32xf32>, vector<32x8xf32>, vector<8x8xf32> -> vector<8x8xf32>
      %c0_126 = arith.constant 0 : index
      %c0_127 = arith.constant 0 : index
      %c0_128 = arith.constant 0 : index
      %191 = vector.load %arg9[%c0_126, %c0_127, %c0_128] : memref<4x1x8xf32, #tpu.memory_space<vmem>>, vector<1x1x8xf32>
      %192 = vector.shape_cast %191 : vector<1x1x8xf32> to vector<1x8xf32>
      %193 = vector.broadcast %192 : vector<1x8xf32> to vector<8x8xf32>
      %194 = arith.addf %190, %193 : vector<8x8xf32>
      %c0_129 = arith.constant 0 : index
      %c0_130 = arith.constant 0 : index
      %c0_131 = arith.constant 0 : index
      %195 = vector.load %arg14[%c0_129, %c0_130, %c0_131] : memref<4x8x8xf32, #tpu.memory_space<vmem>>, vector<1x8x8xf32>
      %196 = vector.shape_cast %195 : vector<1x8x8xf32> to vector<8x8xf32>
      %197 = vector.shape_cast %194 : vector<8x8xf32> to vector<1x8x8xf32>
      tpu.vector_store %arg14[%c0_129, %c0_130, %c0_131], %197 {strides = array<i32>} : memref<4x8x8xf32, #tpu.memory_space<vmem>>, vector<1x8x8xf32>,
      %c1_132 = arith.constant 1 : index
      %c0_133 = arith.constant 0 : index
      %c0_134 = arith.constant 0 : index
      %198 = vector.load %arg6[%c1_132, %c0_133, %c0_134] : memref<4x32x8xf32, #tpu.memory_space<vmem>>, vector<1x32x8xf32>
      %199 = vector.shape_cast %198 : vector<1x32x8xf32> to vector<32x8xf32>
      %cst_135 = arith.constant dense<0.000000e+00> : vector<8x8xf32>
      %200 = tpu.matmul %177, %199, %cst_135 {dimension_numbers = #tpu.dot_dimension_numbers<[1], [0], [0], [1], [0, 0, 1, 1], [], []>} : vector<8x32xf32>, vector<32x8xf32>, vector<8x8xf32> -> vector<8x8xf32>
      %c1_136 = arith.constant 1 : index
      %c0_137 = arith.constant 0 : index
      %c0_138 = arith.constant 0 : index
      %201 = vector.load %arg7[%c1_136, %c0_137, %c0_138] : memref<4x1x8xf32, #tpu.memory_space<vmem>>, vector<1x1x8xf32>
      %202 = vector.shape_cast %201 : vector<1x1x8xf32> to vector<1x8xf32>
      %203 = vector.broadcast %202 : vector<1x8xf32> to vector<8x8xf32>
      %204 = arith.addf %200, %203 : vector<8x8xf32>
      %c1_139 = arith.constant 1 : index
      %c0_140 = arith.constant 0 : index
      %c0_141 = arith.constant 0 : index
      %205 = vector.load %arg13[%c1_139, %c0_140, %c0_141] : memref<4x8x8xf32, #tpu.memory_space<vmem>>, vector<1x8x8xf32>
      %206 = vector.shape_cast %205 : vector<1x8x8xf32> to vector<8x8xf32>
      %207 = vector.shape_cast %204 : vector<8x8xf32> to vector<1x8x8xf32>
      tpu.vector_store %arg13[%c1_139, %c0_140, %c0_141], %207 {strides = array<i32>} : memref<4x8x8xf32, #tpu.memory_space<vmem>>, vector<1x8x8xf32>,
      %c1_142 = arith.constant 1 : index
      %c0_143 = arith.constant 0 : index
      %c0_144 = arith.constant 0 : index
      %208 = vector.load %arg8[%c1_142, %c0_143, %c0_144] : memref<4x32x8xf32, #tpu.memory_space<vmem>>, vector<1x32x8xf32>
      %209 = vector.shape_cast %208 : vector<1x32x8xf32> to vector<32x8xf32>
      %cst_145 = arith.constant dense<0.000000e+00> : vector<8x8xf32>
      %210 = tpu.matmul %177, %209, %cst_145 {dimension_numbers = #tpu.dot_dimension_numbers<[1], [0], [0], [1], [0, 0, 1, 1], [], []>} : vector<8x32xf32>, vector<32x8xf32>, vector<8x8xf32> -> vector<8x8xf32>
      %c1_146 = arith.constant 1 : index
      %c0_147 = arith.constant 0 : index
      %c0_148 = arith.constant 0 : index
      %211 = vector.load %arg9[%c1_146, %c0_147, %c0_148] : memref<4x1x8xf32, #tpu.memory_space<vmem>>, vector<1x1x8xf32>
      %212 = vector.shape_cast %211 : vector<1x1x8xf32> to vector<1x8xf32>
      %213 = vector.broadcast %212 : vector<1x8xf32> to vector<8x8xf32>
      %214 = arith.addf %210, %213 : vector<8x8xf32>
      %c1_149 = arith.constant 1 : index
      %c0_150 = arith.constant 0 : index
      %c0_151 = arith.constant 0 : index
      %215 = vector.load %arg14[%c1_149, %c0_150, %c0_151] : memref<4x8x8xf32, #tpu.memory_space<vmem>>, vector<1x8x8xf32>
      %216 = vector.shape_cast %215 : vector<1x8x8xf32> to vector<8x8xf32>
      %217 = vector.shape_cast %214 : vector<8x8xf32> to vector<1x8x8xf32>
      tpu.vector_store %arg14[%c1_149, %c0_150, %c0_151], %217 {strides = array<i32>} : memref<4x8x8xf32, #tpu.memory_space<vmem>>, vector<1x8x8xf32>,
      %c2_152 = arith.constant 2 : index
      %c0_153 = arith.constant 0 : index
      %c0_154 = arith.constant 0 : index
      %218 = vector.load %arg6[%c2_152, %c0_153, %c0_154] : memref<4x32x8xf32, #tpu.memory_space<vmem>>, vector<1x32x8xf32>
      %219 = vector.shape_cast %218 : vector<1x32x8xf32> to vector<32x8xf32>
      %cst_155 = arith.constant dense<0.000000e+00> : vector<8x8xf32>
      %220 = tpu.matmul %177, %219, %cst_155 {dimension_numbers = #tpu.dot_dimension_numbers<[1], [0], [0], [1], [0, 0, 1, 1], [], []>} : vector<8x32xf32>, vector<32x8xf32>, vector<8x8xf32> -> vector<8x8xf32>
      %c2_156 = arith.constant 2 : index
      %c0_157 = arith.constant 0 : index
      %c0_158 = arith.constant 0 : index
      %221 = vector.load %arg7[%c2_156, %c0_157, %c0_158] : memref<4x1x8xf32, #tpu.memory_space<vmem>>, vector<1x1x8xf32>
      %222 = vector.shape_cast %221 : vector<1x1x8xf32> to vector<1x8xf32>
      %223 = vector.broadcast %222 : vector<1x8xf32> to vector<8x8xf32>
      %224 = arith.addf %220, %223 : vector<8x8xf32>
      %c2_159 = arith.constant 2 : index
      %c0_160 = arith.constant 0 : index
      %c0_161 = arith.constant 0 : index
      %225 = vector.load %arg13[%c2_159, %c0_160, %c0_161] : memref<4x8x8xf32, #tpu.memory_space<vmem>>, vector<1x8x8xf32>
      %226 = vector.shape_cast %225 : vector<1x8x8xf32> to vector<8x8xf32>
      %227 = vector.shape_cast %224 : vector<8x8xf32> to vector<1x8x8xf32>
      tpu.vector_store %arg13[%c2_159, %c0_160, %c0_161], %227 {strides = array<i32>} : memref<4x8x8xf32, #tpu.memory_space<vmem>>, vector<1x8x8xf32>,
      %c2_162 = arith.constant 2 : index
      %c0_163 = arith.constant 0 : index
      %c0_164 = arith.constant 0 : index
      %228 = vector.load %arg8[%c2_162, %c0_163, %c0_164] : memref<4x32x8xf32, #tpu.memory_space<vmem>>, vector<1x32x8xf32>
      %229 = vector.shape_cast %228 : vector<1x32x8xf32> to vector<32x8xf32>
      %cst_165 = arith.constant dense<0.000000e+00> : vector<8x8xf32>
      %230 = tpu.matmul %177, %229, %cst_165 {dimension_numbers = #tpu.dot_dimension_numbers<[1], [0], [0], [1], [0, 0, 1, 1], [], []>} : vector<8x32xf32>, vector<32x8xf32>, vector<8x8xf32> -> vector<8x8xf32>
      %c2_166 = arith.constant 2 : index
      %c0_167 = arith.constant 0 : index
      %c0_168 = arith.constant 0 : index
      %231 = vector.load %arg9[%c2_166, %c0_167, %c0_168] : memref<4x1x8xf32, #tpu.memory_space<vmem>>, vector<1x1x8xf32>
      %232 = vector.shape_cast %231 : vector<1x1x8xf32> to vector<1x8xf32>
      %233 = vector.broadcast %232 : vector<1x8xf32> to vector<8x8xf32>
      %234 = arith.addf %230, %233 : vector<8x8xf32>
      %c2_169 = arith.constant 2 : index
      %c0_170 = arith.constant 0 : index
      %c0_171 = arith.constant 0 : index
      %235 = vector.load %arg14[%c2_169, %c0_170, %c0_171] : memref<4x8x8xf32, #tpu.memory_space<vmem>>, vector<1x8x8xf32>
      %236 = vector.shape_cast %235 : vector<1x8x8xf32> to vector<8x8xf32>
      %237 = vector.shape_cast %234 : vector<8x8xf32> to vector<1x8x8xf32>
      tpu.vector_store %arg14[%c2_169, %c0_170, %c0_171], %237 {strides = array<i32>} : memref<4x8x8xf32, #tpu.memory_space<vmem>>, vector<1x8x8xf32>,
      %c3_172 = arith.constant 3 : index
      %c0_173 = arith.constant 0 : index
      %c0_174 = arith.constant 0 : index
      %238 = vector.load %arg6[%c3_172, %c0_173, %c0_174] : memref<4x32x8xf32, #tpu.memory_space<vmem>>, vector<1x32x8xf32>
      %239 = vector.shape_cast %238 : vector<1x32x8xf32> to vector<32x8xf32>
      %cst_175 = arith.constant dense<0.000000e+00> : vector<8x8xf32>
      %240 = tpu.matmul %177, %239, %cst_175 {dimension_numbers = #tpu.dot_dimension_numbers<[1], [0], [0], [1], [0, 0, 1, 1], [], []>} : vector<8x32xf32>, vector<32x8xf32>, vector<8x8xf32> -> vector<8x8xf32>
      %c3_176 = arith.constant 3 : index
      %c0_177 = arith.constant 0 : index
      %c0_178 = arith.constant 0 : index
      %241 = vector.load %arg7[%c3_176, %c0_177, %c0_178] : memref<4x1x8xf32, #tpu.memory_space<vmem>>, vector<1x1x8xf32>
      %242 = vector.shape_cast %241 : vector<1x1x8xf32> to vector<1x8xf32>
      %243 = vector.broadcast %242 : vector<1x8xf32> to vector<8x8xf32>
      %244 = arith.addf %240, %243 : vector<8x8xf32>
      %c3_179 = arith.constant 3 : index
      %c0_180 = arith.constant 0 : index
      %c0_181 = arith.constant 0 : index
      %245 = vector.load %arg13[%c3_179, %c0_180, %c0_181] : memref<4x8x8xf32, #tpu.memory_space<vmem>>, vector<1x8x8xf32>
      %246 = vector.shape_cast %245 : vector<1x8x8xf32> to vector<8x8xf32>
      %247 = vector.shape_cast %244 : vector<8x8xf32> to vector<1x8x8xf32>
      tpu.vector_store %arg13[%c3_179, %c0_180, %c0_181], %247 {strides = array<i32>} : memref<4x8x8xf32, #tpu.memory_space<vmem>>, vector<1x8x8xf32>,
      %c3_182 = arith.constant 3 : index
      %c0_183 = arith.constant 0 : index
      %c0_184 = arith.constant 0 : index
      %248 = vector.load %arg8[%c3_182, %c0_183, %c0_184] : memref<4x32x8xf32, #tpu.memory_space<vmem>>, vector<1x32x8xf32>
      %249 = vector.shape_cast %248 : vector<1x32x8xf32> to vector<32x8xf32>
      %cst_185 = arith.constant dense<0.000000e+00> : vector<8x8xf32>
      %250 = tpu.matmul %177, %249, %cst_185 {dimension_numbers = #tpu.dot_dimension_numbers<[1], [0], [0], [1], [0, 0, 1, 1], [], []>} : vector<8x32xf32>, vector<32x8xf32>, vector<8x8xf32> -> vector<8x8xf32>
      %c3_186 = arith.constant 3 : index
      %c0_187 = arith.constant 0 : index
      %c0_188 = arith.constant 0 : index
      %251 = vector.load %arg9[%c3_186, %c0_187, %c0_188] : memref<4x1x8xf32, #tpu.memory_space<vmem>>, vector<1x1x8xf32>
      %252 = vector.shape_cast %251 : vector<1x1x8xf32> to vector<1x8xf32>
      %253 = vector.broadcast %252 : vector<1x8xf32> to vector<8x8xf32>
      %254 = arith.addf %250, %253 : vector<8x8xf32>
      %c3_189 = arith.constant 3 : index
      %c0_190 = arith.constant 0 : index
      %c0_191 = arith.constant 0 : index
      %255 = vector.load %arg14[%c3_189, %c0_190, %c0_191] : memref<4x8x8xf32, #tpu.memory_space<vmem>>, vector<1x8x8xf32>
      %256 = vector.shape_cast %255 : vector<1x8x8xf32> to vector<8x8xf32>
      %257 = vector.shape_cast %254 : vector<8x8xf32> to vector<1x8x8xf32>
      tpu.vector_store %arg14[%c3_189, %c0_190, %c0_191], %257 {strides = array<i32>} : memref<4x8x8xf32, #tpu.memory_space<vmem>>, vector<1x8x8xf32>,
    } else {
    }
    %c0 = arith.constant 0 : index
    %c0_1 = arith.constant 0 : index
    %c0_2 = arith.constant 0 : index
    %3 = vector.load %arg3[%c0, %c0_1, %c0_2] : memref<1x8x32xf32, #tpu.memory_space<vmem>>, vector<1x8x32xf32>
    %4 = vector.shape_cast %3 : vector<1x8x32xf32> to vector<8x32xf32>
    %cst = arith.constant 0.000000e+00 : f32
    %5 = vector.broadcast %cst : f32 to vector<8x32xf32>
    %c0_3 = arith.constant 0 : index
    %c0_4 = arith.constant 0 : index
    %c0_5 = arith.constant 0 : index
    %6 = vector.load %arg4[%c0_3, %c0_4, %c0_5] : memref<4x32x8xf32, #tpu.memory_space<vmem>>, vector<1x32x8xf32>
    %7 = vector.shape_cast %6 : vector<1x32x8xf32> to vector<32x8xf32>
    %cst_6 = arith.constant dense<0.000000e+00> : vector<8x8xf32>
    %8 = tpu.matmul %4, %7, %cst_6 {dimension_numbers = #tpu.dot_dimension_numbers<[1], [0], [0], [1], [0, 0, 1, 1], [], []>} : vector<8x32xf32>, vector<32x8xf32>, vector<8x8xf32> -> vector<8x8xf32>
    %c0_7 = arith.constant 0 : index
    %c0_8 = arith.constant 0 : index
    %c0_9 = arith.constant 0 : index
    %9 = vector.load %arg5[%c0_7, %c0_8, %c0_9] : memref<4x1x8xf32, #tpu.memory_space<vmem>>, vector<1x1x8xf32>
    %10 = vector.shape_cast %9 : vector<1x1x8xf32> to vector<1x8xf32>
    %11 = vector.broadcast %10 : vector<1x8xf32> to vector<8x8xf32>
    %12 = arith.addf %8, %11 : vector<8x8xf32>
    %cst_10 = arith.constant 0.353553385 : f32
    %13 = vector.broadcast %cst_10 : f32 to vector<8x8xf32>
    %14 = arith.mulf %12, %13 : vector<8x8xf32>
    %cst_11 = arith.constant 0xFF800000 : f32
    %15 = vector.broadcast %cst_11 : f32 to vector<8x1xf32>
    %cst_12 = arith.constant 0.000000e+00 : f32
    %16 = vector.broadcast %cst_12 : f32 to vector<8x1xf32>
    %cst_13 = arith.constant 0.000000e+00 : f32
    %17 = vector.broadcast %cst_13 : f32 to vector<8x8xf32>
    %c0_14 = arith.constant 0 : index
    %c0_15 = arith.constant 0 : index
    %c0_16 = arith.constant 0 : index
    %18 = vector.load %arg13[%c0_14, %c0_15, %c0_16] : memref<4x8x8xf32, #tpu.memory_space<vmem>>, vector<1x8x8xf32>
    %19 = vector.shape_cast %18 : vector<1x8x8xf32> to vector<8x8xf32>
    %c0_17 = arith.constant 0 : index
    %c0_18 = arith.constant 0 : index
    %c0_19 = arith.constant 0 : index
    %20 = vector.load %arg14[%c0_17, %c0_18, %c0_19] : memref<4x8x8xf32, #tpu.memory_space<vmem>>, vector<1x8x8xf32>
    %21 = vector.shape_cast %20 : vector<1x8x8xf32> to vector<8x8xf32>
    %cst_20 = arith.constant dense<0.000000e+00> : vector<8x8xf32>
    %22 = tpu.matmul %14, %19, %cst_20 {dimension_numbers = #tpu.dot_dimension_numbers<[1], [1], [0], [0], [0, 0, 1, 0], [], []>} : vector<8x8xf32>, vector<8x8xf32>, vector<8x8xf32> -> vector<8x8xf32>
    %cst_21 = arith.constant dense<0xFF800000> : vector<8xf32>
    %23 = vector.multi_reduction <maximumf>, %22, %cst_21 [1] : vector<8x8xf32> to vector<8xf32>
    %24 = vector.shape_cast %23 : vector<8xf32> to vector<8x1xf32>
    %25 = arith.maximumf %15, %24 : vector<8x1xf32>
    %26 = arith.subf %15, %25 : vector<8x1xf32>
    %27 = math.exp %26 : vector<8x1xf32>
    %28 = vector.broadcast %25 : vector<8x1xf32> to vector<8x8xf32>
    %29 = arith.subf %22, %28 : vector<8x8xf32>
    %30 = math.exp %29 : vector<8x8xf32>
    %31 = arith.mulf %27, %16 : vector<8x1xf32>
    %cst_22 = arith.constant dense<0.000000e+00> : vector<8xf32>
    %32 = vector.multi_reduction <add>, %30, %cst_22 [1] : vector<8x8xf32> to vector<8xf32>
    %33 = vector.shape_cast %32 : vector<8xf32> to vector<8x1xf32>
    %34 = arith.addf %31, %33 : vector<8x1xf32>
    %35 = vector.broadcast %27 : vector<8x1xf32> to vector<8x8xf32>
    %36 = arith.mulf %35, %17 : vector<8x8xf32>
    %cst_23 = arith.constant dense<0.000000e+00> : vector<8x8xf32>
    %37 = tpu.matmul %30, %21, %cst_23 {dimension_numbers = #tpu.dot_dimension_numbers<[1], [0], [0], [1], [0, 0, 1, 1], [], []>} : vector<8x8xf32>, vector<8x8xf32>, vector<8x8xf32> -> vector<8x8xf32>
    %38 = arith.addf %36, %37 : vector<8x8xf32>
    %cst_24 = arith.constant 1.000000e+00 : f32
    %39 = vector.broadcast %cst_24 : f32 to vector<8x1xf32>
    %40 = arith.divf %39, %34 : vector<8x1xf32>
    %41 = vector.broadcast %40 : vector<8x1xf32> to vector<8x8xf32>
    %42 = arith.mulf %38, %41 : vector<8x8xf32>
    %c0_25 = arith.constant 0 : index
    %c0_26 = arith.constant 0 : index
    %c0_27 = arith.constant 0 : index
    %43 = vector.load %arg10[%c0_25, %c0_26, %c0_27] : memref<4x8x32xf32, #tpu.memory_space<vmem>>, vector<1x8x32xf32>
    %44 = vector.shape_cast %43 : vector<1x8x32xf32> to vector<8x32xf32>
    %cst_28 = arith.constant dense<0.000000e+00> : vector<8x32xf32>
    %45 = tpu.matmul %42, %44, %cst_28 {dimension_numbers = #tpu.dot_dimension_numbers<[1], [0], [0], [1], [0, 0, 1, 1], [], []>} : vector<8x8xf32>, vector<8x32xf32>, vector<8x32xf32> -> vector<8x32xf32>
    %46 = arith.addf %5, %45 : vector<8x32xf32>
    %c1 = arith.constant 1 : index
    %c0_29 = arith.constant 0 : index
    %c0_30 = arith.constant 0 : index
    %47 = vector.load %arg4[%c1, %c0_29, %c0_30] : memref<4x32x8xf32, #tpu.memory_space<vmem>>, vector<1x32x8xf32>
    %48 = vector.shape_cast %47 : vector<1x32x8xf32> to vector<32x8xf32>
    %cst_31 = arith.constant dense<0.000000e+00> : vector<8x8xf32>
    %49 = tpu.matmul %4, %48, %cst_31 {dimension_numbers = #tpu.dot_dimension_numbers<[1], [0], [0], [1], [0, 0, 1, 1], [], []>} : vector<8x32xf32>, vector<32x8xf32>, vector<8x8xf32> -> vector<8x8xf32>
    %c1_32 = arith.constant 1 : index
    %c0_33 = arith.constant 0 : index
    %c0_34 = arith.constant 0 : index
    %50 = vector.load %arg5[%c1_32, %c0_33, %c0_34] : memref<4x1x8xf32, #tpu.memory_space<vmem>>, vector<1x1x8xf32>
    %51 = vector.shape_cast %50 : vector<1x1x8xf32> to vector<1x8xf32>
    %52 = vector.broadcast %51 : vector<1x8xf32> to vector<8x8xf32>
    %53 = arith.addf %49, %52 : vector<8x8xf32>
    %cst_35 = arith.constant 0.353553385 : f32
    %54 = vector.broadcast %cst_35 : f32 to vector<8x8xf32>
    %55 = arith.mulf %53, %54 : vector<8x8xf32>
    %cst_36 = arith.constant 0xFF800000 : f32
    %56 = vector.broadcast %cst_36 : f32 to vector<8x1xf32>
    %cst_37 = arith.constant 0.000000e+00 : f32
    %57 = vector.broadcast %cst_37 : f32 to vector<8x1xf32>
    %cst_38 = arith.constant 0.000000e+00 : f32
    %58 = vector.broadcast %cst_38 : f32 to vector<8x8xf32>
    %c1_39 = arith.constant 1 : index
    %c0_40 = arith.constant 0 : index
    %c0_41 = arith.constant 0 : index
    %59 = vector.load %arg13[%c1_39, %c0_40, %c0_41] : memref<4x8x8xf32, #tpu.memory_space<vmem>>, vector<1x8x8xf32>
    %60 = vector.shape_cast %59 : vector<1x8x8xf32> to vector<8x8xf32>
    %c1_42 = arith.constant 1 : index
    %c0_43 = arith.constant 0 : index
    %c0_44 = arith.constant 0 : index
    %61 = vector.load %arg14[%c1_42, %c0_43, %c0_44] : memref<4x8x8xf32, #tpu.memory_space<vmem>>, vector<1x8x8xf32>
    %62 = vector.shape_cast %61 : vector<1x8x8xf32> to vector<8x8xf32>
    %cst_45 = arith.constant dense<0.000000e+00> : vector<8x8xf32>
    %63 = tpu.matmul %55, %60, %cst_45 {dimension_numbers = #tpu.dot_dimension_numbers<[1], [1], [0], [0], [0, 0, 1, 0], [], []>} : vector<8x8xf32>, vector<8x8xf32>, vector<8x8xf32> -> vector<8x8xf32>
    %cst_46 = arith.constant dense<0xFF800000> : vector<8xf32>
    %64 = vector.multi_reduction <maximumf>, %63, %cst_46 [1] : vector<8x8xf32> to vector<8xf32>
    %65 = vector.shape_cast %64 : vector<8xf32> to vector<8x1xf32>
    %66 = arith.maximumf %56, %65 : vector<8x1xf32>
    %67 = arith.subf %56, %66 : vector<8x1xf32>
    %68 = math.exp %67 : vector<8x1xf32>
    %69 = vector.broadcast %66 : vector<8x1xf32> to vector<8x8xf32>
    %70 = arith.subf %63, %69 : vector<8x8xf32>
    %71 = math.exp %70 : vector<8x8xf32>
    %72 = arith.mulf %68, %57 : vector<8x1xf32>
    %cst_47 = arith.constant dense<0.000000e+00> : vector<8xf32>
    %73 = vector.multi_reduction <add>, %71, %cst_47 [1] : vector<8x8xf32> to vector<8xf32>
    %74 = vector.shape_cast %73 : vector<8xf32> to vector<8x1xf32>
    %75 = arith.addf %72, %74 : vector<8x1xf32>
    %76 = vector.broadcast %68 : vector<8x1xf32> to vector<8x8xf32>
    %77 = arith.mulf %76, %58 : vector<8x8xf32>
    %cst_48 = arith.constant dense<0.000000e+00> : vector<8x8xf32>
    %78 = tpu.matmul %71, %62, %cst_48 {dimension_numbers = #tpu.dot_dimension_numbers<[1], [0], [0], [1], [0, 0, 1, 1], [], []>} : vector<8x8xf32>, vector<8x8xf32>, vector<8x8xf32> -> vector<8x8xf32>
    %79 = arith.addf %77, %78 : vector<8x8xf32>
    %cst_49 = arith.constant 1.000000e+00 : f32
    %80 = vector.broadcast %cst_49 : f32 to vector<8x1xf32>
    %81 = arith.divf %80, %75 : vector<8x1xf32>
    %82 = vector.broadcast %81 : vector<8x1xf32> to vector<8x8xf32>
    %83 = arith.mulf %79, %82 : vector<8x8xf32>
    %c1_50 = arith.constant 1 : index
    %c0_51 = arith.constant 0 : index
    %c0_52 = arith.constant 0 : index
    %84 = vector.load %arg10[%c1_50, %c0_51, %c0_52] : memref<4x8x32xf32, #tpu.memory_space<vmem>>, vector<1x8x32xf32>
    %85 = vector.shape_cast %84 : vector<1x8x32xf32> to vector<8x32xf32>
    %cst_53 = arith.constant dense<0.000000e+00> : vector<8x32xf32>
    %86 = tpu.matmul %83, %85, %cst_53 {dimension_numbers = #tpu.dot_dimension_numbers<[1], [0], [0], [1], [0, 0, 1, 1], [], []>} : vector<8x8xf32>, vector<8x32xf32>, vector<8x32xf32> -> vector<8x32xf32>
    %87 = arith.addf %46, %86 : vector<8x32xf32>
    %c2 = arith.constant 2 : index
    %c0_54 = arith.constant 0 : index
    %c0_55 = arith.constant 0 : index
    %88 = vector.load %arg4[%c2, %c0_54, %c0_55] : memref<4x32x8xf32, #tpu.memory_space<vmem>>, vector<1x32x8xf32>
    %89 = vector.shape_cast %88 : vector<1x32x8xf32> to vector<32x8xf32>
    %cst_56 = arith.constant dense<0.000000e+00> : vector<8x8xf32>
    %90 = tpu.matmul %4, %89, %cst_56 {dimension_numbers = #tpu.dot_dimension_numbers<[1], [0], [0], [1], [0, 0, 1, 1], [], []>} : vector<8x32xf32>, vector<32x8xf32>, vector<8x8xf32> -> vector<8x8xf32>
    %c2_57 = arith.constant 2 : index
    %c0_58 = arith.constant 0 : index
    %c0_59 = arith.constant 0 : index
    %91 = vector.load %arg5[%c2_57, %c0_58, %c0_59] : memref<4x1x8xf32, #tpu.memory_space<vmem>>, vector<1x1x8xf32>
    %92 = vector.shape_cast %91 : vector<1x1x8xf32> to vector<1x8xf32>
    %93 = vector.broadcast %92 : vector<1x8xf32> to vector<8x8xf32>
    %94 = arith.addf %90, %93 : vector<8x8xf32>
    %cst_60 = arith.constant 0.353553385 : f32
    %95 = vector.broadcast %cst_60 : f32 to vector<8x8xf32>
    %96 = arith.mulf %94, %95 : vector<8x8xf32>
    %cst_61 = arith.constant 0xFF800000 : f32
    %97 = vector.broadcast %cst_61 : f32 to vector<8x1xf32>
    %cst_62 = arith.constant 0.000000e+00 : f32
    %98 = vector.broadcast %cst_62 : f32 to vector<8x1xf32>
    %cst_63 = arith.constant 0.000000e+00 : f32
    %99 = vector.broadcast %cst_63 : f32 to vector<8x8xf32>
    %c2_64 = arith.constant 2 : index
    %c0_65 = arith.constant 0 : index
    %c0_66 = arith.constant 0 : index
    %100 = vector.load %arg13[%c2_64, %c0_65, %c0_66] : memref<4x8x8xf32, #tpu.memory_space<vmem>>, vector<1x8x8xf32>
    %101 = vector.shape_cast %100 : vector<1x8x8xf32> to vector<8x8xf32>
    %c2_67 = arith.constant 2 : index
    %c0_68 = arith.constant 0 : index
    %c0_69 = arith.constant 0 : index
    %102 = vector.load %arg14[%c2_67, %c0_68, %c0_69] : memref<4x8x8xf32, #tpu.memory_space<vmem>>, vector<1x8x8xf32>
    %103 = vector.shape_cast %102 : vector<1x8x8xf32> to vector<8x8xf32>
    %cst_70 = arith.constant dense<0.000000e+00> : vector<8x8xf32>
    %104 = tpu.matmul %96, %101, %cst_70 {dimension_numbers = #tpu.dot_dimension_numbers<[1], [1], [0], [0], [0, 0, 1, 0], [], []>} : vector<8x8xf32>, vector<8x8xf32>, vector<8x8xf32> -> vector<8x8xf32>
    %cst_71 = arith.constant dense<0xFF800000> : vector<8xf32>
    %105 = vector.multi_reduction <maximumf>, %104, %cst_71 [1] : vector<8x8xf32> to vector<8xf32>
    %106 = vector.shape_cast %105 : vector<8xf32> to vector<8x1xf32>
    %107 = arith.maximumf %97, %106 : vector<8x1xf32>
    %108 = arith.subf %97, %107 : vector<8x1xf32>
    %109 = math.exp %108 : vector<8x1xf32>
    %110 = vector.broadcast %107 : vector<8x1xf32> to vector<8x8xf32>
    %111 = arith.subf %104, %110 : vector<8x8xf32>
    %112 = math.exp %111 : vector<8x8xf32>
    %113 = arith.mulf %109, %98 : vector<8x1xf32>
    %cst_72 = arith.constant dense<0.000000e+00> : vector<8xf32>
    %114 = vector.multi_reduction <add>, %112, %cst_72 [1] : vector<8x8xf32> to vector<8xf32>
    %115 = vector.shape_cast %114 : vector<8xf32> to vector<8x1xf32>
    %116 = arith.addf %113, %115 : vector<8x1xf32>
    %117 = vector.broadcast %109 : vector<8x1xf32> to vector<8x8xf32>
    %118 = arith.mulf %117, %99 : vector<8x8xf32>
    %cst_73 = arith.constant dense<0.000000e+00> : vector<8x8xf32>
    %119 = tpu.matmul %112, %103, %cst_73 {dimension_numbers = #tpu.dot_dimension_numbers<[1], [0], [0], [1], [0, 0, 1, 1], [], []>} : vector<8x8xf32>, vector<8x8xf32>, vector<8x8xf32> -> vector<8x8xf32>
    %120 = arith.addf %118, %119 : vector<8x8xf32>
    %cst_74 = arith.constant 1.000000e+00 : f32
    %121 = vector.broadcast %cst_74 : f32 to vector<8x1xf32>
    %122 = arith.divf %121, %116 : vector<8x1xf32>
    %123 = vector.broadcast %122 : vector<8x1xf32> to vector<8x8xf32>
    %124 = arith.mulf %120, %123 : vector<8x8xf32>
    %c2_75 = arith.constant 2 : index
    %c0_76 = arith.constant 0 : index
    %c0_77 = arith.constant 0 : index
    %125 = vector.load %arg10[%c2_75, %c0_76, %c0_77] : memref<4x8x32xf32, #tpu.memory_space<vmem>>, vector<1x8x32xf32>
    %126 = vector.shape_cast %125 : vector<1x8x32xf32> to vector<8x32xf32>
    %cst_78 = arith.constant dense<0.000000e+00> : vector<8x32xf32>
    %127 = tpu.matmul %124, %126, %cst_78 {dimension_numbers = #tpu.dot_dimension_numbers<[1], [0], [0], [1], [0, 0, 1, 1], [], []>} : vector<8x8xf32>, vector<8x32xf32>, vector<8x32xf32> -> vector<8x32xf32>
    %128 = arith.addf %87, %127 : vector<8x32xf32>
    %c3 = arith.constant 3 : index
    %c0_79 = arith.constant 0 : index
    %c0_80 = arith.constant 0 : index
    %129 = vector.load %arg4[%c3, %c0_79, %c0_80] : memref<4x32x8xf32, #tpu.memory_space<vmem>>, vector<1x32x8xf32>
    %130 = vector.shape_cast %129 : vector<1x32x8xf32> to vector<32x8xf32>
    %cst_81 = arith.constant dense<0.000000e+00> : vector<8x8xf32>
    %131 = tpu.matmul %4, %130, %cst_81 {dimension_numbers = #tpu.dot_dimension_numbers<[1], [0], [0], [1], [0, 0, 1, 1], [], []>} : vector<8x32xf32>, vector<32x8xf32>, vector<8x8xf32> -> vector<8x8xf32>
    %c3_82 = arith.constant 3 : index
    %c0_83 = arith.constant 0 : index
    %c0_84 = arith.constant 0 : index
    %132 = vector.load %arg5[%c3_82, %c0_83, %c0_84] : memref<4x1x8xf32, #tpu.memory_space<vmem>>, vector<1x1x8xf32>
    %133 = vector.shape_cast %132 : vector<1x1x8xf32> to vector<1x8xf32>
    %134 = vector.broadcast %133 : vector<1x8xf32> to vector<8x8xf32>
    %135 = arith.addf %131, %134 : vector<8x8xf32>
    %cst_85 = arith.constant 0.353553385 : f32
    %136 = vector.broadcast %cst_85 : f32 to vector<8x8xf32>
    %137 = arith.mulf %135, %136 : vector<8x8xf32>
    %cst_86 = arith.constant 0xFF800000 : f32
    %138 = vector.broadcast %cst_86 : f32 to vector<8x1xf32>
    %cst_87 = arith.constant 0.000000e+00 : f32
    %139 = vector.broadcast %cst_87 : f32 to vector<8x1xf32>
    %cst_88 = arith.constant 0.000000e+00 : f32
    %140 = vector.broadcast %cst_88 : f32 to vector<8x8xf32>
    %c3_89 = arith.constant 3 : index
    %c0_90 = arith.constant 0 : index
    %c0_91 = arith.constant 0 : index
    %141 = vector.load %arg13[%c3_89, %c0_90, %c0_91] : memref<4x8x8xf32, #tpu.memory_space<vmem>>, vector<1x8x8xf32>
    %142 = vector.shape_cast %141 : vector<1x8x8xf32> to vector<8x8xf32>
    %c3_92 = arith.constant 3 : index
    %c0_93 = arith.constant 0 : index
    %c0_94 = arith.constant 0 : index
    %143 = vector.load %arg14[%c3_92, %c0_93, %c0_94] : memref<4x8x8xf32, #tpu.memory_space<vmem>>, vector<1x8x8xf32>
    %144 = vector.shape_cast %143 : vector<1x8x8xf32> to vector<8x8xf32>
    %cst_95 = arith.constant dense<0.000000e+00> : vector<8x8xf32>
    %145 = tpu.matmul %137, %142, %cst_95 {dimension_numbers = #tpu.dot_dimension_numbers<[1], [1], [0], [0], [0, 0, 1, 0], [], []>} : vector<8x8xf32>, vector<8x8xf32>, vector<8x8xf32> -> vector<8x8xf32>
    %cst_96 = arith.constant dense<0xFF800000> : vector<8xf32>
    %146 = vector.multi_reduction <maximumf>, %145, %cst_96 [1] : vector<8x8xf32> to vector<8xf32>
    %147 = vector.shape_cast %146 : vector<8xf32> to vector<8x1xf32>
    %148 = arith.maximumf %138, %147 : vector<8x1xf32>
    %149 = arith.subf %138, %148 : vector<8x1xf32>
    %150 = math.exp %149 : vector<8x1xf32>
    %151 = vector.broadcast %148 : vector<8x1xf32> to vector<8x8xf32>
    %152 = arith.subf %145, %151 : vector<8x8xf32>
    %153 = math.exp %152 : vector<8x8xf32>
    %154 = arith.mulf %150, %139 : vector<8x1xf32>
    %cst_97 = arith.constant dense<0.000000e+00> : vector<8xf32>
    %155 = vector.multi_reduction <add>, %153, %cst_97 [1] : vector<8x8xf32> to vector<8xf32>
    %156 = vector.shape_cast %155 : vector<8xf32> to vector<8x1xf32>
    %157 = arith.addf %154, %156 : vector<8x1xf32>
    %158 = vector.broadcast %150 : vector<8x1xf32> to vector<8x8xf32>
    %159 = arith.mulf %158, %140 : vector<8x8xf32>
    %cst_98 = arith.constant dense<0.000000e+00> : vector<8x8xf32>
    %160 = tpu.matmul %153, %144, %cst_98 {dimension_numbers = #tpu.dot_dimension_numbers<[1], [0], [0], [1], [0, 0, 1, 1], [], []>} : vector<8x8xf32>, vector<8x8xf32>, vector<8x8xf32> -> vector<8x8xf32>
    %161 = arith.addf %159, %160 : vector<8x8xf32>
    %cst_99 = arith.constant 1.000000e+00 : f32
    %162 = vector.broadcast %cst_99 : f32 to vector<8x1xf32>
    %163 = arith.divf %162, %157 : vector<8x1xf32>
    %164 = vector.broadcast %163 : vector<8x1xf32> to vector<8x8xf32>
    %165 = arith.mulf %161, %164 : vector<8x8xf32>
    %c3_100 = arith.constant 3 : index
    %c0_101 = arith.constant 0 : index
    %c0_102 = arith.constant 0 : index
    %166 = vector.load %arg10[%c3_100, %c0_101, %c0_102] : memref<4x8x32xf32, #tpu.memory_space<vmem>>, vector<1x8x32xf32>
    %167 = vector.shape_cast %166 : vector<1x8x32xf32> to vector<8x32xf32>
    %cst_103 = arith.constant dense<0.000000e+00> : vector<8x32xf32>
    %168 = tpu.matmul %165, %167, %cst_103 {dimension_numbers = #tpu.dot_dimension_numbers<[1], [0], [0], [1], [0, 0, 1, 1], [], []>} : vector<8x8xf32>, vector<8x32xf32>, vector<8x32xf32> -> vector<8x32xf32>
    %169 = arith.addf %128, %168 : vector<8x32xf32>
    %c0_104 = arith.constant 0 : index
    %c0_105 = arith.constant 0 : index
    %170 = vector.load %arg11[%c0_104, %c0_105] : memref<1x32xf32, #tpu.memory_space<vmem>>, vector<1x32xf32>
    %171 = vector.broadcast %170 : vector<1x32xf32> to vector<8x32xf32>
    %172 = arith.addf %169, %171 : vector<8x32xf32>
    %c0_106 = arith.constant 0 : index
    %c0_107 = arith.constant 0 : index
    %c0_108 = arith.constant 0 : index
    %173 = vector.load %arg12[%c0_106, %c0_107, %c0_108] : memref<1x8x32xf32, #tpu.memory_space<vmem>>, vector<1x8x32xf32>
    %174 = vector.shape_cast %173 : vector<1x8x32xf32> to vector<8x32xf32>
    %175 = vector.shape_cast %172 : vector<8x32xf32> to vector<1x8x32xf32>
    tpu.vector_store %arg12[%c0_106, %c0_107, %c0_108], %175 {strides = array<i32>} : memref<1x8x32xf32, #tpu.memory_space<vmem>>, vector<1x8x32xf32>,
    return
  }
  func.func @transform_0(%arg0: i32, %arg1: i32) -> (i32, i32, i32) {
    %c0_i32 = arith.constant 0 : i32
    %c0_i32_0 = arith.constant 0 : i32
    %c0_i32_1 = arith.constant 0 : i32
    return %arg0, %c0_i32, %c0_i32_0 : i32, i32, i32
  }
  func.func @transform_1(%arg0: i32, %arg1: i32) -> (i32, i32, i32) {
    %c0_i32 = arith.constant 0 : i32
    %c0_i32_0 = arith.constant 0 : i32
    return %arg0, %arg1, %c0_i32 : i32, i32, i32
  }
  func.func @transform_2(%arg0: i32, %arg1: i32) -> (i32, i32, i32) {
    %c0_i32 = arith.constant 0 : i32
    %c0_i32_0 = arith.constant 0 : i32
    %c0_i32_1 = arith.constant 0 : i32
    %c0_i32_2 = arith.constant 0 : i32
    return %c0_i32, %c0_i32_0, %c0_i32_1 : i32, i32, i32
  }
  func.func @transform_3(%arg0: i32, %arg1: i32) -> (i32, i32, i32) {
    %c0_i32 = arith.constant 0 : i32
    %c0_i32_0 = arith.constant 0 : i32
    %c0_i32_1 = arith.constant 0 : i32
    %c0_i32_2 = arith.constant 0 : i32
    return %c0_i32, %c0_i32_0, %c0_i32_1 : i32, i32, i32
  }
  func.func @transform_4(%arg0: i32, %arg1: i32) -> (i32, i32, i32) {
    %c0_i32 = arith.constant 0 : i32
    %c0_i32_0 = arith.constant 0 : i32
    %c0_i32_1 = arith.constant 0 : i32
    %c0_i32_2 = arith.constant 0 : i32
    return %c0_i32, %c0_i32_0, %c0_i32_1 : i32, i32, i32
  }
  func.func @transform_5(%arg0: i32, %arg1: i32) -> (i32, i32, i32) {
    %c0_i32 = arith.constant 0 : i32
    %c0_i32_0 = arith.constant 0 : i32
    %c0_i32_1 = arith.constant 0 : i32
    %c0_i32_2 = arith.constant 0 : i32
    return %c0_i32, %c0_i32_0, %c0_i32_1 : i32, i32, i32
  }
  func.func @transform_6(%arg0: i32, %arg1: i32) -> (i32, i32, i32) {
    %c0_i32 = arith.constant 0 : i32
    %c0_i32_0 = arith.constant 0 : i32
    %c0_i32_1 = arith.constant 0 : i32
    %c0_i32_2 = arith.constant 0 : i32
    return %c0_i32, %c0_i32_0, %c0_i32_1 : i32, i32, i32
  }
  func.func @transform_7(%arg0: i32, %arg1: i32) -> (i32, i32, i32) {
    %c0_i32 = arith.constant 0 : i32
    %c0_i32_0 = arith.constant 0 : i32
    %c0_i32_1 = arith.constant 0 : i32
    %c0_i32_2 = arith.constant 0 : i32
    return %c0_i32, %c0_i32_0, %c0_i32_1 : i32, i32, i32
  }
  func.func @transform_8(%arg0: i32, %arg1: i32) -> (i32, i32, i32) {
    %c0_i32 = arith.constant 0 : i32
    %c0_i32_0 = arith.constant 0 : i32
    %c0_i32_1 = arith.constant 0 : i32
    %c0_i32_2 = arith.constant 0 : i32
    return %c0_i32, %c0_i32_0, %c0_i32_1 : i32, i32, i32
  }
  func.func @transform_9(%arg0: i32, %arg1: i32) -> (i32, i32) {
    %c0_i32 = arith.constant 0 : i32
    %c0_i32_0 = arith.constant 0 : i32
    %c0_i32_1 = arith.constant 0 : i32
    return %c0_i32, %c0_i32_0 : i32, i32
  }
  func.func @transform_10(%arg0: i32, %arg1: i32) -> (i32, i32, i32) {
    %c0_i32 = arith.constant 0 : i32
    %c0_i32_0 = arith.constant 0 : i32
    return %arg0, %arg1, %c0_i32 : i32, i32, i32
  }
}

module attributes {stable_mosaic.version = 11 : i64} {
  func.func @_mha_kernel(%arg0: i32, %arg1: i32, %arg2: memref<1x8x32xf32, #tpu.memory_space<vmem>>, %arg3: memref<1x8x32xf32, #tpu.memory_space<vmem>>, %arg4: memref<4x32x8xf32, #tpu.memory_space<vmem>>, %arg5: memref<4x1x8xf32, #tpu.memory_space<vmem>>, %arg6: memref<4x32x8xf32, #tpu.memory_space<vmem>>, %arg7: memref<4x1x8xf32, #tpu.memory_space<vmem>>, %arg8: memref<4x32x8xf32, #tpu.memory_space<vmem>>, %arg9: memref<4x1x8xf32, #tpu.memory_space<vmem>>, %arg10: memref<4x8x32xf32, #tpu.memory_space<vmem>>, %arg11: memref<1x32xf32, #tpu.memory_space<vmem>>, %arg12: memref<1x8x32xf32, #tpu.memory_space<vmem>>, %arg13: memref<4x8x8xf32, #tpu.memory_space<vmem>>, %arg14: memref<4x8x8xf32, #tpu.memory_space<vmem>>) attributes {dimension_semantics = [#tpu.dimension_semantics<parallel>, #tpu.dimension_semantics<arbitrary>], iteration_bounds = array<i64: 2, 1>, scalar_prefetch = 0 : i64, scratch_operands = 2 : i64, tpu.core_type = #tpu.core_type<tc>, window_params = [{transform_indices = @transform_0, window_bounds = array<i64: 1, 8, 32>}, {transform_indices = @transform_1, window_bounds = array<i64: 1, 8, 32>}, {pipeline_mode = #tpu.pipeline_mode<synchronous>, transform_indices = @transform_2, window_bounds = array<i64: 4, 32, 8>}, {pipeline_mode = #tpu.pipeline_mode<synchronous>, transform_indices = @transform_3, window_bounds = array<i64: 4, 1, 8>}, {pipeline_mode = #tpu.pipeline_mode<synchronous>, transform_indices = @transform_4, window_bounds = array<i64: 4, 32, 8>}, {pipeline_mode = #tpu.pipeline_mode<synchronous>, transform_indices = @transform_5, window_bounds = array<i64: 4, 1, 8>}, {pipeline_mode = #tpu.pipeline_mode<synchronous>, transform_indices = @transform_6, window_bounds = array<i64: 4, 32, 8>}, {pipeline_mode = #tpu.pipeline_mode<synchronous>, transform_indices = @transform_7, window_bounds = array<i64: 4, 1, 8>}, {pipeline_mode = #tpu.pipeline_mode<synchronous>, transform_indices = @transform_8, window_bounds = array<i64: 4, 8, 32>}, {pipeline_mode = #tpu.pipeline_mode<synchronous>, transform_indices = @transform_9, window_bounds = array<i64: 1, 32>}, {transform_indices = @transform_10, window_bounds = array<i64: 1, 8, 32>}]} {
    %c0_i32 = arith.constant 0 : i32
    %0 = arith.cmpi eq, %arg1, %c0_i32 : i32
    %1 = arith.extui %0 : i1 to i32
    %c0_i32_0 = arith.constant 0 : i32
    %2 = arith.cmpi ne, %1, %c0_i32_0 : i32
    scf.if %2 {
      %c0_109 = arith.constant 0 : index
      %c0_110 = arith.constant 0 : index
      %c0_111 = arith.constant 0 : index
      %176 = vector.load %arg2[%c0_109, %c0_110, %c0_111] : memref<1x8x32xf32, #tpu.memory_space<vmem>>, vector<1x8x32xf32>
      %177 = vector.shape_cast %176 : vector<1x8x32xf32> to vector<8x32xf32>
      %c0_112 = arith.constant 0 : index
      %c0_113 = arith.constant 0 : index
      %c0_114 = arith.constant 0 : index
      %178 = vector.load %arg6[%c0_112, %c0_113, %c0_114] : memref<4x32x8xf32, #tpu.memory_space<vmem>>, vector<1x32x8xf32>
      %179 = vector.shape_cast %178 : vector<1x32x8xf32> to vector<32x8xf32>
      %cst_115 = arith.constant dense<0.000000e+00> : vector<8x8xf32>
      %180 = tpu.matmul %177, %179, %cst_115 {dimension_numbers = #tpu.dot_dimension_numbers<[1], [0], [0], [1], [0, 0, 1, 1], [], []>} : vector<8x32xf32>, vector<32x8xf32>, vector<8x8xf32> -> vector<8x8xf32>
      %c0_116 = arith.constant 0 : index
      %c0_117 = arith.constant 0 : index
      %c0_118 = arith.constant 0 : index
      %181 = vector.load %arg7[%c0_116, %c0_117, %c0_118] : memref<4x1x8xf32, #tpu.memory_space<vmem>>, vector<1x1x8xf32>
      %182 = vector.shape_cast %181 : vector<1x1x8xf32> to vector<1x8xf32>
      %183 = vector.broadcast %182 : vector<1x8xf32> to vector<8x8xf32>
      %184 = arith.addf %180, %183 : vector<8x8xf32>
      %c0_119 = arith.constant 0 : index
      %c0_120 = arith.constant 0 : index
      %c0_121 = arith.constant 0 : index
      %185 = vector.load %arg13[%c0_119, %c0_120, %c0_121] : memref<4x8x8xf32, #tpu.memory_space<vmem>>, vector<1x8x8xf32>
      %186 = vector.shape_cast %185 : vector<1x8x8xf32> to vector<8x8xf32>
      %187 = vector.shape_cast %184 : vector<8x8xf32> to vector<1x8x8xf32>
      tpu.vector_store %arg13[%c0_119, %c0_120, %c0_121], %187 {strides = array<i32>} : memref<4x8x8xf32, #tpu.memory_space<vmem>>, vector<1x8x8xf32>,
      %c0_122 = arith.constant 0 : index
      %c0_123 = arith.constant 0 : index
      %c0_124 = arith.constant 0 : index
      %188 = vector.load %arg8[%c0_122, %c0_123, %c0_124] : memref<4x32x8xf32, #tpu.memory_space<vmem>>, vector<1x32x8xf32>
      %189 = vector.shape_cast %188 : vector<1x32x8xf32> to vector<32x8xf32>
      %cst_125 = arith.constant dense<0.000000e+00> : vector<8x8xf32>
      %190 = tpu.matmul %177, %189, %cst_125 {dimension_numbers = #tpu.dot_dimension_numbers<[1], [0], [0], [1], [0, 0, 1, 1], [], []>} : vector<8x32xf32>, vector<32x8xf32>, vector<8x8xf32> -> vector<8x8xf32>
      %c0_126 = arith.constant 0 : index
      %c0_127 = arith.constant 0 : index
      %c0_128 = arith.constant 0 : index
      %191 = vector.load %arg9[%c0_126, %c0_127, %c0_128] : memref<4x1x8xf32, #tpu.memory_space<vmem>>, vector<1x1x8xf32>
      %192 = vector.shape_cast %191 : vector<1x1x8xf32> to vector<1x8xf32>
      %193 = vector.broadcast %192 : vector<1x8xf32> to vector<8x8xf32>
      %194 = arith.addf %190, %193 : vector<8x8xf32>
      %c0_129 = arith.constant 0 : index
      %c0_130 = arith.constant 0 : index
      %c0_131 = arith.constant 0 : index
      %195 = vector.load %arg14[%c0_129, %c0_130, %c0_131] : memref<4x8x8xf32, #tpu.memory_space<vmem>>, vector<1x8x8xf32>
      %196 = vector.shape_cast %195 : vector<1x8x8xf32> to vector<8x8xf32>
      %197 = vector.shape_cast %194 : vector<8x8xf32> to vector<1x8x8xf32>
      tpu.vector_store %arg14[%c0_129, %c0_130, %c0_131], %197 {strides = array<i32>} : memref<4x8x8xf32, #tpu.memory_space<vmem>>, vector<1x8x8xf32>,
      %c1_132 = arith.constant 1 : index
      %c0_133 = arith.constant 0 : index
      %c0_134 = arith.constant 0 : index
      %198 = vector.load %arg6[%c1_132, %c0_133, %c0_134] : memref<4x32x8xf32, #tpu.memory_space<vmem>>, vector<1x32x8xf32>
      %199 = vector.shape_cast %198 : vector<1x32x8xf32> to vector<32x8xf32>
      %cst_135 = arith.constant dense<0.000000e+00> : vector<8x8xf32>
      %200 = tpu.matmul %177, %199, %cst_135 {dimension_numbers = #tpu.dot_dimension_numbers<[1], [0], [0], [1], [0, 0, 1, 1], [], []>} : vector<8x32xf32>, vector<32x8xf32>, vector<8x8xf32> -> vector<8x8xf32>
      %c1_136 = arith.constant 1 : index
      %c0_137 = arith.constant 0 : index
      %c0_138 = arith.constant 0 : index
      %201 = vector.load %arg7[%c1_136, %c0_137, %c0_138] : memref<4x1x8xf32, #tpu.memory_space<vmem>>, vector<1x1x8xf32>
      %202 = vector.shape_cast %201 : vector<1x1x8xf32> to vector<1x8xf32>
      %203 = vector.broadcast %202 : vector<1x8xf32> to vector<8x8xf32>
      %204 = arith.addf %200, %203 : vector<8x8xf32>
      %c1_139 = arith.constant 1 : index
      %c0_140 = arith.constant 0 : index
      %c0_141 = arith.constant 0 : index
      %205 = vector.load %arg13[%c1_139, %c0_140, %c0_141] : memref<4x8x8xf32, #tpu.memory_space<vmem>>, vector<1x8x8xf32>
      %206 = vector.shape_cast %205 : vector<1x8x8xf32> to vector<8x8xf32>
      %207 = vector.shape_cast %204 : vector<8x8xf32> to vector<1x8x8xf32>
      tpu.vector_store %arg13[%c1_139, %c0_140, %c0_141], %207 {strides = array<i32>} : memref<4x8x8xf32, #tpu.memory_space<vmem>>, vector<1x8x8xf32>,
      %c1_142 = arith.constant 1 : index
      %c0_143 = arith.constant 0 : index
      %c0_144 = arith.constant 0 : index
      %208 = vector.load %arg8[%c1_142, %c0_143, %c0_144] : memref<4x32x8xf32, #tpu.memory_space<vmem>>, vector<1x32x8xf32>
      %209 = vector.shape_cast %208 : vector<1x32x8xf32> to vector<32x8xf32>
      %cst_145 = arith.constant dense<0.000000e+00> : vector<8x8xf32>
      %210 = tpu.matmul %177, %209, %cst_145 {dimension_numbers = #tpu.dot_dimension_numbers<[1], [0], [0], [1], [0, 0, 1, 1], [], []>} : vector<8x32xf32>, vector<32x8xf32>, vector<8x8xf32> -> vector<8x8xf32>
      %c1_146 = arith.constant 1 : index
      %c0_147 = arith.constant 0 : index
      %c0_148 = arith.constant 0 : index
      %211 = vector.load %arg9[%c1_146, %c0_147, %c0_148] : memref<4x1x8xf32, #tpu.memory_space<vmem>>, vector<1x1x8xf32>
      %212 = vector.shape_cast %211 : vector<1x1x8xf32> to vector<1x8xf32>
      %213 = vector.broadcast %212 : vector<1x8xf32> to vector<8x8xf32>
      %214 = arith.addf %210, %213 : vector<8x8xf32>
      %c1_149 = arith.constant 1 : index
      %c0_150 = arith.constant 0 : index
      %c0_151 = arith.constant 0 : index
      %215 = vector.load %arg14[%c1_149, %c0_150, %c0_151] : memref<4x8x8xf32, #tpu.memory_space<vmem>>, vector<1x8x8xf32>
      %216 = vector.shape_cast %215 : vector<1x8x8xf32> to vector<8x8xf32>
      %217 = vector.shape_cast %214 : vector<8x8xf32> to vector<1x8x8xf32>
      tpu.vector_store %arg14[%c1_149, %c0_150, %c0_151], %217 {strides = array<i32>} : memref<4x8x8xf32, #tpu.memory_space<vmem>>, vector<1x8x8xf32>,
      %c2_152 = arith.constant 2 : index
      %c0_153 = arith.constant 0 : index
      %c0_154 = arith.constant 0 : index
      %218 = vector.load %arg6[%c2_152, %c0_153, %c0_154] : memref<4x32x8xf32, #tpu.memory_space<vmem>>, vector<1x32x8xf32>
      %219 = vector.shape_cast %218 : vector<1x32x8xf32> to vector<32x8xf32>
      %cst_155 = arith.constant dense<0.000000e+00> : vector<8x8xf32>
      %220 = tpu.matmul %177, %219, %cst_155 {dimension_numbers = #tpu.dot_dimension_numbers<[1], [0], [0], [1], [0, 0, 1, 1], [], []>} : vector<8x32xf32>, vector<32x8xf32>, vector<8x8xf32> -> vector<8x8xf32>
      %c2_156 = arith.constant 2 : index
      %c0_157 = arith.constant 0 : index
      %c0_158 = arith.constant 0 : index
      %221 = vector.load %arg7[%c2_156, %c0_157, %c0_158] : memref<4x1x8xf32, #tpu.memory_space<vmem>>, vector<1x1x8xf32>
      %222 = vector.shape_cast %221 : vector<1x1x8xf32> to vector<1x8xf32>
      %223 = vector.broadcast %222 : vector<1x8xf32> to vector<8x8xf32>
      %224 = arith.addf %220, %223 : vector<8x8xf32>
      %c2_159 = arith.constant 2 : index
      %c0_160 = arith.constant 0 : index
      %c0_161 = arith.constant 0 : index
      %225 = vector.load %arg13[%c2_159, %c0_160, %c0_161] : memref<4x8x8xf32, #tpu.memory_space<vmem>>, vector<1x8x8xf32>
      %226 = vector.shape_cast %225 : vector<1x8x8xf32> to vector<8x8xf32>
      %227 = vector.shape_cast %224 : vector<8x8xf32> to vector<1x8x8xf32>
      tpu.vector_store %arg13[%c2_159, %c0_160, %c0_161], %227 {strides = array<i32>} : memref<4x8x8xf32, #tpu.memory_space<vmem>>, vector<1x8x8xf32>,
      %c2_162 = arith.constant 2 : index
      %c0_163 = arith.constant 0 : index
      %c0_164 = arith.constant 0 : index
      %228 = vector.load %arg8[%c2_162, %c0_163, %c0_164] : memref<4x32x8xf32, #tpu.memory_space<vmem>>, vector<1x32x8xf32>
      %229 = vector.shape_cast %228 : vector<1x32x8xf32> to vector<32x8xf32>
      %cst_165 = arith.constant dense<0.000000e+00> : vector<8x8xf32>
      %230 = tpu.matmul %177, %229, %cst_165 {dimension_numbers = #tpu.dot_dimension_numbers<[1], [0], [0], [1], [0, 0, 1, 1], [], []>} : vector<8x32xf32>, vector<32x8xf32>, vector<8x8xf32> -> vector<8x8xf32>
      %c2_166 = arith.constant 2 : index
      %c0_167 = arith.constant 0 : index
      %c0_168 = arith.constant 0 : index
      %231 = vector.load %arg9[%c2_166, %c0_167, %c0_168] : memref<4x1x8xf32, #tpu.memory_space<vmem>>, vector<1x1x8xf32>
      %232 = vector.shape_cast %231 : vector<1x1x8xf32> to vector<1x8xf32>
      %233 = vector.broadcast %232 : vector<1x8xf32> to vector<8x8xf32>
      %234 = arith.addf %230, %233 : vector<8x8xf32>
      %c2_169 = arith.constant 2 : index
      %c0_170 = arith.constant 0 : index
      %c0_171 = arith.constant 0 : index
      %235 = vector.load %arg14[%c2_169, %c0_170, %c0_171] : memref<4x8x8xf32, #tpu.memory_space<vmem>>, vector<1x8x8xf32>
      %236 = vector.shape_cast %235 : vector<1x8x8xf32> to vector<8x8xf32>
      %237 = vector.shape_cast %234 : vector<8x8xf32> to vector<1x8x8xf32>
      tpu.vector_store %arg14[%c2_169, %c0_170, %c0_171], %237 {strides = array<i32>} : memref<4x8x8xf32, #tpu.memory_space<vmem>>, vector<1x8x8xf32>,
      %c3_172 = arith.constant 3 : index
      %c0_173 = arith.constant 0 : index
      %c0_174 = arith.constant 0 : index
      %238 = vector.load %arg6[%c3_172, %c0_173, %c0_174] : memref<4x32x8xf32, #tpu.memory_space<vmem>>, vector<1x32x8xf32>
      %239 = vector.shape_cast %238 : vector<1x32x8xf32> to vector<32x8xf32>
      %cst_175 = arith.constant dense<0.000000e+00> : vector<8x8xf32>
      %240 = tpu.matmul %177, %239, %cst_175 {dimension_numbers = #tpu.dot_dimension_numbers<[1], [0], [0], [1], [0, 0, 1, 1], [], []>} : vector<8x32xf32>, vector<32x8xf32>, vector<8x8xf32> -> vector<8x8xf32>
      %c3_176 = arith.constant 3 : index
      %c0_177 = arith.constant 0 : index
      %c0_178 = arith.constant 0 : index
      %241 = vector.load %arg7[%c3_176, %c0_177, %c0_178] : memref<4x1x8xf32, #tpu.memory_space<vmem>>, vector<1x1x8xf32>
      %242 = vector.shape_cast %241 : vector<1x1x8xf32> to vector<1x8xf32>
      %243 = vector.broadcast %242 : vector<1x8xf32> to vector<8x8xf32>
      %244 = arith.addf %240, %243 : vector<8x8xf32>
      %c3_179 = arith.constant 3 : index
      %c0_180 = arith.constant 0 : index
      %c0_181 = arith.constant 0 : index
      %245 = vector.load %arg13[%c3_179, %c0_180, %c0_181] : memref<4x8x8xf32, #tpu.memory_space<vmem>>, vector<1x8x8xf32>
      %246 = vector.shape_cast %245 : vector<1x8x8xf32> to vector<8x8xf32>
      %247 = vector.shape_cast %244 : vector<8x8xf32> to vector<1x8x8xf32>
      tpu.vector_store %arg13[%c3_179, %c0_180, %c0_181], %247 {strides = array<i32>} : memref<4x8x8xf32, #tpu.memory_space<vmem>>, vector<1x8x8xf32>,
      %c3_182 = arith.constant 3 : index
      %c0_183 = arith.constant 0 : index
      %c0_184 = arith.constant 0 : index
      %248 = vector.load %arg8[%c3_182, %c0_183, %c0_184] : memref<4x32x8xf32, #tpu.memory_space<vmem>>, vector<1x32x8xf32>
      %249 = vector.shape_cast %248 : vector<1x32x8xf32> to vector<32x8xf32>
      %cst_185 = arith.constant dense<0.000000e+00> : vector<8x8xf32>
      %250 = tpu.matmul %177, %249, %cst_185 {dimension_numbers = #tpu.dot_dimension_numbers<[1], [0], [0], [1], [0, 0, 1, 1], [], []>} : vector<8x32xf32>, vector<32x8xf32>, vector<8x8xf32> -> vector<8x8xf32>
      %c3_186 = arith.constant 3 : index
      %c0_187 = arith.constant 0 : index
      %c0_188 = arith.constant 0 : index
      %251 = vector.load %arg9[%c3_186, %c0_187, %c0_188] : memref<4x1x8xf32, #tpu.memory_space<vmem>>, vector<1x1x8xf32>
      %252 = vector.shape_cast %251 : vector<1x1x8xf32> to vector<1x8xf32>
      %253 = vector.broadcast %252 : vector<1x8xf32> to vector<8x8xf32>
      %254 = arith.addf %250, %253 : vector<8x8xf32>
      %c3_189 = arith.constant 3 : index
      %c0_190 = arith.constant 0 : index
      %c0_191 = arith.constant 0 : index
      %255 = vector.load %arg14[%c3_189, %c0_190, %c0_191] : memref<4x8x8xf32, #tpu.memory_space<vmem>>, vector<1x8x8xf32>
      %256 = vector.shape_cast %255 : vector<1x8x8xf32> to vector<8x8xf32>
      %257 = vector.shape_cast %254 : vector<8x8xf32> to vector<1x8x8xf32>
      tpu.vector_store %arg14[%c3_189, %c0_190, %c0_191], %257 {strides = array<i32>} : memref<4x8x8xf32, #tpu.memory_space<vmem>>, vector<1x8x8xf32>,
    } else {
    }
    %c0 = arith.constant 0 : index
    %c0_1 = arith.constant 0 : index
    %c0_2 = arith.constant 0 : index
    %3 = vector.load %arg3[%c0, %c0_1, %c0_2] : memref<1x8x32xf32, #tpu.memory_space<vmem>>, vector<1x8x32xf32>
    %4 = vector.shape_cast %3 : vector<1x8x32xf32> to vector<8x32xf32>
    %cst = arith.constant 0.000000e+00 : f32
    %5 = vector.broadcast %cst : f32 to vector<8x32xf32>
    %c0_3 = arith.constant 0 : index
    %c0_4 = arith.constant 0 : index
    %c0_5 = arith.constant 0 : index
    %6 = vector.load %arg4[%c0_3, %c0_4, %c0_5] : memref<4x32x8xf32, #tpu.memory_space<vmem>>, vector<1x32x8xf32>
    %7 = vector.shape_cast %6 : vector<1x32x8xf32> to vector<32x8xf32>
    %cst_6 = arith.constant dense<0.000000e+00> : vector<8x8xf32>
    %8 = tpu.matmul %4, %7, %cst_6 {dimension_numbers = #tpu.dot_dimension_numbers<[1], [0], [0], [1], [0, 0, 1, 1], [], []>} : vector<8x32xf32>, vector<32x8xf32>, vector<8x8xf32> -> vector<8x8xf32>
    %c0_7 = arith.constant 0 : index
    %c0_8 = arith.constant 0 : index
    %c0_9 = arith.constant 0 : index
    %9 = vector.load %arg5[%c0_7, %c0_8, %c0_9] : memref<4x1x8xf32, #tpu.memory_space<vmem>>, vector<1x1x8xf32>
    %10 = vector.shape_cast %9 : vector<1x1x8xf32> to vector<1x8xf32>
    %11 = vector.broadcast %10 : vector<1x8xf32> to vector<8x8xf32>
    %12 = arith.addf %8, %11 : vector<8x8xf32>
    %cst_10 = arith.constant 0.353553385 : f32
    %13 = vector.broadcast %cst_10 : f32 to vector<8x8xf32>
    %14 = arith.mulf %12, %13 : vector<8x8xf32>
    %cst_11 = arith.constant 0xFF800000 : f32
    %15 = vector.broadcast %cst_11 : f32 to vector<8x1xf32>
    %cst_12 = arith.constant 0.000000e+00 : f32
    %16 = vector.broadcast %cst_12 : f32 to vector<8x1xf32>
    %cst_13 = arith.constant 0.000000e+00 : f32
    %17 = vector.broadcast %cst_13 : f32 to vector<8x8xf32>
    %c0_14 = arith.constant 0 : index
    %c0_15 = arith.constant 0 : index
    %c0_16 = arith.constant 0 : index
    %18 = vector.load %arg13[%c0_14, %c0_15, %c0_16] : memref<4x8x8xf32, #tpu.memory_space<vmem>>, vector<1x8x8xf32>
    %19 = vector.shape_cast %18 : vector<1x8x8xf32> to vector<8x8xf32>
    %c0_17 = arith.constant 0 : index
    %c0_18 = arith.constant 0 : index
    %c0_19 = arith.constant 0 : index
    %20 = vector.load %arg14[%c0_17, %c0_18, %c0_19] : memref<4x8x8xf32, #tpu.memory_space<vmem>>, vector<1x8x8xf32>
    %21 = vector.shape_cast %20 : vector<1x8x8xf32> to vector<8x8xf32>
    %cst_20 = arith.constant dense<0.000000e+00> : vector<8x8xf32>
    %22 = tpu.matmul %14, %19, %cst_20 {dimension_numbers = #tpu.dot_dimension_numbers<[1], [1], [0], [0], [0, 0, 1, 0], [], []>} : vector<8x8xf32>, vector<8x8xf32>, vector<8x8xf32> -> vector<8x8xf32>
    %cst_21 = arith.constant dense<0xFF800000> : vector<8xf32>
    %23 = vector.multi_reduction <maximumf>, %22, %cst_21 [1] : vector<8x8xf32> to vector<8xf32>
    %24 = vector.shape_cast %23 : vector<8xf32> to vector<8x1xf32>
    %25 = arith.maximumf %15, %24 : vector<8x1xf32>
    %26 = arith.subf %15, %25 : vector<8x1xf32>
    %27 = math.exp %26 : vector<8x1xf32>
    %28 = vector.broadcast %25 : vector<8x1xf32> to vector<8x8xf32>
    %29 = arith.subf %22, %28 : vector<8x8xf32>
    %30 = math.exp %29 : vector<8x8xf32>
    %31 = arith.mulf %27, %16 : vector<8x1xf32>
    %cst_22 = arith.constant dense<0.000000e+00> : vector<8xf32>
    %32 = vector.multi_reduction <add>, %30, %cst_22 [1] : vector<8x8xf32> to vector<8xf32>
    %33 = vector.shape_cast %32 : vector<8xf32> to vector<8x1xf32>
    %34 = arith.addf %31, %33 : vector<8x1xf32>
    %35 = vector.broadcast %27 : vector<8x1xf32> to vector<8x8xf32>
    %36 = arith.mulf %35, %17 : vector<8x8xf32>
    %cst_23 = arith.constant dense<0.000000e+00> : vector<8x8xf32>
    %37 = tpu.matmul %30, %21, %cst_23 {dimension_numbers = #tpu.dot_dimension_numbers<[1], [0], [0], [1], [0, 0, 1, 1], [], []>} : vector<8x8xf32>, vector<8x8xf32>, vector<8x8xf32> -> vector<8x8xf32>
    %38 = arith.addf %36, %37 : vector<8x8xf32>
    %cst_24 = arith.constant 1.000000e+00 : f32
    %39 = vector.broadcast %cst_24 : f32 to vector<8x1xf32>
    %40 = arith.divf %39, %34 : vector<8x1xf32>
    %41 = vector.broadcast %40 : vector<8x1xf32> to vector<8x8xf32>
    %42 = arith.mulf %38, %41 : vector<8x8xf32>
    %c0_25 = arith.constant 0 : index
    %c0_26 = arith.constant 0 : index
    %c0_27 = arith.constant 0 : index
    %43 = vector.load %arg10[%c0_25, %c0_26, %c0_27] : memref<4x8x32xf32, #tpu.memory_space<vmem>>, vector<1x8x32xf32>
    %44 = vector.shape_cast %43 : vector<1x8x32xf32> to vector<8x32xf32>
    %cst_28 = arith.constant dense<0.000000e+00> : vector<8x32xf32>
    %45 = tpu.matmul %42, %44, %cst_28 {dimension_numbers = #tpu.dot_dimension_numbers<[1], [0], [0], [1], [0, 0, 1, 1], [], []>} : vector<8x8xf32>, vector<8x32xf32>, vector<8x32xf32> -> vector<8x32xf32>
    %46 = arith.addf %5, %45 : vector<8x32xf32>
    %c1 = arith.constant 1 : index
    %c0_29 = arith.constant 0 : index
    %c0_30 = arith.constant 0 : index
    %47 = vector.load %arg4[%c1, %c0_29, %c0_30] : memref<4x32x8xf32, #tpu.memory_space<vmem>>, vector<1x32x8xf32>
    %48 = vector.shape_cast %47 : vector<1x32x8xf32> to vector<32x8xf32>
    %cst_31 = arith.constant dense<0.000000e+00> : vector<8x8xf32>
    %49 = tpu.matmul %4, %48, %cst_31 {dimension_numbers = #tpu.dot_dimension_numbers<[1], [0], [0], [1], [0, 0, 1, 1], [], []>} : vector<8x32xf32>, vector<32x8xf32>, vector<8x8xf32> -> vector<8x8xf32>
    %c1_32 = arith.constant 1 : index
    %c0_33 = arith.constant 0 : index
    %c0_34 = arith.constant 0 : index
    %50 = vector.load %arg5[%c1_32, %c0_33, %c0_34] : memref<4x1x8xf32, #tpu.memory_space<vmem>>, vector<1x1x8xf32>
    %51 = vector.shape_cast %50 : vector<1x1x8xf32> to vector<1x8xf32>
    %52 = vector.broadcast %51 : vector<1x8xf32> to vector<8x8xf32>
    %53 = arith.addf %49, %52 : vector<8x8xf32>
    %cst_35 = arith.constant 0.353553385 : f32
    %54 = vector.broadcast %cst_35 : f32 to vector<8x8xf32>
    %55 = arith.mulf %53, %54 : vector<8x8xf32>
    %cst_36 = arith.constant 0xFF800000 : f32
    %56 = vector.broadcast %cst_36 : f32 to vector<8x1xf32>
    %cst_37 = arith.constant 0.000000e+00 : f32
    %57 = vector.broadcast %cst_37 : f32 to vector<8x1xf32>
    %cst_38 = arith.constant 0.000000e+00 : f32
    %58 = vector.broadcast %cst_38 : f32 to vector<8x8xf32>
    %c1_39 = arith.constant 1 : index
    %c0_40 = arith.constant 0 : index
    %c0_41 = arith.constant 0 : index
    %59 = vector.load %arg13[%c1_39, %c0_40, %c0_41] : memref<4x8x8xf32, #tpu.memory_space<vmem>>, vector<1x8x8xf32>
    %60 = vector.shape_cast %59 : vector<1x8x8xf32> to vector<8x8xf32>
    %c1_42 = arith.constant 1 : index
    %c0_43 = arith.constant 0 : index
    %c0_44 = arith.constant 0 : index
    %61 = vector.load %arg14[%c1_42, %c0_43, %c0_44] : memref<4x8x8xf32, #tpu.memory_space<vmem>>, vector<1x8x8xf32>
    %62 = vector.shape_cast %61 : vector<1x8x8xf32> to vector<8x8xf32>
    %cst_45 = arith.constant dense<0.000000e+00> : vector<8x8xf32>
    %63 = tpu.matmul %55, %60, %cst_45 {dimension_numbers = #tpu.dot_dimension_numbers<[1], [1], [0], [0], [0, 0, 1, 0], [], []>} : vector<8x8xf32>, vector<8x8xf32>, vector<8x8xf32> -> vector<8x8xf32>
    %cst_46 = arith.constant dense<0xFF800000> : vector<8xf32>
    %64 = vector.multi_reduction <maximumf>, %63, %cst_46 [1] : vector<8x8xf32> to vector<8xf32>
    %65 = vector.shape_cast %64 : vector<8xf32> to vector<8x1xf32>
    %66 = arith.maximumf %56, %65 : vector<8x1xf32>
    %67 = arith.subf %56, %66 : vector<8x1xf32>
    %68 = math.exp %67 : vector<8x1xf32>
    %69 = vector.broadcast %66 : vector<8x1xf32> to vector<8x8xf32>
    %70 = arith.subf %63, %69 : vector<8x8xf32>
    %71 = math.exp %70 : vector<8x8xf32>
    %72 = arith.mulf %68, %57 : vector<8x1xf32>
    %cst_47 = arith.constant dense<0.000000e+00> : vector<8xf32>
    %73 = vector.multi_reduction <add>, %71, %cst_47 [1] : vector<8x8xf32> to vector<8xf32>
    %74 = vector.shape_cast %73 : vector<8xf32> to vector<8x1xf32>
    %75 = arith.addf %72, %74 : vector<8x1xf32>
    %76 = vector.broadcast %68 : vector<8x1xf32> to vector<8x8xf32>
    %77 = arith.mulf %76, %58 : vector<8x8xf32>
    %cst_48 = arith.constant dense<0.000000e+00> : vector<8x8xf32>
    %78 = tpu.matmul %71, %62, %cst_48 {dimension_numbers = #tpu.dot_dimension_numbers<[1], [0], [0], [1], [0, 0, 1, 1], [], []>} : vector<8x8xf32>, vector<8x8xf32>, vector<8x8xf32> -> vector<8x8xf32>
    %79 = arith.addf %77, %78 : vector<8x8xf32>
    %cst_49 = arith.constant 1.000000e+00 : f32
    %80 = vector.broadcast %cst_49 : f32 to vector<8x1xf32>
    %81 = arith.divf %80, %75 : vector<8x1xf32>
    %82 = vector.broadcast %81 : vector<8x1xf32> to vector<8x8xf32>
    %83 = arith.mulf %79, %82 : vector<8x8xf32>
    %c1_50 = arith.constant 1 : index
    %c0_51 = arith.constant 0 : index
    %c0_52 = arith.constant 0 : index
    %84 = vector.load %arg10[%c1_50, %c0_51, %c0_52] : memref<4x8x32xf32, #tpu.memory_space<vmem>>, vector<1x8x32xf32>
    %85 = vector.shape_cast %84 : vector<1x8x32xf32> to vector<8x32xf32>
    %cst_53 = arith.constant dense<0.000000e+00> : vector<8x32xf32>
    %86 = tpu.matmul %83, %85, %cst_53 {dimension_numbers = #tpu.dot_dimension_numbers<[1], [0], [0], [1], [0, 0, 1, 1], [], []>} : vector<8x8xf32>, vector<8x32xf32>, vector<8x32xf32> -> vector<8x32xf32>
    %87 = arith.addf %46, %86 : vector<8x32xf32>
    %c2 = arith.constant 2 : index
    %c0_54 = arith.constant 0 : index
    %c0_55 = arith.constant 0 : index
    %88 = vector.load %arg4[%c2, %c0_54, %c0_55] : memref<4x32x8xf32, #tpu.memory_space<vmem>>, vector<1x32x8xf32>
    %89 = vector.shape_cast %88 : vector<1x32x8xf32> to vector<32x8xf32>
    %cst_56 = arith.constant dense<0.000000e+00> : vector<8x8xf32>
    %90 = tpu.matmul %4, %89, %cst_56 {dimension_numbers = #tpu.dot_dimension_numbers<[1], [0], [0], [1], [0, 0, 1, 1], [], []>} : vector<8x32xf32>, vector<32x8xf32>, vector<8x8xf32> -> vector<8x8xf32>
    %c2_57 = arith.constant 2 : index
    %c0_58 = arith.constant 0 : index
    %c0_59 = arith.constant 0 : index
    %91 = vector.load %arg5[%c2_57, %c0_58, %c0_59] : memref<4x1x8xf32, #tpu.memory_space<vmem>>, vector<1x1x8xf32>
    %92 = vector.shape_cast %91 : vector<1x1x8xf32> to vector<1x8xf32>
    %93 = vector.broadcast %92 : vector<1x8xf32> to vector<8x8xf32>
    %94 = arith.addf %90, %93 : vector<8x8xf32>
    %cst_60 = arith.constant 0.353553385 : f32
    %95 = vector.broadcast %cst_60 : f32 to vector<8x8xf32>
    %96 = arith.mulf %94, %95 : vector<8x8xf32>
    %cst_61 = arith.constant 0xFF800000 : f32
    %97 = vector.broadcast %cst_61 : f32 to vector<8x1xf32>
    %cst_62 = arith.constant 0.000000e+00 : f32
    %98 = vector.broadcast %cst_62 : f32 to vector<8x1xf32>
    %cst_63 = arith.constant 0.000000e+00 : f32
    %99 = vector.broadcast %cst_63 : f32 to vector<8x8xf32>
    %c2_64 = arith.constant 2 : index
    %c0_65 = arith.constant 0 : index
    %c0_66 = arith.constant 0 : index
    %100 = vector.load %arg13[%c2_64, %c0_65, %c0_66] : memref<4x8x8xf32, #tpu.memory_space<vmem>>, vector<1x8x8xf32>
    %101 = vector.shape_cast %100 : vector<1x8x8xf32> to vector<8x8xf32>
    %c2_67 = arith.constant 2 : index
    %c0_68 = arith.constant 0 : index
    %c0_69 = arith.constant 0 : index
    %102 = vector.load %arg14[%c2_67, %c0_68, %c0_69] : memref<4x8x8xf32, #tpu.memory_space<vmem>>, vector<1x8x8xf32>
    %103 = vector.shape_cast %102 : vector<1x8x8xf32> to vector<8x8xf32>
    %cst_70 = arith.constant dense<0.000000e+00> : vector<8x8xf32>
    %104 = tpu.matmul %96, %101, %cst_70 {dimension_numbers = #tpu.dot_dimension_numbers<[1], [1], [0], [0], [0, 0, 1, 0], [], []>} : vector<8x8xf32>, vector<8x8xf32>, vector<8x8xf32> -> vector<8x8xf32>
    %cst_71 = arith.constant dense<0xFF800000> : vector<8xf32>
    %105 = vector.multi_reduction <maximumf>, %104, %cst_71 [1] : vector<8x8xf32> to vector<8xf32>
    %106 = vector.shape_cast %105 : vector<8xf32> to vector<8x1xf32>
    %107 = arith.maximumf %97, %106 : vector<8x1xf32>
    %108 = arith.subf %97, %107 : vector<8x1xf32>
    %109 = math.exp %108 : vector<8x1xf32>
    %110 = vector.broadcast %107 : vector<8x1xf32> to vector<8x8xf32>
    %111 = arith.subf %104, %110 : vector<8x8xf32>
    %112 = math.exp %111 : vector<8x8xf32>
    %113 = arith.mulf %109, %98 : vector<8x1xf32>
    %cst_72 = arith.constant dense<0.000000e+00> : vector<8xf32>
    %114 = vector.multi_reduction <add>, %112, %cst_72 [1] : vector<8x8xf32> to vector<8xf32>
    %115 = vector.shape_cast %114 : vector<8xf32> to vector<8x1xf32>
    %116 = arith.addf %113, %115 : vector<8x1xf32>
    %117 = vector.broadcast %109 : vector<8x1xf32> to vector<8x8xf32>
    %118 = arith.mulf %117, %99 : vector<8x8xf32>
    %cst_73 = arith.constant dense<0.000000e+00> : vector<8x8xf32>
    %119 = tpu.matmul %112, %103, %cst_73 {dimension_numbers = #tpu.dot_dimension_numbers<[1], [0], [0], [1], [0, 0, 1, 1], [], []>} : vector<8x8xf32>, vector<8x8xf32>, vector<8x8xf32> -> vector<8x8xf32>
    %120 = arith.addf %118, %119 : vector<8x8xf32>
    %cst_74 = arith.constant 1.000000e+00 : f32
    %121 = vector.broadcast %cst_74 : f32 to vector<8x1xf32>
    %122 = arith.divf %121, %116 : vector<8x1xf32>
    %123 = vector.broadcast %122 : vector<8x1xf32> to vector<8x8xf32>
    %124 = arith.mulf %120, %123 : vector<8x8xf32>
    %c2_75 = arith.constant 2 : index
    %c0_76 = arith.constant 0 : index
    %c0_77 = arith.constant 0 : index
    %125 = vector.load %arg10[%c2_75, %c0_76, %c0_77] : memref<4x8x32xf32, #tpu.memory_space<vmem>>, vector<1x8x32xf32>
    %126 = vector.shape_cast %125 : vector<1x8x32xf32> to vector<8x32xf32>
    %cst_78 = arith.constant dense<0.000000e+00> : vector<8x32xf32>
    %127 = tpu.matmul %124, %126, %cst_78 {dimension_numbers = #tpu.dot_dimension_numbers<[1], [0], [0], [1], [0, 0, 1, 1], [], []>} : vector<8x8xf32>, vector<8x32xf32>, vector<8x32xf32> -> vector<8x32xf32>
    %128 = arith.addf %87, %127 : vector<8x32xf32>
    %c3 = arith.constant 3 : index
    %c0_79 = arith.constant 0 : index
    %c0_80 = arith.constant 0 : index
    %129 = vector.load %arg4[%c3, %c0_79, %c0_80] : memref<4x32x8xf32, #tpu.memory_space<vmem>>, vector<1x32x8xf32>
    %130 = vector.shape_cast %129 : vector<1x32x8xf32> to vector<32x8xf32>
    %cst_81 = arith.constant dense<0.000000e+00> : vector<8x8xf32>
    %131 = tpu.matmul %4, %130, %cst_81 {dimension_numbers = #tpu.dot_dimension_numbers<[1], [0], [0], [1], [0, 0, 1, 1], [], []>} : vector<8x32xf32>, vector<32x8xf32>, vector<8x8xf32> -> vector<8x8xf32>
    %c3_82 = arith.constant 3 : index
    %c0_83 = arith.constant 0 : index
    %c0_84 = arith.constant 0 : index
    %132 = vector.load %arg5[%c3_82, %c0_83, %c0_84] : memref<4x1x8xf32, #tpu.memory_space<vmem>>, vector<1x1x8xf32>
    %133 = vector.shape_cast %132 : vector<1x1x8xf32> to vector<1x8xf32>
    %134 = vector.broadcast %133 : vector<1x8xf32> to vector<8x8xf32>
    %135 = arith.addf %131, %134 : vector<8x8xf32>
    %cst_85 = arith.constant 0.353553385 : f32
    %136 = vector.broadcast %cst_85 : f32 to vector<8x8xf32>
    %137 = arith.mulf %135, %136 : vector<8x8xf32>
    %cst_86 = arith.constant 0xFF800000 : f32
    %138 = vector.broadcast %cst_86 : f32 to vector<8x1xf32>
    %cst_87 = arith.constant 0.000000e+00 : f32
    %139 = vector.broadcast %cst_87 : f32 to vector<8x1xf32>
    %cst_88 = arith.constant 0.000000e+00 : f32
    %140 = vector.broadcast %cst_88 : f32 to vector<8x8xf32>
    %c3_89 = arith.constant 3 : index
    %c0_90 = arith.constant 0 : index
    %c0_91 = arith.constant 0 : index
    %141 = vector.load %arg13[%c3_89, %c0_90, %c0_91] : memref<4x8x8xf32, #tpu.memory_space<vmem>>, vector<1x8x8xf32>
    %142 = vector.shape_cast %141 : vector<1x8x8xf32> to vector<8x8xf32>
    %c3_92 = arith.constant 3 : index
    %c0_93 = arith.constant 0 : index
    %c0_94 = arith.constant 0 : index
    %143 = vector.load %arg14[%c3_92, %c0_93, %c0_94] : memref<4x8x8xf32, #tpu.memory_space<vmem>>, vector<1x8x8xf32>
    %144 = vector.shape_cast %143 : vector<1x8x8xf32> to vector<8x8xf32>
    %cst_95 = arith.constant dense<0.000000e+00> : vector<8x8xf32>
    %145 = tpu.matmul %137, %142, %cst_95 {dimension_numbers = #tpu.dot_dimension_numbers<[1], [1], [0], [0], [0, 0, 1, 0], [], []>} : vector<8x8xf32>, vector<8x8xf32>, vector<8x8xf32> -> vector<8x8xf32>
    %cst_96 = arith.constant dense<0xFF800000> : vector<8xf32>
    %146 = vector.multi_reduction <maximumf>, %145, %cst_96 [1] : vector<8x8xf32> to vector<8xf32>
    %147 = vector.shape_cast %146 : vector<8xf32> to vector<8x1xf32>
    %148 = arith.maximumf %138, %147 : vector<8x1xf32>
    %149 = arith.subf %138, %148 : vector<8x1xf32>
    %150 = math.exp %149 : vector<8x1xf32>
    %151 = vector.broadcast %148 : vector<8x1xf32> to vector<8x8xf32>
    %152 = arith.subf %145, %151 : vector<8x8xf32>
    %153 = math.exp %152 : vector<8x8xf32>
    %154 = arith.mulf %150, %139 : vector<8x1xf32>
    %cst_97 = arith.constant dense<0.000000e+00> : vector<8xf32>
    %155 = vector.multi_reduction <add>, %153, %cst_97 [1] : vector<8x8xf32> to vector<8xf32>
    %156 = vector.shape_cast %155 : vector<8xf32> to vector<8x1xf32>
    %157 = arith.addf %154, %156 : vector<8x1xf32>
    %158 = vector.broadcast %150 : vector<8x1xf32> to vector<8x8xf32>
    %159 = arith.mulf %158, %140 : vector<8x8xf32>
    %cst_98 = arith.constant dense<0.000000e+00> : vector<8x8xf32>
    %160 = tpu.matmul %153, %144, %cst_98 {dimension_numbers = #tpu.dot_dimension_numbers<[1], [0], [0], [1], [0, 0, 1, 1], [], []>} : vector<8x8xf32>, vector<8x8xf32>, vector<8x8xf32> -> vector<8x8xf32>
    %161 = arith.addf %159, %160 : vector<8x8xf32>
    %cst_99 = arith.constant 1.000000e+00 : f32
    %162 = vector.broadcast %cst_99 : f32 to vector<8x1xf32>
    %163 = arith.divf %162, %157 : vector<8x1xf32>
    %164 = vector.broadcast %163 : vector<8x1xf32> to vector<8x8xf32>
    %165 = arith.mulf %161, %164 : vector<8x8xf32>
    %c3_100 = arith.constant 3 : index
    %c0_101 = arith.constant 0 : index
    %c0_102 = arith.constant 0 : index
    %166 = vector.load %arg10[%c3_100, %c0_101, %c0_102] : memref<4x8x32xf32, #tpu.memory_space<vmem>>, vector<1x8x32xf32>
    %167 = vector.shape_cast %166 : vector<1x8x32xf32> to vector<8x32xf32>
    %cst_103 = arith.constant dense<0.000000e+00> : vector<8x32xf32>
    %168 = tpu.matmul %165, %167, %cst_103 {dimension_numbers = #tpu.dot_dimension_numbers<[1], [0], [0], [1], [0, 0, 1, 1], [], []>} : vector<8x8xf32>, vector<8x32xf32>, vector<8x32xf32> -> vector<8x32xf32>
    %169 = arith.addf %128, %168 : vector<8x32xf32>
    %c0_104 = arith.constant 0 : index
    %c0_105 = arith.constant 0 : index
    %170 = vector.load %arg11[%c0_104, %c0_105] : memref<1x32xf32, #tpu.memory_space<vmem>>, vector<1x32xf32>
    %171 = vector.broadcast %170 : vector<1x32xf32> to vector<8x32xf32>
    %172 = arith.addf %169, %171 : vector<8x32xf32>
    %c0_106 = arith.constant 0 : index
    %c0_107 = arith.constant 0 : index
    %c0_108 = arith.constant 0 : index
    %173 = vector.load %arg12[%c0_106, %c0_107, %c0_108] : memref<1x8x32xf32, #tpu.memory_space<vmem>>, vector<1x8x32xf32>
    %174 = vector.shape_cast %173 : vector<1x8x32xf32> to vector<8x32xf32>
    %175 = vector.shape_cast %172 : vector<8x32xf32> to vector<1x8x32xf32>
    tpu.vector_store %arg12[%c0_106, %c0_107, %c0_108], %175 {strides = array<i32>} : memref<1x8x32xf32, #tpu.memory_space<vmem>>, vector<1x8x32xf32>,
    return
  }
  func.func @transform_0(%arg0: i32, %arg1: i32) -> (i32, i32, i32) {
    %c0_i32 = arith.constant 0 : i32
    %c0_i32_0 = arith.constant 0 : i32
    %c0_i32_1 = arith.constant 0 : i32
    return %arg0, %c0_i32, %c0_i32_0 : i32, i32, i32
  }
  func.func @transform_1(%arg0: i32, %arg1: i32) -> (i32, i32, i32) {
    %c0_i32 = arith.constant 0 : i32
    %c0_i32_0 = arith.constant 0 : i32
    return %arg0, %arg1, %c0_i32 : i32, i32, i32
  }
  func.func @transform_2(%arg0: i32, %arg1: i32) -> (i32, i32, i32) {
    %c0_i32 = arith.constant 0 : i32
    %c0_i32_0 = arith.constant 0 : i32
    %c0_i32_1 = arith.constant 0 : i32
    %c0_i32_2 = arith.constant 0 : i32
    return %c0_i32, %c0_i32_0, %c0_i32_1 : i32, i32, i32
  }
  func.func @transform_3(%arg0: i32, %arg1: i32) -> (i32, i32, i32) {
    %c0_i32 = arith.constant 0 : i32
    %c0_i32_0 = arith.constant 0 : i32
    %c0_i32_1 = arith.constant 0 : i32
    %c0_i32_2 = arith.constant 0 : i32
    return %c0_i32, %c0_i32_0, %c0_i32_1 : i32, i32, i32
  }
  func.func @transform_4(%arg0: i32, %arg1: i32) -> (i32, i32, i32) {
    %c0_i32 = arith.constant 0 : i32
    %c0_i32_0 = arith.constant 0 : i32
    %c0_i32_1 = arith.constant 0 : i32
    %c0_i32_2 = arith.constant 0 : i32
    return %c0_i32, %c0_i32_0, %c0_i32_1 : i32, i32, i32
  }
  func.func @transform_5(%arg0: i32, %arg1: i32) -> (i32, i32, i32) {
    %c0_i32 = arith.constant 0 : i32
    %c0_i32_0 = arith.constant 0 : i32
    %c0_i32_1 = arith.constant 0 : i32
    %c0_i32_2 = arith.constant 0 : i32
    return %c0_i32, %c0_i32_0, %c0_i32_1 : i32, i32, i32
  }
  func.func @transform_6(%arg0: i32, %arg1: i32) -> (i32, i32, i32) {
    %c0_i32 = arith.constant 0 : i32
    %c0_i32_0 = arith.constant 0 : i32
    %c0_i32_1 = arith.constant 0 : i32
    %c0_i32_2 = arith.constant 0 : i32
    return %c0_i32, %c0_i32_0, %c0_i32_1 : i32, i32, i32
  }
  func.func @transform_7(%arg0: i32, %arg1: i32) -> (i32, i32, i32) {
    %c0_i32 = arith.constant 0 : i32
    %c0_i32_0 = arith.constant 0 : i32
    %c0_i32_1 = arith.constant 0 : i32
    %c0_i32_2 = arith.constant 0 : i32
    return %c0_i32, %c0_i32_0, %c0_i32_1 : i32, i32, i32
  }
  func.func @transform_8(%arg0: i32, %arg1: i32) -> (i32, i32, i32) {
    %c0_i32 = arith.constant 0 : i32
    %c0_i32_0 = arith.constant 0 : i32
    %c0_i32_1 = arith.constant 0 : i32
    %c0_i32_2 = arith.constant 0 : i32
    return %c0_i32, %c0_i32_0, %c0_i32_1 : i32, i32, i32
  }
  func.func @transform_9(%arg0: i32, %arg1: i32) -> (i32, i32) {
    %c0_i32 = arith.constant 0 : i32
    %c0_i32_0 = arith.constant 0 : i32
    %c0_i32_1 = arith.constant 0 : i32
    return %c0_i32, %c0_i32_0 : i32, i32
  }
  func.func @transform_10(%arg0: i32, %arg1: i32) -> (i32, i32, i32) {
    %c0_i32 = arith.constant 0 : i32
    %c0_i32_0 = arith.constant 0 : i32
    return %arg0, %arg1, %c0_i32 : i32, i32, i32
  }
}

</mosaic_0001>

<llo_original>
// kernel: tpu_custom_call.1
$region0: #{tpu_custom_call.1}
  #allocation0 [shape = 'u32[]', space=smem, size = 0x4, offset = 0x4, fixed_abs, tag = 'smem constant byte address 0x4 - core index']
  #allocation1 [shape = 'u32[72,128]{1,0:T(1,128)}', space=vmem, size = 0x9000, scoped, tag = 'internal scratch']
  #allocation2 [shape = 'f32[4,8,8]{2,1,0:T(8,128)}', space=vmem, size = 0x4000, scoped, tag = 'scratch operand']
  #allocation3 [shape = 'f32[4,8,8]{2,1,0:T(8,128)}', space=vmem, size = 0x4000, scoped, tag = 'scratch operand']
  %s0 = inlined_call_operand.vmem [shape: f32[2,8,32], index: 0, kind: input, shape index: {}]
  %s1 = inlined_call_operand.vmem [shape: f32[2,8,32], index: 1, kind: input, shape index: {}]
  %s2 = inlined_call_operand.vmem [shape: f32[4,32,8], index: 2, kind: input, shape index: {}]
  %s3 = inlined_call_operand.vmem [shape: f32[4,1,8], index: 3, kind: input, shape index: {}]
  %s4 = inlined_call_operand.vmem [shape: f32[4,32,8], index: 4, kind: input, shape index: {}]
  %s5 = inlined_call_operand.vmem [shape: f32[4,1,8], index: 5, kind: input, shape index: {}]
  %s6 = inlined_call_operand.vmem [shape: f32[4,32,8], index: 6, kind: input, shape index: {}]
  %s7 = inlined_call_operand.vmem [shape: f32[4,1,8], index: 7, kind: input, shape index: {}]
  %s8 = inlined_call_operand.vmem [shape: f32[4,8,32], index: 8, kind: input, shape index: {}]
  %s9 = inlined_call_operand.vmem [shape: f32[1,32], index: 9, kind: input, shape index: {}]
  %s10 = inlined_call_operand.hbm [shape: f32[2,8,32], index: 10, kind: output, shape index: {}]
  %s11 = sld [smem:[#allocation0]]
  $region77: #{tpu_custom_call.1} parent=0
    _
  %s13 = ssub.s32 1, %s11
  %s14 = scalar_select 0, %s13, %s11
  $region1: #{tpu_custom_call.1} parent=0
    #allocation4 [shape = 'u8[8192]{0}', space=vmem, size = 0x2000, scoped, tag = 'output window, operand 0']
    #allocation5 [shape = 's32[2]{0}', space=sflag, size = 0x8, scoped, tag = 'scoped memory for tpu_custom_call.1']
    %15 = vsyncpa [#allocation5], 0
    %s16 = scalar_lea.sflag [#allocation5], 1
    %17 = vsyncpa %s16, 0
    loop: start=0, step=1, limit=4
    $region2: #{tpu_custom_call.1} parent=1 // loop_pre_header
      _
    $region3: #{tpu_custom_call.1} parent=1 // loop_header
      %s19 = sphi 0, %s23
      %p20 = scmp.ge.s32.totalorder %s19, 4
      %s26 = sphi 0, %s38
      %s27 = sphi 0, %s34
      %s28 = sphi 0, %s26
      %s29 = sphi 0, %s27
      %s30 = sphi 0, %s28
      %s31 = sphi 0, %s29
      %s41 = sphi 0, %s43
      %s44 = sphi 0, %s41
      %s45 = sphi 0, %s44
      %s61 = sphi 0, %s45
      %s69 = sphi 0, %s71
      %s72 = sphi 0, %s69
      %s73 = sphi 0, %s72
      %s89 = sphi 0, %s73
      %s93 = sphi 0, %s93
      %s95 = sphi 0, %s93
      %s96 = sphi 0, %s95
      %s110 = sphi 0, %s96
      %s114 = sphi 0, %s114
      %s116 = sphi 0, %s114
      %s117 = sphi 0, %s116
      %s131 = sphi 0, %s117
      %s135 = sphi 0, %s135
      %s137 = sphi 0, %s135
      %s138 = sphi 0, %s137
      %s152 = sphi 0, %s138
      %s156 = sphi 0, %s156
      %s158 = sphi 0, %s156
      %s159 = sphi 0, %s158
      %s173 = sphi 0, %s159
      %s177 = sphi 0, %s177
      %s179 = sphi 0, %s177
      %s180 = sphi 0, %s179
      %s194 = sphi 0, %s180
      %s198 = sphi 0, %s198
      %s200 = sphi 0, %s198
      %s201 = sphi 0, %s200
      %s215 = sphi 0, %s201
      %s219 = sphi 0, %s219
      %s221 = sphi 0, %s219
      %s222 = sphi 0, %s221
      %s236 = sphi 0, %s222
      %s240 = sphi 0, %s240
      %s242 = sphi 0, %s240
      %s243 = sphi 0, %s242
      %s257 = sphi 0, %s243
      %s265 = sphi 0, %s267
      %s268 = sphi 0, %s265
      %s269 = sphi 0, %s268
      %s285 = sphi 0, %s269
    $region4: #{tpu_custom_call.1} parent=1 // loop_header_branch
      %22 = sbr.rel (%p20) target = $region8
    $region5: #{tpu_custom_call.1} parent=1 // loop_body
      %s24 = ssub.s32 %s19, 1
      %s25 = ssub.s32 %s19, 2
      %s32 = sadd.s32 1, %s27
      %p33 = scmp.ge.s32.totalorder %s32, 1
      %s34 = scalar_select %p33, 0, %s32
      %s35 = sadd.s32 1, %s26
      %s36 = scalar_select %p33, %s35, %s26
      %p37 = scmp.ge.s32.totalorder %s36, 2
      %s38 = scalar_select %p37, 0, %s36
      %s39 = ssub.s32 %s26, %s38
      %p40 = scmp.eq.s32.totalorder %s39, 0
      %s42 = sadd.s32 %s41, 1
      %s43 = scalar_select %p40, %s41, %s42
      %p46 = pneg %p40
      %p47 = scmp.eq.s32.totalorder %s19, 1
      %p48 = por %p46, %p47
      %p49 = scmp.ne.s32.totalorder %s41, %s44
      %p50 = scmp.eq.s32.totalorder %s19, 0
      %p51 = por %p49, %p50
      %p52 = scmp.ne.s32.totalorder %s41, %s44
      %p53 = scmp.eq.s32.totalorder %s24, 1
      %p54 = por %p52, %p53
      %p55 = scmp.ne.s32.totalorder %s44, %s45
      %p56 = scmp.eq.s32.totalorder %s24, 0
      %p57 = por %p55, %p56
      %p58 = scmp.ne.s32.totalorder %s44, %s45
      %p59 = scmp.eq.s32.totalorder %s25, 1
      %p60 = por %p58, %p59
      %p62 = scmp.ne.s32.totalorder %s45, %s61
      %p63 = scmp.eq.s32.totalorder %s25, 0
      %p64 = por %p62, %p63
      %s65 = ssub.s32 %s26, %s38
      %s66 = ssub.s32 %s27, %s34
      %s67 = sor.u32 %s65, %s66
      %p68 = scmp.eq.s32.totalorder %s67, 0
      %s70 = sadd.s32 %s69, 1
      %s71 = scalar_select %p68, %s69, %s70
      %p74 = pneg %p68
      %p75 = scmp.eq.s32.totalorder %s19, 1
      %p76 = por %p74, %p75
      %p77 = scmp.ne.s32.totalorder %s69, %s72
      %p78 = scmp.eq.s32.totalorder %s19, 0
      %p79 = por %p77, %p78
      %p80 = scmp.ne.s32.totalorder %s69, %s72
      %p81 = scmp.eq.s32.totalorder %s24, 1
      %p82 = por %p80, %p81
      %p83 = scmp.ne.s32.totalorder %s72, %s73
      %p84 = scmp.eq.s32.totalorder %s24, 0
      %p85 = por %p83, %p84
      %p86 = scmp.ne.s32.totalorder %s72, %s73
      %p87 = scmp.eq.s32.totalorder %s25, 1
      %p88 = por %p86, %p87
      %p90 = scmp.ne.s32.totalorder %s73, %s89
      %p91 = scmp.eq.s32.totalorder %s25, 0
      %p92 = por %p90, %p91
      %s94 = sadd.s32 %s93, 1
      %p97 = scmp.eq.s32.totalorder %s19, 1
      %p98 = scmp.ne.s32.totalorder %s93, %s95
      %p99 = scmp.eq.s32.totalorder %s19, 0
      %p100 = por %p98, %p99
      %p101 = scmp.ne.s32.totalorder %s93, %s95
      %p102 = scmp.eq.s32.totalorder %s24, 1
      %p103 = por %p101, %p102
      %p104 = scmp.ne.s32.totalorder %s95, %s96
      %p105 = scmp.eq.s32.totalorder %s24, 0
      %p106 = por %p104, %p105
      %p107 = scmp.ne.s32.totalorder %s95, %s96
      %p108 = scmp.eq.s32.totalorder %s25, 1
      %p109 = por %p107, %p108
      %p111 = scmp.ne.s32.totalorder %s96, %s110
      %p112 = scmp.eq.s32.totalorder %s25, 0
      %p113 = por %p111, %p112
      %s115 = sadd.s32 %s114, 1
      %p118 = scmp.eq.s32.totalorder %s19, 1
      %p119 = scmp.ne.s32.totalorder %s114, %s116
      %p120 = scmp.eq.s32.totalorder %s19, 0
      %p121 = por %p119, %p120
      %p122 = scmp.ne.s32.totalorder %s114, %s116
      %p123 = scmp.eq.s32.totalorder %s24, 1
      %p124 = por %p122, %p123
      %p125 = scmp.ne.s32.totalorder %s116, %s117
      %p126 = scmp.eq.s32.totalorder %s24, 0
      %p127 = por %p125, %p126
      %p128 = scmp.ne.s32.totalorder %s116, %s117
      %p129 = scmp.eq.s32.totalorder %s25, 1
      %p130 = por %p128, %p129
      %p132 = scmp.ne.s32.totalorder %s117, %s131
      %p133 = scmp.eq.s32.totalorder %s25, 0
      %p134 = por %p132, %p133
      %s136 = sadd.s32 %s135, 1
      %p139 = scmp.eq.s32.totalorder %s19, 1
      %p140 = scmp.ne.s32.totalorder %s135, %s137
      %p141 = scmp.eq.s32.totalorder %s19, 0
      %p142 = por %p140, %p141
      %p143 = scmp.ne.s32.totalorder %s135, %s137
      %p144 = scmp.eq.s32.totalorder %s24, 1
      %p145 = por %p143, %p144
      %p146 = scmp.ne.s32.totalorder %s137, %s138
      %p147 = scmp.eq.s32.totalorder %s24, 0
      %p148 = por %p146, %p147
      %p149 = scmp.ne.s32.totalorder %s137, %s138
      %p150 = scmp.eq.s32.totalorder %s25, 1
      %p151 = por %p149, %p150
      %p153 = scmp.ne.s32.totalorder %s138, %s152
      %p154 = scmp.eq.s32.totalorder %s25, 0
      %p155 = por %p153, %p154
      %s157 = sadd.s32 %s156, 1
      %p160 = scmp.eq.s32.totalorder %s19, 1
      %p161 = scmp.ne.s32.totalorder %s156, %s158
      %p162 = scmp.eq.s32.totalorder %s19, 0
      %p163 = por %p161, %p162
      %p164 = scmp.ne.s32.totalorder %s156, %s158
      %p165 = scmp.eq.s32.totalorder %s24, 1
      %p166 = por %p164, %p165
      %p167 = scmp.ne.s32.totalorder %s158, %s159
      %p168 = scmp.eq.s32.totalorder %s24, 0
      %p169 = por %p167, %p168
      %p170 = scmp.ne.s32.totalorder %s158, %s159
      %p171 = scmp.eq.s32.totalorder %s25, 1
      %p172 = por %p170, %p171
      %p174 = scmp.ne.s32.totalorder %s159, %s173
      %p175 = scmp.eq.s32.totalorder %s25, 0
      %p176 = por %p174, %p175
      %s178 = sadd.s32 %s177, 1
      %p181 = scmp.eq.s32.totalorder %s19, 1
      %p182 = scmp.ne.s32.totalorder %s177, %s179
      %p183 = scmp.eq.s32.totalorder %s19, 0
      %p184 = por %p182, %p183
      %p185 = scmp.ne.s32.totalorder %s177, %s179
      %p186 = scmp.eq.s32.totalorder %s24, 1
      %p187 = por %p185, %p186
      %p188 = scmp.ne.s32.totalorder %s179, %s180
      %p189 = scmp.eq.s32.totalorder %s24, 0
      %p190 = por %p188, %p189
      %p191 = scmp.ne.s32.totalorder %s179, %s180
      %p192 = scmp.eq.s32.totalorder %s25, 1
      %p193 = por %p191, %p192
      %p195 = scmp.ne.s32.totalorder %s180, %s194
      %p196 = scmp.eq.s32.totalorder %s25, 0
      %p197 = por %p195, %p196
      %s199 = sadd.s32 %s198, 1
      %p202 = scmp.eq.s32.totalorder %s19, 1
      %p203 = scmp.ne.s32.totalorder %s198, %s200
      %p204 = scmp.eq.s32.totalorder %s19, 0
      %p205 = por %p203, %p204
      %p206 = scmp.ne.s32.totalorder %s198, %s200
      %p207 = scmp.eq.s32.totalorder %s24, 1
      %p208 = por %p206, %p207
      %p209 = scmp.ne.s32.totalorder %s200, %s201
      %p210 = scmp.eq.s32.totalorder %s24, 0
      %p211 = por %p209, %p210
      %p212 = scmp.ne.s32.totalorder %s200, %s201
      %p213 = scmp.eq.s32.totalorder %s25, 1
      %p214 = por %p212, %p213
      %p216 = scmp.ne.s32.totalorder %s201, %s215
      %p217 = scmp.eq.s32.totalorder %s25, 0
      %p218 = por %p216, %p217
      %s220 = sadd.s32 %s219, 1
      %p223 = scmp.eq.s32.totalorder %s19, 1
      %p224 = scmp.ne.s32.totalorder %s219, %s221
      %p225 = scmp.eq.s32.totalorder %s19, 0
      %p226 = por %p224, %p225
      %p227 = scmp.ne.s32.totalorder %s219, %s221
      %p228 = scmp.eq.s32.totalorder %s24, 1
      %p229 = por %p227, %p228
      %p230 = scmp.ne.s32.totalorder %s221, %s222
      %p231 = scmp.eq.s32.totalorder %s24, 0
      %p232 = por %p230, %p231
      %p233 = scmp.ne.s32.totalorder %s221, %s222
      %p234 = scmp.eq.s32.totalorder %s25, 1
      %p235 = por %p233, %p234
      %p237 = scmp.ne.s32.totalorder %s222, %s236
      %p238 = scmp.eq.s32.totalorder %s25, 0
      %p239 = por %p237, %p238
      %s241 = sadd.s32 %s240, 1
      %p244 = scmp.eq.s32.totalorder %s19, 1
      %p245 = scmp.ne.s32.totalorder %s240, %s242
      %p246 = scmp.eq.s32.totalorder %s19, 0
      %p247 = por %p245, %p246
      %p248 = scmp.ne.s32.totalorder %s240, %s242
      %p249 = scmp.eq.s32.totalorder %s24, 1
      %p250 = por %p248, %p249
      %p251 = scmp.ne.s32.totalorder %s242, %s243
      %p252 = scmp.eq.s32.totalorder %s24, 0
      %p253 = por %p251, %p252
      %p254 = scmp.ne.s32.totalorder %s242, %s243
      %p255 = scmp.eq.s32.totalorder %s25, 1
      %p256 = por %p254, %p255
      %p258 = scmp.ne.s32.totalorder %s243, %s257
      %p259 = scmp.eq.s32.totalorder %s25, 0
      %p260 = por %p258, %p259
      %s261 = ssub.s32 %s26, %s38
      %s262 = ssub.s32 %s27, %s34
      %s263 = sor.u32 %s261, %s262
      %p264 = scmp.eq.s32.totalorder %s263, 0
      %s266 = sadd.s32 %s265, 1
      %s267 = scalar_select %p264, %s265, %s266
      %p270 = pneg %p264
      %p271 = scmp.eq.s32.totalorder %s19, 1
      %p272 = por %p270, %p271
      %p273 = scmp.ne.s32.totalorder %s265, %s268
      %p274 = scmp.eq.s32.totalorder %s19, 0
      %p275 = por %p273, %p274
      %p276 = scmp.ne.s32.totalorder %s265, %s268
      %p277 = scmp.eq.s32.totalorder %s24, 1
      %p278 = por %p276, %p277
      %p279 = scmp.ne.s32.totalorder %s268, %s269
      %p280 = scmp.eq.s32.totalorder %s24, 0
      %p281 = por %p279, %p280
      %p282 = scmp.ne.s32.totalorder %s268, %s269
      %p283 = scmp.eq.s32.totalorder %s25, 1
      %p284 = por %p282, %p283
      %p286 = scmp.ne.s32.totalorder %s269, %s285
      %p287 = scmp.eq.s32.totalorder %s25, 0
      %p288 = por %p286, %p287
      %p289 = scmp.le.s32.totalorder 1, %s19
      %p290 = scmp.lt.s32.totalorder %s19, 3
      %p291 = pnand %p289, %p290
      %p292 = pneg %p291
      // Predicated region
      $region9: #{tpu_custom_call.1} parent=5 // pred_check
        _
      $region10: #{tpu_custom_call.1} parent=5 // pred_check_branch
        %294 = sbr.rel (%p291) target = $region12
      $region11: #{tpu_custom_call.1} parent=5 // pred_region
        %s295 = ssub.s32 %s19, 1
        // Predicated region
        $region13: #{tpu_custom_call.1} parent=11 // pred_check
          %p296 = pneg %p106
        $region14: #{tpu_custom_call.1} parent=11 // pred_check_branch
          %298 = sbr.rel (%p296) target = $region16
        $region15: #{tpu_custom_call.1} parent=11 // pred_region
          _
        $region16: #{tpu_custom_call.1} parent=11 // pred_fallthru
          _
        // Predicated region
        $region17: #{tpu_custom_call.1} parent=11 // pred_check
          %p299 = pneg %p127
        $region18: #{tpu_custom_call.1} parent=11 // pred_check_branch
          %301 = sbr.rel (%p299) target = $region20
        $region19: #{tpu_custom_call.1} parent=11 // pred_region
          _
        $region20: #{tpu_custom_call.1} parent=11 // pred_fallthru
          _
        // Predicated region
        $region21: #{tpu_custom_call.1} parent=11 // pred_check
          %p302 = pneg %p148
        $region22: #{tpu_custom_call.1} parent=11 // pred_check_branch
          %304 = sbr.rel (%p302) target = $region24
        $region23: #{tpu_custom_call.1} parent=11 // pred_region
          _
        $region24: #{tpu_custom_call.1} parent=11 // pred_fallthru
          _
        // Predicated region
        $region25: #{tpu_custom_call.1} parent=11 // pred_check
          %p305 = pneg %p169
        $region26: #{tpu_custom_call.1} parent=11 // pred_check_branch
          %307 = sbr.rel (%p305) target = $region28
        $region27: #{tpu_custom_call.1} parent=11 // pred_region
          _
        $region28: #{tpu_custom_call.1} parent=11 // pred_fallthru
          _
        // Predicated region
        $region29: #{tpu_custom_call.1} parent=11 // pred_check
          %p308 = pneg %p190
        $region30: #{tpu_custom_call.1} parent=11 // pred_check_branch
          %310 = sbr.rel (%p308) target = $region32
        $region31: #{tpu_custom_call.1} parent=11 // pred_region
          _
        $region32: #{tpu_custom_call.1} parent=11 // pred_fallthru
          _
        // Predicated region
        $region33: #{tpu_custom_call.1} parent=11 // pred_check
          %p311 = pneg %p211
        $region34: #{tpu_custom_call.1} parent=11 // pred_check_branch
          %313 = sbr.rel (%p311) target = $region36
        $region35: #{tpu_custom_call.1} parent=11 // pred_region
          _
        $region36: #{tpu_custom_call.1} parent=11 // pred_fallthru
          _
        // Predicated region
        $region37: #{tpu_custom_call.1} parent=11 // pred_check
          %p314 = pneg %p232
        $region38: #{tpu_custom_call.1} parent=11 // pred_check_branch
          %316 = sbr.rel (%p314) target = $region40
        $region39: #{tpu_custom_call.1} parent=11 // pred_region
          _
        $region40: #{tpu_custom_call.1} parent=11 // pred_fallthru
          _
        // Predicated region
        $region41: #{tpu_custom_call.1} parent=11 // pred_check
          %p317 = pneg %p253
        $region42: #{tpu_custom_call.1} parent=11 // pred_check_branch
          %319 = sbr.rel (%p317) target = $region44
        $region43: #{tpu_custom_call.1} parent=11 // pred_region
          _
        $region44: #{tpu_custom_call.1} parent=11 // pred_fallthru
          _
      $region12: #{tpu_custom_call.1} parent=5 // pred_fallthru
        _
      %p320 = scmp.lt.s32.totalorder %s19, 2
      // Predicated region
      $region45: #{tpu_custom_call.1} parent=5 // pred_check
        %p321 = pneg %p320
      $region46: #{tpu_custom_call.1} parent=5 // pred_check_branch
        %323 = sbr.rel (%p321) target = $region48
      $region47: #{tpu_custom_call.1} parent=5 // pred_region
        // Predicated region
        $region49: #{tpu_custom_call.1} parent=47 // pred_check
          %p324 = pneg %p51
        $region50: #{tpu_custom_call.1} parent=47 // pred_check_branch
          %326 = sbr.rel (%p324) target = $region52
        $region51: #{tpu_custom_call.1} parent=47 // pred_region
          %p327 = scmp.lt.s32.totalorder %s26, 1
          %s328 = scalar_select %p327, %s26, 1
          %s329 = smul.addr %s328, 8
          %s330 = scalar_lea.vmem %s0, %s329
        $region52: #{tpu_custom_call.1} parent=47 // pred_fallthru
          _
        // Predicated region
        $region53: #{tpu_custom_call.1} parent=47 // pred_check
          %p331 = pneg %p79
        $region54: #{tpu_custom_call.1} parent=47 // pred_check_branch
          %333 = sbr.rel (%p331) target = $region56
        $region55: #{tpu_custom_call.1} parent=47 // pred_region
          %p334 = scmp.lt.s32.totalorder %s26, 1
          %s335 = scalar_select %p334, %s26, 1
          %p336 = scmp.lt.s32.totalorder %s27, 0
          %s337 = scalar_select %p336, %s27, 0
          %s338 = sadd.s32 %s337, %s335
          %s339 = smul.addr %s338, 8
          %s340 = scalar_lea.vmem %s1, %s339
        $region56: #{tpu_custom_call.1} parent=47 // pred_fallthru
          _
      $region48: #{tpu_custom_call.1} parent=5 // pred_fallthru
        _
      %p341 = scmp.le.s32.totalorder 1, %s19
      %p342 = scmp.lt.s32.totalorder %s19, 3
      %p343 = pnand %p341, %p342
      %p344 = pneg %p343
      // Predicated region
      $region57: #{tpu_custom_call.1} parent=5 // pred_check
        _
      $region58: #{tpu_custom_call.1} parent=5 // pred_check_branch
        %346 = sbr.rel (%p343) target = $region60
      $region59: #{tpu_custom_call.1} parent=5 // pred_region
        %s347 = ssub.s32 %s19, 1
        %p348 = scmp.lt.s32.totalorder %s28, 1
        %s349 = scalar_select %p348, %s28, 1
        %s350 = smul.addr %s349, 8
        %s351 = scalar_lea.vmem %s0, %s350
        %p352 = pneg %p57
        %p353 = pneg %p54
        %p354 = scmp.lt.s32.totalorder %s28, 1
        %s355 = scalar_select %p354, %s28, 1
        %p356 = scmp.lt.s32.totalorder %s29, 0
        %s357 = scalar_select %p356, %s29, 0
        %s358 = sadd.s32 %s357, %s355
        %s359 = smul.addr %s358, 8
        %s360 = scalar_lea.vmem %s1, %s359
        %p361 = pneg %p85
        %p362 = pneg %p82
        %p363 = pneg %p106
        %p364 = pneg %p103
        %p365 = pneg %p127
        %p366 = pneg %p124
        %p367 = pneg %p148
        %p368 = pneg %p145
        %p369 = pneg %p169
        %p370 = pneg %p166
        %p371 = pneg %p190
        %p372 = pneg %p187
        %p373 = pneg %p211
        %p374 = pneg %p208
        %p375 = pneg %p232
        %p376 = pneg %p229
        %p377 = pneg %p253
        %p378 = pneg %p250
        %p379 = pneg %p281
        %p380 = pneg %p278
        %s381 = sand.u32 %s268, 1
        %s382 = scalar_lea.sflag [#allocation5], %s381
        %s383 = sand.u32 %s268, 1
        %s384 = smul.addr %s383, 8
        %s385 = scalar_lea.vmem [#allocation4], %s384
        %p386 = scmp.lt.s32.totalorder %s28, 1
        %s387 = scalar_select %p386, %s28, 1
        %s388 = smul.addr %s387, 8
        %s389 = scalar_lea.vmem %s0, %s388
        %p390 = scmp.lt.s32.totalorder %s28, 1
        %s391 = scalar_select %p390, %s28, 1
        %p392 = scmp.lt.s32.totalorder %s29, 0
        %s393 = scalar_select %p392, %s29, 0
        %s394 = sadd.s32 %s393, %s391
        %s395 = smul.addr %s394, 8
        %s396 = scalar_lea.vmem %s1, %s395
        %p397 = scmp.eq.s32.totalorder %s29, 0
        // Predicated region
        $region61: #{tpu_custom_call.1} parent=59 // pred_check
          %p398 = pneg %p397
        $region62: #{tpu_custom_call.1} parent=59 // pred_check_branch
          %400 = sbr.rel (%p398) target = $region64
        $region63: #{tpu_custom_call.1} parent=59 // pred_region
          %v401 = vld [vmem:[%s389] sm:$0xff]
          %v402 = vld [vmem:[%s4] sm:$0xff]
          %v403 = vld [vmem:[%s4 + $0x8] sm:$0xff]
          %v404 = vld [vmem:[%s4 + $0x10] sm:$0xff]
          %v405 = vld [vmem:[%s4 + $0x18] sm:$0xff]
          %v406 = vld [vmem:[%s5] sm:$0x1]
          %v408 = vperm.slane %v406, 0
          %vm410 = vcmask 261120
          %v412 = vsel %vm410, %v401, 0
          %414 = vmatpush.msra.mxu0 0.0
          %415 = vmatpush.msra.mxu0 0.0
          %416 = vmatpush.msra.mxu0 0.0
          %417 = vmatpush.msra.mxu0 0.0
          %418 = vmatpush.msra.mxu0 0.0
          %419 = vmatpush.msra.mxu0 0.0
          %420 = vmatpush.msra.mxu0 0.0
          %421 = vmatpush.msra.mxu0 0.0
          %422 = vmatpush.msra.mxu0 0.0
          %423 = vmatpush.msra.mxu0 0.0
          %424 = vmatpush.msra.mxu0 0.0
          %425 = vmatpush.msra.mxu0 0.0
          %426 = vmatpush.msra.mxu0 %v405
          %427 = vmatpush.msra.mxu0 %v404
          %428 = vmatpush.msra.mxu0 %v403
          %429 = vmatpush.msra.mxu0 %v402
          %430 = vmatmul.f32.gmra.mxu0 %v412
          %v431 = vpop.f32.mrf.mxu0
          %v432 = vadd.f32 %v408, %v431
          %433 = vdwg.mxu0
          %vm434 = vcmask 64512
          %435 = vst.msk [vmem:[#allocation2] sm:$0xff] %vm434, %v432
          %v436 = vld [vmem:[%s6] sm:$0xff]
          %v437 = vld [vmem:[%s6 + $0x8] sm:$0xff]
          %v438 = vld [vmem:[%s6 + $0x10] sm:$0xff]
          %v439 = vld [vmem:[%s6 + $0x18] sm:$0xff]
          %v440 = vld [vmem:[%s7] sm:$0x1]
          %v442 = vperm.slane %v440, 0
          %444 = vmatpush.msra.mxu0 0.0
          %445 = vmatpush.msra.mxu0 0.0
          %446 = vmatpush.msra.mxu0 0.0
          %447 = vmatpush.msra.mxu0 0.0
          %448 = vmatpush.msra.mxu0 0.0
          %449 = vmatpush.msra.mxu0 0.0
          %450 = vmatpush.msra.mxu0 0.0
          %451 = vmatpush.msra.mxu0 0.0
          %452 = vmatpush.msra.mxu0 0.0
          %453 = vmatpush.msra.mxu0 0.0
          %454 = vmatpush.msra.mxu0 0.0
          %455 = vmatpush.msra.mxu0 0.0
          %456 = vmatpush.msra.mxu0 %v439
          %457 = vmatpush.msra.mxu0 %v438
          %458 = vmatpush.msra.mxu0 %v437
          %459 = vmatpush.msra.mxu0 %v436
          %460 = vmatmul.f32.gmra.mxu0 %v412
          %v461 = vpop.f32.mrf.mxu0
          %v462 = vadd.f32 %v442, %v461
          %463 = vdwg.mxu0
          %464 = vst.msk [vmem:[#allocation3] sm:$0xff] %vm434, %v462
          %s465 = scalar_lea.vmem %s4, 32
          %v466 = vld [vmem:[%s465] sm:$0xff]
          %v467 = vld [vmem:[%s465 + $0x8] sm:$0xff]
          %v468 = vld [vmem:[%s465 + $0x10] sm:$0xff]
          %v469 = vld [vmem:[%s465 + $0x18] sm:$0xff]
          %s470 = scalar_lea.vmem %s5, 1
          %v471 = vld [vmem:[%s470] sm:$0x1]
          %v473 = vperm.slane %v471, 0
          %475 = vmatpush.msra.mxu0 0.0
          %476 = vmatpush.msra.mxu0 0.0
          %477 = vmatpush.msra.mxu0 0.0
          %478 = vmatpush.msra.mxu0 0.0
          %479 = vmatpush.msra.mxu0 0.0
          %480 = vmatpush.msra.mxu0 0.0
          %481 = vmatpush.msra.mxu0 0.0
          %482 = vmatpush.msra.mxu0 0.0
          %483 = vmatpush.msra.mxu0 0.0
          %484 = vmatpush.msra.mxu0 0.0
          %485 = vmatpush.msra.mxu0 0.0
          %486 = vmatpush.msra.mxu0 0.0
          %487 = vmatpush.msra.mxu0 %v469
          %488 = vmatpush.msra.mxu0 %v468
          %489 = vmatpush.msra.mxu0 %v467
          %490 = vmatpush.msra.mxu0 %v466
          %491 = vmatmul.f32.gmra.mxu0 %v412
          %v492 = vpop.f32.mrf.mxu0
          %v493 = vadd.f32 %v473, %v492
          %494 = vdwg.mxu0
          %s495 = scalar_lea.vmem [#allocation2], 8
          %496 = vst.msk [vmem:[%s495] sm:$0xff] %vm434, %v493
          %s497 = scalar_lea.vmem %s6, 32
          %v498 = vld [vmem:[%s497] sm:$0xff]
          %v499 = vld [vmem:[%s497 + $0x8] sm:$0xff]
          %v500 = vld [vmem:[%s497 + $0x10] sm:$0xff]
          %v501 = vld [vmem:[%s497 + $0x18] sm:$0xff]
          %s502 = scalar_lea.vmem %s7, 1
          %v503 = vld [vmem:[%s502] sm:$0x1]
          %v505 = vperm.slane %v503, 0
          %507 = vmatpush.msra.mxu0 0.0
          %508 = vmatpush.msra.mxu0 0.0
          %509 = vmatpush.msra.mxu0 0.0
          %510 = vmatpush.msra.mxu0 0.0
          %511 = vmatpush.msra.mxu0 0.0
          %512 = vmatpush.msra.mxu0 0.0
          %513 = vmatpush.msra.mxu0 0.0
          %514 = vmatpush.msra.mxu0 0.0
          %515 = vmatpush.msra.mxu0 0.0
          %516 = vmatpush.msra.mxu0 0.0
          %517 = vmatpush.msra.mxu0 0.0
          %518 = vmatpush.msra.mxu0 0.0
          %519 = vmatpush.msra.mxu0 %v501
          %520 = vmatpush.msra.mxu0 %v500
          %521 = vmatpush.msra.mxu0 %v499
          %522 = vmatpush.msra.mxu0 %v498
          %523 = vmatmul.f32.gmra.mxu0 %v412
          %v524 = vpop.f32.mrf.mxu0
          %v525 = vadd.f32 %v505, %v524
          %526 = vdwg.mxu0
          %s527 = scalar_lea.vmem [#allocation3], 8
          %528 = vst.msk [vmem:[%s527] sm:$0xff] %vm434, %v525
          %s529 = scalar_lea.vmem %s4, 64
          %v530 = vld [vmem:[%s529] sm:$0xff]
          %v531 = vld [vmem:[%s529 + $0x8] sm:$0xff]
          %v532 = vld [vmem:[%s529 + $0x10] sm:$0xff]
          %v533 = vld [vmem:[%s529 + $0x18] sm:$0xff]
          %s534 = scalar_lea.vmem %s5, 2
          %v535 = vld [vmem:[%s534] sm:$0x1]
          %v537 = vperm.slane %v535, 0
          %539 = vmatpush.msra.mxu0 0.0
          %540 = vmatpush.msra.mxu0 0.0
          %541 = vmatpush.msra.mxu0 0.0
          %542 = vmatpush.msra.mxu0 0.0
          %543 = vmatpush.msra.mxu0 0.0
          %544 = vmatpush.msra.mxu0 0.0
          %545 = vmatpush.msra.mxu0 0.0
          %546 = vmatpush.msra.mxu0 0.0
          %547 = vmatpush.msra.mxu0 0.0
          %548 = vmatpush.msra.mxu0 0.0
          %549 = vmatpush.msra.mxu0 0.0
          %550 = vmatpush.msra.mxu0 0.0
          %551 = vmatpush.msra.mxu0 %v533
          %552 = vmatpush.msra.mxu0 %v532
          %553 = vmatpush.msra.mxu0 %v531
          %554 = vmatpush.msra.mxu0 %v530
          %555 = vmatmul.f32.gmra.mxu0 %v412
          %v556 = vpop.f32.mrf.mxu0
          %v557 = vadd.f32 %v537, %v556
          %558 = vdwg.mxu0
          %s559 = scalar_lea.vmem [#allocation2], 16
          %560 = vst.msk [vmem:[%s559] sm:$0xff] %vm434, %v557
          %s561 = scalar_lea.vmem %s6, 64
          %v562 = vld [vmem:[%s561] sm:$0xff]
          %v563 = vld [vmem:[%s561 + $0x8] sm:$0xff]
          %v564 = vld [vmem:[%s561 + $0x10] sm:$0xff]
          %v565 = vld [vmem:[%s561 + $0x18] sm:$0xff]
          %s566 = scalar_lea.vmem %s7, 2
          %v567 = vld [vmem:[%s566] sm:$0x1]
          %v569 = vperm.slane %v567, 0
          %571 = vmatpush.msra.mxu0 0.0
          %572 = vmatpush.msra.mxu0 0.0
          %573 = vmatpush.msra.mxu0 0.0
          %574 = vmatpush.msra.mxu0 0.0
          %575 = vmatpush.msra.mxu0 0.0
          %576 = vmatpush.msra.mxu0 0.0
          %577 = vmatpush.msra.mxu0 0.0
          %578 = vmatpush.msra.mxu0 0.0
          %579 = vmatpush.msra.mxu0 0.0
          %580 = vmatpush.msra.mxu0 0.0
          %581 = vmatpush.msra.mxu0 0.0
          %582 = vmatpush.msra.mxu0 0.0
          %583 = vmatpush.msra.mxu0 %v565
          %584 = vmatpush.msra.mxu0 %v564
          %585 = vmatpush.msra.mxu0 %v563
          %586 = vmatpush.msra.mxu0 %v562
          %587 = vmatmul.f32.gmra.mxu0 %v412
          %v588 = vpop.f32.mrf.mxu0
          %v589 = vadd.f32 %v569, %v588
          %590 = vdwg.mxu0
          %s591 = scalar_lea.vmem [#allocation3], 16
          %592 = vst.msk [vmem:[%s591] sm:$0xff] %vm434, %v589
          %s593 = scalar_lea.vmem %s4, 96
          %v594 = vld [vmem:[%s593] sm:$0xff]
          %v595 = vld [vmem:[%s593 + $0x8] sm:$0xff]
          %v596 = vld [vmem:[%s593 + $0x10] sm:$0xff]
          %v597 = vld [vmem:[%s593 + $0x18] sm:$0xff]
          %s598 = scalar_lea.vmem %s5, 3
          %v599 = vld [vmem:[%s598] sm:$0x1]
          %v601 = vperm.slane %v599, 0
          %603 = vmatpush.msra.mxu0 0.0
          %604 = vmatpush.msra.mxu0 0.0
          %605 = vmatpush.msra.mxu0 0.0
          %606 = vmatpush.msra.mxu0 0.0
          %607 = vmatpush.msra.mxu0 0.0
          %608 = vmatpush.msra.mxu0 0.0
          %609 = vmatpush.msra.mxu0 0.0
          %610 = vmatpush.msra.mxu0 0.0
          %611 = vmatpush.msra.mxu0 0.0
          %612 = vmatpush.msra.mxu0 0.0
          %613 = vmatpush.msra.mxu0 0.0
          %614 = vmatpush.msra.mxu0 0.0
          %615 = vmatpush.msra.mxu0 %v597
          %616 = vmatpush.msra.mxu0 %v596
          %617 = vmatpush.msra.mxu0 %v595
          %618 = vmatpush.msra.mxu0 %v594
          %619 = vmatmul.f32.gmra.mxu0 %v412
          %v620 = vpop.f32.mrf.mxu0
          %v621 = vadd.f32 %v601, %v620
          %622 = vdwg.mxu0
          %s623 = scalar_lea.vmem [#allocation2], 24
          %624 = vst.msk [vmem:[%s623] sm:$0xff] %vm434, %v621
          %s625 = scalar_lea.vmem %s6, 96
          %v626 = vld [vmem:[%s625] sm:$0xff]
          %v627 = vld [vmem:[%s625 + $0x8] sm:$0xff]
          %v628 = vld [vmem:[%s625 + $0x10] sm:$0xff]
          %v629 = vld [vmem:[%s625 + $0x18] sm:$0xff]
          %s630 = scalar_lea.vmem %s7, 3
          %v631 = vld [vmem:[%s630] sm:$0x1]
          %v633 = vperm.slane %v631, 0
          %635 = vmatpush.msra.mxu0 0.0
          %636 = vmatpush.msra.mxu0 0.0
          %637 = vmatpush.msra.mxu0 0.0
          %638 = vmatpush.msra.mxu0 0.0
          %639 = vmatpush.msra.mxu0 0.0
          %640 = vmatpush.msra.mxu0 0.0
          %641 = vmatpush.msra.mxu0 0.0
          %642 = vmatpush.msra.mxu0 0.0
          %643 = vmatpush.msra.mxu0 0.0
          %644 = vmatpush.msra.mxu0 0.0
          %645 = vmatpush.msra.mxu0 0.0
          %646 = vmatpush.msra.mxu0 0.0
          %647 = vmatpush.msra.mxu0 %v629
          %648 = vmatpush.msra.mxu0 %v628
          %649 = vmatpush.msra.mxu0 %v627
          %650 = vmatpush.msra.mxu0 %v626
          %651 = vmatmul.f32.gmra.mxu0 %v412
          %v652 = vpop.f32.mrf.mxu0
          %v653 = vadd.f32 %v633, %v652
          %654 = vdwg.mxu0
          %s655 = scalar_lea.vmem [#allocation3], 24
          %656 = vst.msk [vmem:[%s655] sm:$0xff] %vm434, %v653
        $region64: #{tpu_custom_call.1} parent=59 // pred_fallthru
          _
        %v657 = vld [vmem:[%s396] sm:$0xff]
        %v658 = vld [vmem:[%s2] sm:$0xff]
        %v659 = vld [vmem:[%s2 + $0x8] sm:$0xff]
        %v660 = vld [vmem:[%s2 + $0x10] sm:$0xff]
        %v661 = vld [vmem:[%s2 + $0x18] sm:$0xff]
        %v662 = vld [vmem:[%s3] sm:$0x1]
        %v664 = vperm.slane %v662, 0
        %vm666 = vcmask 261120
        %v668 = vsel %vm666, %v657, 0
        %670 = vmatpush.msra.mxu0 0.0
        %671 = vmatpush.msra.mxu0 0.0
        %672 = vmatpush.msra.mxu0 0.0
        %673 = vmatpush.msra.mxu0 0.0
        %674 = vmatpush.msra.mxu0 0.0
        %675 = vmatpush.msra.mxu0 0.0
        %676 = vmatpush.msra.mxu0 0.0
        %677 = vmatpush.msra.mxu0 0.0
        %678 = vmatpush.msra.mxu0 0.0
        %679 = vmatpush.msra.mxu0 0.0
        %680 = vmatpush.msra.mxu0 0.0
        %681 = vmatpush.msra.mxu0 0.0
        %682 = vmatpush.msra.mxu0 %v661
        %683 = vmatpush.msra.mxu0 %v660
        %684 = vmatpush.msra.mxu0 %v659
        %685 = vmatpush.msra.mxu0 %v658
        %686 = vmatmul.f32.gmra.mxu0 %v668
        %v687 = vpop.f32.mrf.mxu0
        %v688 = vadd.f32 %v664, %v687
        %689 = vdwg.mxu0
        %v690 = vmul.f32 %v688, 0.35355338
        %v691 = vld [vmem:[#allocation2] sm:$0xff]
        %v692 = vld [vmem:[#allocation3] sm:$0xff]
        %vm693 = vcmask 64512
        %v695 = vsel %vm693, %v690, 0
        %v698 = vsel %vm693, %v691, 0
        %700 = vmatpush.xpose.msra.mxu0 0.0
        %701 = vmatpush.xpose.msra.mxu0 0.0
        %702 = vmatpush.xpose.msra.mxu0 0.0
        %703 = vmatpush.xpose.msra.mxu0 0.0
        %704 = vmatpush.xpose.msra.mxu0 0.0
        %705 = vmatpush.xpose.msra.mxu0 0.0
        %706 = vmatpush.xpose.msra.mxu0 0.0
        %707 = vmatpush.xpose.msra.mxu0 0.0
        %708 = vmatpush.xpose.msra.mxu0 0.0
        %709 = vmatpush.xpose.msra.mxu0 0.0
        %710 = vmatpush.xpose.msra.mxu0 0.0
        %711 = vmatpush.xpose.msra.mxu0 0.0
        %712 = vmatpush.xpose.msra.mxu0 0.0
        %713 = vmatpush.xpose.msra.mxu0 0.0
        %714 = vmatpush.xpose.msra.mxu0 0.0
        %715 = vmatpush.xpose.msra.mxu0 %v698
        %716 = vmatmul.f32.gmra.mxu0 %v695
        %v717 = vpop.f32.mrf.mxu0
        %v718 = vadd.f32 0.0, %v717
        %719 = vdwg.mxu0
        %v720 = vsel %vm693, %v718, -inf
        %721 = vmax.xlane.f32.xlu0 %v720
        %v722 = vpop.xlane.xlu0 %721
        %v723 = vsub.f32 -inf, %v722
        %v724 = vmul.f32 %v723, 1.442695
        %v725 = vpow.pop %v724
        %v726 = vsub.f32 %v718, %v722
        %v727 = vmul.f32 %v726, 1.442695
        %v728 = vpow.pop %v727
        %v729 = vmul.f32 %v725, 0.0
        %v730 = vsel %vm693, %v728, 0.0
        %731 = vadd.xlane.f32.xlu0 %v730
        %v732 = vpop.xlane.xlu0 %731
        %v733 = vadd.f32 %v729, %v732
        %v735 = vsel %vm693, %v728, 0
        %737 = vmatpush.msra.mxu0 0.0
        %738 = vmatpush.msra.mxu0 0.0
        %739 = vmatpush.msra.mxu0 0.0
        %740 = vmatpush.msra.mxu0 0.0
        %741 = vmatpush.msra.mxu0 0.0
        %742 = vmatpush.msra.mxu0 0.0
        %743 = vmatpush.msra.mxu0 0.0
        %744 = vmatpush.msra.mxu0 0.0
        %745 = vmatpush.msra.mxu0 0.0
        %746 = vmatpush.msra.mxu0 0.0
        %747 = vmatpush.msra.mxu0 0.0
        %748 = vmatpush.msra.mxu0 0.0
        %749 = vmatpush.msra.mxu0 0.0
        %750 = vmatpush.msra.mxu0 0.0
        %751 = vmatpush.msra.mxu0 0.0
        %752 = vmatpush.msra.mxu0 %v692
        %753 = vmatmul.f32.gmra.mxu0 %v735
        %v754 = vpop.f32.mrf.mxu0
        %v755 = vadd.f32 0.0, %v754
        %756 = vdwg.mxu0
        %v757 = vadd.f32 %v729, %v755
        %v758 = vrcp.pop %v733
        %v759 = vmul.f32 %v733, %v758
        %v760 = vsub.f32 1.0, %v759
        %v761 = vmul.f32 %v758, %v760
        %v762 = vadd.f32 %v758, %v761
        %vm763 = vweird.f32 %v733
        %vm764 = vweird.f32 %v758
        %vm765 = vmor %vm763, %vm764
        %v766 = vsel %vm765, %v758, %v762
        %v767 = vand.u32 2147483647, %v733
        %vm768 = vcmp.eq.f32.partialorder %v767, 8.507059e+37
        %v769 = vand.u32 %v733, 2147483648
        %v770 = vor.u32 1.1754944e-38, %v769
        %v771 = vsel %vm768, %v770, %v766
        %v772 = vmul.f32 1.0, %v771
        %v773 = vmul.f32 %v757, %v772
        %v774 = vld [vmem:[%s8] sm:$0xff]
        %s775 = scalar_lea.vmem %s2, 32
        %v776 = vld [vmem:[%s775] sm:$0xff]
        %v777 = vld [vmem:[%s775 + $0x8] sm:$0xff]
        %v778 = vld [vmem:[%s775 + $0x10] sm:$0xff]
        %v779 = vld [vmem:[%s775 + $0x18] sm:$0xff]
        %s780 = scalar_lea.vmem %s3, 1
        %v781 = vld [vmem:[%s780] sm:$0x1]
        %v783 = vperm.slane %v781, 0
        %785 = vmatpush.msra.mxu0 0.0
        %786 = vmatpush.msra.mxu0 0.0
        %787 = vmatpush.msra.mxu0 0.0
        %788 = vmatpush.msra.mxu0 0.0
        %789 = vmatpush.msra.mxu0 0.0
        %790 = vmatpush.msra.mxu0 0.0
        %791 = vmatpush.msra.mxu0 0.0
        %792 = vmatpush.msra.mxu0 0.0
        %793 = vmatpush.msra.mxu0 0.0
        %794 = vmatpush.msra.mxu0 0.0
        %795 = vmatpush.msra.mxu0 0.0
        %796 = vmatpush.msra.mxu0 0.0
        %797 = vmatpush.msra.mxu0 %v779
        %798 = vmatpush.msra.mxu0 %v778
        %799 = vmatpush.msra.mxu0 %v777
        %800 = vmatpush.msra.mxu0 %v776
        %801 = vmatmul.f32.gmra.mxu0 %v668
        %v802 = vpop.f32.mrf.mxu0
        %v803 = vadd.f32 %v783, %v802
        %804 = vdwg.mxu0
        %v805 = vmul.f32 %v803, 0.35355338
        %s806 = scalar_lea.vmem [#allocation2], 8
        %v807 = vld [vmem:[%s806] sm:$0xff]
        %s808 = scalar_lea.vmem [#allocation3], 8
        %v809 = vld [vmem:[%s808] sm:$0xff]
        %v811 = vsel %vm693, %v805, 0
        %v814 = vsel %vm693, %v807, 0
        %816 = vmatpush.xpose.msra.mxu0 0.0
        %817 = vmatpush.xpose.msra.mxu0 0.0
        %818 = vmatpush.xpose.msra.mxu0 0.0
        %819 = vmatpush.xpose.msra.mxu0 0.0
        %820 = vmatpush.xpose.msra.mxu0 0.0
        %821 = vmatpush.xpose.msra.mxu0 0.0
        %822 = vmatpush.xpose.msra.mxu0 0.0
        %823 = vmatpush.xpose.msra.mxu0 0.0
        %824 = vmatpush.xpose.msra.mxu0 0.0
        %825 = vmatpush.xpose.msra.mxu0 0.0
        %826 = vmatpush.xpose.msra.mxu0 0.0
        %827 = vmatpush.xpose.msra.mxu0 0.0
        %828 = vmatpush.xpose.msra.mxu0 0.0
        %829 = vmatpush.xpose.msra.mxu0 0.0
        %830 = vmatpush.xpose.msra.mxu0 0.0
        %831 = vmatpush.xpose.msra.mxu0 %v814
        %832 = vmatmul.f32.gmra.mxu0 %v811
        %v833 = vpop.f32.mrf.mxu0
        %v834 = vadd.f32 0.0, %v833
        %835 = vdwg.mxu0
        %v836 = vsel %vm693, %v834, -inf
        %837 = vmax.xlane.f32.xlu0 %v836
        %v838 = vpop.xlane.xlu0 %837
        %v839 = vsub.f32 -inf, %v838
        %v840 = vmul.f32 %v839, 1.442695
        %v841 = vpow.pop %v840
        %v842 = vsub.f32 %v834, %v838
        %v843 = vmul.f32 %v842, 1.442695
        %v844 = vpow.pop %v843
        %v845 = vmul.f32 %v841, 0.0
        %v846 = vsel %vm693, %v844, 0.0
        %847 = vadd.xlane.f32.xlu0 %v846
        %v848 = vpop.xlane.xlu0 %847
        %v849 = vadd.f32 %v845, %v848
        %v851 = vsel %vm693, %v844, 0
        %853 = vmatpush.msra.mxu0 0.0
        %854 = vmatpush.msra.mxu0 0.0
        %855 = vmatpush.msra.mxu0 0.0
        %856 = vmatpush.msra.mxu0 0.0
        %857 = vmatpush.msra.mxu0 0.0
        %858 = vmatpush.msra.mxu0 0.0
        %859 = vmatpush.msra.mxu0 0.0
        %860 = vmatpush.msra.mxu0 0.0
        %861 = vmatpush.msra.mxu0 0.0
        %862 = vmatpush.msra.mxu0 0.0
        %863 = vmatpush.msra.mxu0 0.0
        %864 = vmatpush.msra.mxu0 0.0
        %865 = vmatpush.msra.mxu0 0.0
        %866 = vmatpush.msra.mxu0 0.0
        %867 = vmatpush.msra.mxu0 0.0
        %868 = vmatpush.msra.mxu0 %v809
        %869 = vmatmul.f32.gmra.mxu0 %v851
        %v870 = vpop.f32.mrf.mxu0
        %v871 = vadd.f32 0.0, %v870
        %872 = vdwg.mxu0
        %v873 = vadd.f32 %v845, %v871
        %v874 = vrcp.pop %v849
        %v875 = vmul.f32 %v849, %v874
        %v876 = vsub.f32 1.0, %v875
        %v877 = vmul.f32 %v874, %v876
        %v878 = vadd.f32 %v874, %v877
        %vm879 = vweird.f32 %v849
        %vm880 = vweird.f32 %v874
        %vm881 = vmor %vm879, %vm880
        %v882 = vsel %vm881, %v874, %v878
        %v883 = vand.u32 2147483647, %v849
        %vm884 = vcmp.eq.f32.partialorder %v883, 8.507059e+37
        %v885 = vand.u32 %v849, 2147483648
        %v886 = vor.u32 1.1754944e-38, %v885
        %v887 = vsel %vm884, %v886, %v882
        %v888 = vmul.f32 1.0, %v887
        %v889 = vmul.f32 %v873, %v888
        %s890 = scalar_lea.vmem %s8, 8
        %v891 = vld [vmem:[%s890] sm:$0xff]
        %v893 = vsel %vm693, %v889, 0
        %895 = vmatpush.msra.mxu0 0.0
        %896 = vmatpush.msra.mxu0 0.0
        %897 = vmatpush.msra.mxu0 0.0
        %898 = vmatpush.msra.mxu0 0.0
        %899 = vmatpush.msra.mxu0 0.0
        %900 = vmatpush.msra.mxu0 0.0
        %901 = vmatpush.msra.mxu0 0.0
        %902 = vmatpush.msra.mxu0 0.0
        %903 = vmatpush.msra.mxu0 0.0
        %904 = vmatpush.msra.mxu0 0.0
        %905 = vmatpush.msra.mxu0 0.0
        %906 = vmatpush.msra.mxu0 0.0
        %907 = vmatpush.msra.mxu0 0.0
        %908 = vmatpush.msra.mxu0 0.0
        %909 = vmatpush.msra.mxu0 0.0
        %910 = vmatpush.msra.mxu0 %v891
        %911 = vmatmul.f32.gmra.mxu0 %v893
        %v912 = vpop.f32.mrf.mxu0
        %v913 = vadd.f32 0.0, %v912
        %914 = vdwg.mxu0
        %v916 = vsel %vm693, %v773, 0
        %918 = vmatpush.msra.mxu0 0.0
        %919 = vmatpush.msra.mxu0 0.0
        %920 = vmatpush.msra.mxu0 0.0
        %921 = vmatpush.msra.mxu0 0.0
        %922 = vmatpush.msra.mxu0 0.0
        %923 = vmatpush.msra.mxu0 0.0
        %924 = vmatpush.msra.mxu0 0.0
        %925 = vmatpush.msra.mxu0 0.0
        %926 = vmatpush.msra.mxu0 0.0
        %927 = vmatpush.msra.mxu0 0.0
        %928 = vmatpush.msra.mxu0 0.0
        %929 = vmatpush.msra.mxu0 0.0
        %930 = vmatpush.msra.mxu0 0.0
        %931 = vmatpush.msra.mxu0 0.0
        %932 = vmatpush.msra.mxu0 0.0
        %933 = vmatpush.msra.mxu0 %v774
        %934 = vmatmul.f32.gmra.mxu0 %v916
        %v935 = vpop.f32.mrf.mxu0
        %v936 = vadd.f32 %v913, %v935
        %937 = vdwg.mxu0
        %s938 = scalar_lea.vmem %s2, 64
        %v939 = vld [vmem:[%s938] sm:$0xff]
        %v940 = vld [vmem:[%s938 + $0x8] sm:$0xff]
        %v941 = vld [vmem:[%s938 + $0x10] sm:$0xff]
        %v942 = vld [vmem:[%s938 + $0x18] sm:$0xff]
        %s943 = scalar_lea.vmem %s3, 2
        %v944 = vld [vmem:[%s943] sm:$0x1]
        %v946 = vperm.slane %v944, 0
        %948 = vmatpush.msra.mxu0 0.0
        %949 = vmatpush.msra.mxu0 0.0
        %950 = vmatpush.msra.mxu0 0.0
        %951 = vmatpush.msra.mxu0 0.0
        %952 = vmatpush.msra.mxu0 0.0
        %953 = vmatpush.msra.mxu0 0.0
        %954 = vmatpush.msra.mxu0 0.0
        %955 = vmatpush.msra.mxu0 0.0
        %956 = vmatpush.msra.mxu0 0.0
        %957 = vmatpush.msra.mxu0 0.0
        %958 = vmatpush.msra.mxu0 0.0
        %959 = vmatpush.msra.mxu0 0.0
        %960 = vmatpush.msra.mxu0 %v942
        %961 = vmatpush.msra.mxu0 %v941
        %962 = vmatpush.msra.mxu0 %v940
        %963 = vmatpush.msra.mxu0 %v939
        %964 = vmatmul.f32.gmra.mxu0 %v668
        %v965 = vpop.f32.mrf.mxu0
        %v966 = vadd.f32 %v946, %v965
        %967 = vdwg.mxu0
        %v968 = vmul.f32 %v966, 0.35355338
        %s969 = scalar_lea.vmem [#allocation2], 16
        %v970 = vld [vmem:[%s969] sm:$0xff]
        %s971 = scalar_lea.vmem [#allocation3], 16
        %v972 = vld [vmem:[%s971] sm:$0xff]
        %v974 = vsel %vm693, %v968, 0
        %v977 = vsel %vm693, %v970, 0
        %979 = vmatpush.xpose.msra.mxu0 0.0
        %980 = vmatpush.xpose.msra.mxu0 0.0
        %981 = vmatpush.xpose.msra.mxu0 0.0
        %982 = vmatpush.xpose.msra.mxu0 0.0
        %983 = vmatpush.xpose.msra.mxu0 0.0
        %984 = vmatpush.xpose.msra.mxu0 0.0
        %985 = vmatpush.xpose.msra.mxu0 0.0
        %986 = vmatpush.xpose.msra.mxu0 0.0
        %987 = vmatpush.xpose.msra.mxu0 0.0
        %988 = vmatpush.xpose.msra.mxu0 0.0
        %989 = vmatpush.xpose.msra.mxu0 0.0
        %990 = vmatpush.xpose.msra.mxu0 0.0
        %991 = vmatpush.xpose.msra.mxu0 0.0
        %992 = vmatpush.xpose.msra.mxu0 0.0
        %993 = vmatpush.xpose.msra.mxu0 0.0
        %994 = vmatpush.xpose.msra.mxu0 %v977
        %995 = vmatmul.f32.gmra.mxu0 %v974
        %v996 = vpop.f32.mrf.mxu0
        %v997 = vadd.f32 0.0, %v996
        %998 = vdwg.mxu0
        %v999 = vsel %vm693, %v997, -inf
        %1000 = vmax.xlane.f32.xlu0 %v999
        %v1001 = vpop.xlane.xlu0 %1000
        %v1002 = vsub.f32 -inf, %v1001
        %v1003 = vmul.f32 %v1002, 1.442695
        %v1004 = vpow.pop %v1003
        %v1005 = vsub.f32 %v997, %v1001
        %v1006 = vmul.f32 %v1005, 1.442695
        %v1007 = vpow.pop %v1006
        %v1008 = vmul.f32 %v1004, 0.0
        %v1009 = vsel %vm693, %v1007, 0.0
        %1010 = vadd.xlane.f32.xlu0 %v1009
        %v1011 = vpop.xlane.xlu0 %1010
        %v1012 = vadd.f32 %v1008, %v1011
        %v1014 = vsel %vm693, %v1007, 0
        %1016 = vmatpush.msra.mxu0 0.0
        %1017 = vmatpush.msra.mxu0 0.0
        %1018 = vmatpush.msra.mxu0 0.0
        %1019 = vmatpush.msra.mxu0 0.0
        %1020 = vmatpush.msra.mxu0 0.0
        %1021 = vmatpush.msra.mxu0 0.0
        %1022 = vmatpush.msra.mxu0 0.0
        %1023 = vmatpush.msra.mxu0 0.0
        %1024 = vmatpush.msra.mxu0 0.0
        %1025 = vmatpush.msra.mxu0 0.0
        %1026 = vmatpush.msra.mxu0 0.0
        %1027 = vmatpush.msra.mxu0 0.0
        %1028 = vmatpush.msra.mxu0 0.0
        %1029 = vmatpush.msra.mxu0 0.0
        %1030 = vmatpush.msra.mxu0 0.0
        %1031 = vmatpush.msra.mxu0 %v972
        %1032 = vmatmul.f32.gmra.mxu0 %v1014
        %v1033 = vpop.f32.mrf.mxu0
        %v1034 = vadd.f32 0.0, %v1033
        %1035 = vdwg.mxu0
        %v1036 = vadd.f32 %v1008, %v1034
        %v1037 = vrcp.pop %v1012
        %v1038 = vmul.f32 %v1012, %v1037
        %v1039 = vsub.f32 1.0, %v1038
        %v1040 = vmul.f32 %v1037, %v1039
        %v1041 = vadd.f32 %v1037, %v1040
        %vm1042 = vweird.f32 %v1012
        %vm1043 = vweird.f32 %v1037
        %vm1044 = vmor %vm1042, %vm1043
        %v1045 = vsel %vm1044, %v1037, %v1041
        %v1046 = vand.u32 2147483647, %v1012
        %vm1047 = vcmp.eq.f32.partialorder %v1046, 8.507059e+37
        %v1048 = vand.u32 %v1012, 2147483648
        %v1049 = vor.u32 1.1754944e-38, %v1048
        %v1050 = vsel %vm1047, %v1049, %v1045
        %v1051 = vmul.f32 1.0, %v1050
        %v1052 = vmul.f32 %v1036, %v1051
        %s1053 = scalar_lea.vmem %s8, 16
        %v1054 = vld [vmem:[%s1053] sm:$0xff]
        %v1056 = vsel %vm693, %v1052, 0
        %1058 = vmatpush.msra.mxu0 0.0
        %1059 = vmatpush.msra.mxu0 0.0
        %1060 = vmatpush.msra.mxu0 0.0
        %1061 = vmatpush.msra.mxu0 0.0
        %1062 = vmatpush.msra.mxu0 0.0
        %1063 = vmatpush.msra.mxu0 0.0
        %1064 = vmatpush.msra.mxu0 0.0
        %1065 = vmatpush.msra.mxu0 0.0
        %1066 = vmatpush.msra.mxu0 0.0
        %1067 = vmatpush.msra.mxu0 0.0
        %1068 = vmatpush.msra.mxu0 0.0
        %1069 = vmatpush.msra.mxu0 0.0
        %1070 = vmatpush.msra.mxu0 0.0
        %1071 = vmatpush.msra.mxu0 0.0
        %1072 = vmatpush.msra.mxu0 0.0
        %1073 = vmatpush.msra.mxu0 %v1054
        %1074 = vmatmul.f32.gmra.mxu0 %v1056
        %v1075 = vpop.f32.mrf.mxu0
        %v1076 = vadd.f32 0.0, %v1075
        %1077 = vdwg.mxu0
        %v1078 = vadd.f32 %v936, %v1076
        %s1079 = scalar_lea.vmem %s2, 96
        %v1080 = vld [vmem:[%s1079] sm:$0xff]
        %v1081 = vld [vmem:[%s1079 + $0x8] sm:$0xff]
        %v1082 = vld [vmem:[%s1079 + $0x10] sm:$0xff]
        %v1083 = vld [vmem:[%s1079 + $0x18] sm:$0xff]
        %s1084 = scalar_lea.vmem %s3, 3
        %v1085 = vld [vmem:[%s1084] sm:$0x1]
        %v1087 = vperm.slane %v1085, 0
        %1089 = vmatpush.msra.mxu0 0.0
        %1090 = vmatpush.msra.mxu0 0.0
        %1091 = vmatpush.msra.mxu0 0.0
        %1092 = vmatpush.msra.mxu0 0.0
        %1093 = vmatpush.msra.mxu0 0.0
        %1094 = vmatpush.msra.mxu0 0.0
        %1095 = vmatpush.msra.mxu0 0.0
        %1096 = vmatpush.msra.mxu0 0.0
        %1097 = vmatpush.msra.mxu0 0.0
        %1098 = vmatpush.msra.mxu0 0.0
        %1099 = vmatpush.msra.mxu0 0.0
        %1100 = vmatpush.msra.mxu0 0.0
        %1101 = vmatpush.msra.mxu0 %v1083
        %1102 = vmatpush.msra.mxu0 %v1082
        %1103 = vmatpush.msra.mxu0 %v1081
        %1104 = vmatpush.msra.mxu0 %v1080
        %1105 = vmatmul.f32.gmra.mxu0 %v668
        %v1106 = vpop.f32.mrf.mxu0
        %v1107 = vadd.f32 %v1087, %v1106
        %1108 = vdwg.mxu0
        %v1109 = vmul.f32 %v1107, 0.35355338
        %s1110 = scalar_lea.vmem [#allocation2], 24
        %v1111 = vld [vmem:[%s1110] sm:$0xff]
        %s1112 = scalar_lea.vmem [#allocation3], 24
        %v1113 = vld [vmem:[%s1112] sm:$0xff]
        %v1115 = vsel %vm693, %v1109, 0
        %v1118 = vsel %vm693, %v1111, 0
        %1120 = vmatpush.xpose.msra.mxu0 0.0
        %1121 = vmatpush.xpose.msra.mxu0 0.0
        %1122 = vmatpush.xpose.msra.mxu0 0.0
        %1123 = vmatpush.xpose.msra.mxu0 0.0
        %1124 = vmatpush.xpose.msra.mxu0 0.0
        %1125 = vmatpush.xpose.msra.mxu0 0.0
        %1126 = vmatpush.xpose.msra.mxu0 0.0
        %1127 = vmatpush.xpose.msra.mxu0 0.0
        %1128 = vmatpush.xpose.msra.mxu0 0.0
        %1129 = vmatpush.xpose.msra.mxu0 0.0
        %1130 = vmatpush.xpose.msra.mxu0 0.0
        %1131 = vmatpush.xpose.msra.mxu0 0.0
        %1132 = vmatpush.xpose.msra.mxu0 0.0
        %1133 = vmatpush.xpose.msra.mxu0 0.0
        %1134 = vmatpush.xpose.msra.mxu0 0.0
        %1135 = vmatpush.xpose.msra.mxu0 %v1118
        %1136 = vmatmul.f32.gmra.mxu0 %v1115
        %v1137 = vpop.f32.mrf.mxu0
        %v1138 = vadd.f32 0.0, %v1137
        %1139 = vdwg.mxu0
        %v1140 = vsel %vm693, %v1138, -inf
        %1141 = vmax.xlane.f32.xlu0 %v1140
        %v1142 = vpop.xlane.xlu0 %1141
        %v1143 = vsub.f32 -inf, %v1142
        %v1144 = vmul.f32 %v1143, 1.442695
        %v1145 = vpow.pop %v1144
        %v1146 = vsub.f32 %v1138, %v1142
        %v1147 = vmul.f32 %v1146, 1.442695
        %v1148 = vpow.pop %v1147
        %v1149 = vmul.f32 %v1145, 0.0
        %v1150 = vsel %vm693, %v1148, 0.0
        %1151 = vadd.xlane.f32.xlu0 %v1150
        %v1152 = vpop.xlane.xlu0 %1151
        %v1153 = vadd.f32 %v1149, %v1152
        %v1155 = vsel %vm693, %v1148, 0
        %1157 = vmatpush.msra.mxu0 0.0
        %1158 = vmatpush.msra.mxu0 0.0
        %1159 = vmatpush.msra.mxu0 0.0
        %1160 = vmatpush.msra.mxu0 0.0
        %1161 = vmatpush.msra.mxu0 0.0
        %1162 = vmatpush.msra.mxu0 0.0
        %1163 = vmatpush.msra.mxu0 0.0
        %1164 = vmatpush.msra.mxu0 0.0
        %1165 = vmatpush.msra.mxu0 0.0
        %1166 = vmatpush.msra.mxu0 0.0
        %1167 = vmatpush.msra.mxu0 0.0
        %1168 = vmatpush.msra.mxu0 0.0
        %1169 = vmatpush.msra.mxu0 0.0
        %1170 = vmatpush.msra.mxu0 0.0
        %1171 = vmatpush.msra.mxu0 0.0
        %1172 = vmatpush.msra.mxu0 %v1113
        %1173 = vmatmul.f32.gmra.mxu0 %v1155
        %v1174 = vpop.f32.mrf.mxu0
        %v1175 = vadd.f32 0.0, %v1174
        %1176 = vdwg.mxu0
        %v1177 = vadd.f32 %v1149, %v1175
        %v1178 = vrcp.pop %v1153
        %v1179 = vmul.f32 %v1153, %v1178
        %v1180 = vsub.f32 1.0, %v1179
        %v1181 = vmul.f32 %v1178, %v1180
        %v1182 = vadd.f32 %v1178, %v1181
        %vm1183 = vweird.f32 %v1153
        %vm1184 = vweird.f32 %v1178
        %vm1185 = vmor %vm1183, %vm1184
        %v1186 = vsel %vm1185, %v1178, %v1182
        %v1187 = vand.u32 2147483647, %v1153
        %vm1188 = vcmp.eq.f32.partialorder %v1187, 8.507059e+37
        %v1189 = vand.u32 %v1153, 2147483648
        %v1190 = vor.u32 1.1754944e-38, %v1189
        %v1191 = vsel %vm1188, %v1190, %v1186
        %v1192 = vmul.f32 1.0, %v1191
        %v1193 = vmul.f32 %v1177, %v1192
        %s1194 = scalar_lea.vmem %s8, 24
        %v1195 = vld [vmem:[%s1194] sm:$0xff]
        %v1197 = vsel %vm693, %v1193, 0
        %1199 = vmatpush.msra.mxu0 0.0
        %1200 = vmatpush.msra.mxu0 0.0
        %1201 = vmatpush.msra.mxu0 0.0
        %1202 = vmatpush.msra.mxu0 0.0
        %1203 = vmatpush.msra.mxu0 0.0
        %1204 = vmatpush.msra.mxu0 0.0
        %1205 = vmatpush.msra.mxu0 0.0
        %1206 = vmatpush.msra.mxu0 0.0
        %1207 = vmatpush.msra.mxu0 0.0
        %1208 = vmatpush.msra.mxu0 0.0
        %1209 = vmatpush.msra.mxu0 0.0
        %1210 = vmatpush.msra.mxu0 0.0
        %1211 = vmatpush.msra.mxu0 0.0
        %1212 = vmatpush.msra.mxu0 0.0
        %1213 = vmatpush.msra.mxu0 0.0
        %1214 = vmatpush.msra.mxu0 %v1195
        %1215 = vmatmul.f32.gmra.mxu0 %v1197
        %v1216 = vpop.f32.mrf.mxu0
        %v1217 = vadd.f32 0.0, %v1216
        %1218 = vdwg.mxu0
        %v1219 = vadd.f32 %v1078, %v1217
        %v1220 = vld [vmem:[%s9] sm:$0x1]
        %v1222 = vperm.slane %v1220, 0
        %v1224 = vadd.f32 %v1219, %v1222
        %1225 = vst.msk [vmem:[%s385] sm:$0xff] %vm666, %v1224
        %s1226 = sand.u32 %s268, 1
        %s1227 = scalar_lea.sflag [#allocation5], %s1226
        %s1228 = sand.u32 %s268, 1
        %s1229 = smul.addr %s1228, 8
        %s1230 = scalar_lea.vmem [#allocation4], %s1229
        // Predicated region
        $region65: #{tpu_custom_call.1} parent=59 // pred_check
          %p1231 = pneg %p278
        $region66: #{tpu_custom_call.1} parent=59 // pred_check_branch
          %1233 = sbr.rel (%p1231) target = $region68
        $region67: #{tpu_custom_call.1} parent=59 // pred_region
          %1235 = vsyncadd %s1227, 0
          %s1236 = sadd.s32 %s29, %s28
          %s1237 = smul.addr %s1236, 8
          %s1238 = scalar_lea.hbm %s10, %s1237
          %s1240 = sshll.u32 %s1230, 4
          %s1241 = int_to_ptr.vmem [resolvable:$true] %s1240
          %s1242 = sshll.u32 %s1238, 4
          %s1243 = int_to_ptr.hbm [resolvable:$true] %s1242
          %1245 = dma.vmem_to_hbm [thread:$0]  %s1241, 128, %s1243, %s1227
        $region68: #{tpu_custom_call.1} parent=59 // pred_fallthru
          _
      $region60: #{tpu_custom_call.1} parent=5 // pred_fallthru
        _
      %p1246 = scmp.le.s32.totalorder 2, %s19
      // Predicated region
      $region69: #{tpu_custom_call.1} parent=5 // pred_check
        %p1247 = pneg %p1246
      $region70: #{tpu_custom_call.1} parent=5 // pred_check_branch
        %1249 = sbr.rel (%p1247) target = $region72
      $region71: #{tpu_custom_call.1} parent=5 // pred_region
        %s1250 = ssub.s32 %s19, 2
        // Predicated region
        $region73: #{tpu_custom_call.1} parent=71 // pred_check
          %p1251 = pneg %p284
        $region74: #{tpu_custom_call.1} parent=71 // pred_check_branch
          %1253 = sbr.rel (%p1251) target = $region76
        $region75: #{tpu_custom_call.1} parent=71 // pred_region
          %s1254 = sand.u32 %s269, 1
          %s1255 = scalar_lea.sflag [#allocation5], %s1254
          %s1256 = sand.u32 %s269, 1
          %s1257 = smul.addr %s1256, 8
          %s1258 = scalar_lea.vmem [#allocation4], %s1257
          %1260 = dma.done %s1255, 128
        $region76: #{tpu_custom_call.1} parent=71 // pred_fallthru
          _
      $region72: #{tpu_custom_call.1} parent=5 // pred_fallthru
        _
    $region6: #{tpu_custom_call.1} parent=1 // loop_footer
      %s23 = sadd.s32 1, %s19
    $region7: #{tpu_custom_call.1} parent=1 // loop_footer_branch
      %18 = sbr.rel target = $region3
    $region8: #{tpu_custom_call.1} parent=1 // loop_exit
      _
    %1261 = vsyncpa [#allocation5], 1
    %s1262 = scalar_lea.sflag [#allocation5], 1
    %1263 = vsyncpa %s1262, 1

// kernel: tpu_custom_call.1
$region0: #{tpu_custom_call.1}
  #allocation0 [shape = 'u32[]', space=smem, size = 0x4, offset = 0x4, fixed_abs, tag = 'smem constant byte address 0x4 - core index']
  #allocation1 [shape = 'u32[72,128]{1,0:T(1,128)}', space=vmem, size = 0x9000, scoped, tag = 'internal scratch']
  #allocation2 [shape = 'f32[4,8,8]{2,1,0:T(8,128)}', space=vmem, size = 0x4000, scoped, tag = 'scratch operand']
  #allocation3 [shape = 'f32[4,8,8]{2,1,0:T(8,128)}', space=vmem, size = 0x4000, scoped, tag = 'scratch operand']
  %s0 = inlined_call_operand.vmem [shape: f32[2,8,32], index: 0, kind: input, shape index: {}]
  %s1 = inlined_call_operand.vmem [shape: f32[2,8,32], index: 1, kind: input, shape index: {}]
  %s2 = inlined_call_operand.vmem [shape: f32[4,32,8], index: 2, kind: input, shape index: {}]
  %s3 = inlined_call_operand.vmem [shape: f32[4,1,8], index: 3, kind: input, shape index: {}]
  %s4 = inlined_call_operand.vmem [shape: f32[4,32,8], index: 4, kind: input, shape index: {}]
  %s5 = inlined_call_operand.vmem [shape: f32[4,1,8], index: 5, kind: input, shape index: {}]
  %s6 = inlined_call_operand.vmem [shape: f32[4,32,8], index: 6, kind: input, shape index: {}]
  %s7 = inlined_call_operand.vmem [shape: f32[4,1,8], index: 7, kind: input, shape index: {}]
  %s8 = inlined_call_operand.vmem [shape: f32[4,8,32], index: 8, kind: input, shape index: {}]
  %s9 = inlined_call_operand.vmem [shape: f32[1,32], index: 9, kind: input, shape index: {}]
  %s10 = inlined_call_operand.hbm [shape: f32[2,8,32], index: 10, kind: output, shape index: {}]
  %s11 = sld [smem:[#allocation0]]
  $region77: #{tpu_custom_call.1} parent=0
    _
  %s13 = ssub.s32 1, %s11
  %s14 = scalar_select 0, %s13, %s11
  $region1: #{tpu_custom_call.1} parent=0
    #allocation4 [shape = 'u8[8192]{0}', space=vmem, size = 0x2000, scoped, tag = 'output window, operand 0']
    #allocation5 [shape = 's32[2]{0}', space=sflag, size = 0x8, scoped, tag = 'scoped memory for tpu_custom_call.1']
    %15 = vsyncpa [#allocation5], 0
    %s16 = scalar_lea.sflag [#allocation5], 1
    %17 = vsyncpa %s16, 0
    loop: start=0, step=1, limit=4
    $region2: #{tpu_custom_call.1} parent=1 // loop_pre_header
      _
    $region3: #{tpu_custom_call.1} parent=1 // loop_header
      %s19 = sphi 0, %s23
      %p20 = scmp.ge.s32.totalorder %s19, 4
      %s26 = sphi 0, %s38
      %s27 = sphi 0, %s34
      %s28 = sphi 0, %s26
      %s29 = sphi 0, %s27
      %s30 = sphi 0, %s28
      %s31 = sphi 0, %s29
      %s41 = sphi 0, %s43
      %s44 = sphi 0, %s41
      %s45 = sphi 0, %s44
      %s61 = sphi 0, %s45
      %s69 = sphi 0, %s71
      %s72 = sphi 0, %s69
      %s73 = sphi 0, %s72
      %s89 = sphi 0, %s73
      %s93 = sphi 0, %s93
      %s95 = sphi 0, %s93
      %s96 = sphi 0, %s95
      %s110 = sphi 0, %s96
      %s114 = sphi 0, %s114
      %s116 = sphi 0, %s114
      %s117 = sphi 0, %s116
      %s131 = sphi 0, %s117
      %s135 = sphi 0, %s135
      %s137 = sphi 0, %s135
      %s138 = sphi 0, %s137
      %s152 = sphi 0, %s138
      %s156 = sphi 0, %s156
      %s158 = sphi 0, %s156
      %s159 = sphi 0, %s158
      %s173 = sphi 0, %s159
      %s177 = sphi 0, %s177
      %s179 = sphi 0, %s177
      %s180 = sphi 0, %s179
      %s194 = sphi 0, %s180
      %s198 = sphi 0, %s198
      %s200 = sphi 0, %s198
      %s201 = sphi 0, %s200
      %s215 = sphi 0, %s201
      %s219 = sphi 0, %s219
      %s221 = sphi 0, %s219
      %s222 = sphi 0, %s221
      %s236 = sphi 0, %s222
      %s240 = sphi 0, %s240
      %s242 = sphi 0, %s240
      %s243 = sphi 0, %s242
      %s257 = sphi 0, %s243
      %s265 = sphi 0, %s267
      %s268 = sphi 0, %s265
      %s269 = sphi 0, %s268
      %s285 = sphi 0, %s269
    $region4: #{tpu_custom_call.1} parent=1 // loop_header_branch
      %22 = sbr.rel (%p20) target = $region8
    $region5: #{tpu_custom_call.1} parent=1 // loop_body
      %s24 = ssub.s32 %s19, 1
      %s25 = ssub.s32 %s19, 2
      %s32 = sadd.s32 1, %s27
      %p33 = scmp.ge.s32.totalorder %s32, 1
      %s34 = scalar_select %p33, 0, %s32
      %s35 = sadd.s32 1, %s26
      %s36 = scalar_select %p33, %s35, %s26
      %p37 = scmp.ge.s32.totalorder %s36, 2
      %s38 = scalar_select %p37, 0, %s36
      %s39 = ssub.s32 %s26, %s38
      %p40 = scmp.eq.s32.totalorder %s39, 0
      %s42 = sadd.s32 %s41, 1
      %s43 = scalar_select %p40, %s41, %s42
      %p46 = pneg %p40
      %p47 = scmp.eq.s32.totalorder %s19, 1
      %p48 = por %p46, %p47
      %p49 = scmp.ne.s32.totalorder %s41, %s44
      %p50 = scmp.eq.s32.totalorder %s19, 0
      %p51 = por %p49, %p50
      %p52 = scmp.ne.s32.totalorder %s41, %s44
      %p53 = scmp.eq.s32.totalorder %s24, 1
      %p54 = por %p52, %p53
      %p55 = scmp.ne.s32.totalorder %s44, %s45
      %p56 = scmp.eq.s32.totalorder %s24, 0
      %p57 = por %p55, %p56
      %p58 = scmp.ne.s32.totalorder %s44, %s45
      %p59 = scmp.eq.s32.totalorder %s25, 1
      %p60 = por %p58, %p59
      %p62 = scmp.ne.s32.totalorder %s45, %s61
      %p63 = scmp.eq.s32.totalorder %s25, 0
      %p64 = por %p62, %p63
      %s65 = ssub.s32 %s26, %s38
      %s66 = ssub.s32 %s27, %s34
      %s67 = sor.u32 %s65, %s66
      %p68 = scmp.eq.s32.totalorder %s67, 0
      %s70 = sadd.s32 %s69, 1
      %s71 = scalar_select %p68, %s69, %s70
      %p74 = pneg %p68
      %p75 = scmp.eq.s32.totalorder %s19, 1
      %p76 = por %p74, %p75
      %p77 = scmp.ne.s32.totalorder %s69, %s72
      %p78 = scmp.eq.s32.totalorder %s19, 0
      %p79 = por %p77, %p78
      %p80 = scmp.ne.s32.totalorder %s69, %s72
      %p81 = scmp.eq.s32.totalorder %s24, 1
      %p82 = por %p80, %p81
      %p83 = scmp.ne.s32.totalorder %s72, %s73
      %p84 = scmp.eq.s32.totalorder %s24, 0
      %p85 = por %p83, %p84
      %p86 = scmp.ne.s32.totalorder %s72, %s73
      %p87 = scmp.eq.s32.totalorder %s25, 1
      %p88 = por %p86, %p87
      %p90 = scmp.ne.s32.totalorder %s73, %s89
      %p91 = scmp.eq.s32.totalorder %s25, 0
      %p92 = por %p90, %p91
      %s94 = sadd.s32 %s93, 1
      %p97 = scmp.eq.s32.totalorder %s19, 1
      %p98 = scmp.ne.s32.totalorder %s93, %s95
      %p99 = scmp.eq.s32.totalorder %s19, 0
      %p100 = por %p98, %p99
      %p101 = scmp.ne.s32.totalorder %s93, %s95
      %p102 = scmp.eq.s32.totalorder %s24, 1
      %p103 = por %p101, %p102
      %p104 = scmp.ne.s32.totalorder %s95, %s96
      %p105 = scmp.eq.s32.totalorder %s24, 0
      %p106 = por %p104, %p105
      %p107 = scmp.ne.s32.totalorder %s95, %s96
      %p108 = scmp.eq.s32.totalorder %s25, 1
      %p109 = por %p107, %p108
      %p111 = scmp.ne.s32.totalorder %s96, %s110
      %p112 = scmp.eq.s32.totalorder %s25, 0
      %p113 = por %p111, %p112
      %s115 = sadd.s32 %s114, 1
      %p118 = scmp.eq.s32.totalorder %s19, 1
      %p119 = scmp.ne.s32.totalorder %s114, %s116
      %p120 = scmp.eq.s32.totalorder %s19, 0
      %p121 = por %p119, %p120
      %p122 = scmp.ne.s32.totalorder %s114, %s116
      %p123 = scmp.eq.s32.totalorder %s24, 1
      %p124 = por %p122, %p123
      %p125 = scmp.ne.s32.totalorder %s116, %s117
      %p126 = scmp.eq.s32.totalorder %s24, 0
      %p127 = por %p125, %p126
      %p128 = scmp.ne.s32.totalorder %s116, %s117
      %p129 = scmp.eq.s32.totalorder %s25, 1
      %p130 = por %p128, %p129
      %p132 = scmp.ne.s32.totalorder %s117, %s131
      %p133 = scmp.eq.s32.totalorder %s25, 0
      %p134 = por %p132, %p133
      %s136 = sadd.s32 %s135, 1
      %p139 = scmp.eq.s32.totalorder %s19, 1
      %p140 = scmp.ne.s32.totalorder %s135, %s137
      %p141 = scmp.eq.s32.totalorder %s19, 0
      %p142 = por %p140, %p141
      %p143 = scmp.ne.s32.totalorder %s135, %s137
      %p144 = scmp.eq.s32.totalorder %s24, 1
      %p145 = por %p143, %p144
      %p146 = scmp.ne.s32.totalorder %s137, %s138
      %p147 = scmp.eq.s32.totalorder %s24, 0
      %p148 = por %p146, %p147
      %p149 = scmp.ne.s32.totalorder %s137, %s138
      %p150 = scmp.eq.s32.totalorder %s25, 1
      %p151 = por %p149, %p150
      %p153 = scmp.ne.s32.totalorder %s138, %s152
      %p154 = scmp.eq.s32.totalorder %s25, 0
      %p155 = por %p153, %p154
      %s157 = sadd.s32 %s156, 1
      %p160 = scmp.eq.s32.totalorder %s19, 1
      %p161 = scmp.ne.s32.totalorder %s156, %s158
      %p162 = scmp.eq.s32.totalorder %s19, 0
      %p163 = por %p161, %p162
      %p164 = scmp.ne.s32.totalorder %s156, %s158
      %p165 = scmp.eq.s32.totalorder %s24, 1
      %p166 = por %p164, %p165
      %p167 = scmp.ne.s32.totalorder %s158, %s159
      %p168 = scmp.eq.s32.totalorder %s24, 0
      %p169 = por %p167, %p168
      %p170 = scmp.ne.s32.totalorder %s158, %s159
      %p171 = scmp.eq.s32.totalorder %s25, 1
      %p172 = por %p170, %p171
      %p174 = scmp.ne.s32.totalorder %s159, %s173
      %p175 = scmp.eq.s32.totalorder %s25, 0
      %p176 = por %p174, %p175
      %s178 = sadd.s32 %s177, 1
      %p181 = scmp.eq.s32.totalorder %s19, 1
      %p182 = scmp.ne.s32.totalorder %s177, %s179
      %p183 = scmp.eq.s32.totalorder %s19, 0
      %p184 = por %p182, %p183
      %p185 = scmp.ne.s32.totalorder %s177, %s179
      %p186 = scmp.eq.s32.totalorder %s24, 1
      %p187 = por %p185, %p186
      %p188 = scmp.ne.s32.totalorder %s179, %s180
      %p189 = scmp.eq.s32.totalorder %s24, 0
      %p190 = por %p188, %p189
      %p191 = scmp.ne.s32.totalorder %s179, %s180
      %p192 = scmp.eq.s32.totalorder %s25, 1
      %p193 = por %p191, %p192
      %p195 = scmp.ne.s32.totalorder %s180, %s194
      %p196 = scmp.eq.s32.totalorder %s25, 0
      %p197 = por %p195, %p196
      %s199 = sadd.s32 %s198, 1
      %p202 = scmp.eq.s32.totalorder %s19, 1
      %p203 = scmp.ne.s32.totalorder %s198, %s200
      %p204 = scmp.eq.s32.totalorder %s19, 0
      %p205 = por %p203, %p204
      %p206 = scmp.ne.s32.totalorder %s198, %s200
      %p207 = scmp.eq.s32.totalorder %s24, 1
      %p208 = por %p206, %p207
      %p209 = scmp.ne.s32.totalorder %s200, %s201
      %p210 = scmp.eq.s32.totalorder %s24, 0
      %p211 = por %p209, %p210
      %p212 = scmp.ne.s32.totalorder %s200, %s201
      %p213 = scmp.eq.s32.totalorder %s25, 1
      %p214 = por %p212, %p213
      %p216 = scmp.ne.s32.totalorder %s201, %s215
      %p217 = scmp.eq.s32.totalorder %s25, 0
      %p218 = por %p216, %p217
      %s220 = sadd.s32 %s219, 1
      %p223 = scmp.eq.s32.totalorder %s19, 1
      %p224 = scmp.ne.s32.totalorder %s219, %s221
      %p225 = scmp.eq.s32.totalorder %s19, 0
      %p226 = por %p224, %p225
      %p227 = scmp.ne.s32.totalorder %s219, %s221
      %p228 = scmp.eq.s32.totalorder %s24, 1
      %p229 = por %p227, %p228
      %p230 = scmp.ne.s32.totalorder %s221, %s222
      %p231 = scmp.eq.s32.totalorder %s24, 0
      %p232 = por %p230, %p231
      %p233 = scmp.ne.s32.totalorder %s221, %s222
      %p234 = scmp.eq.s32.totalorder %s25, 1
      %p235 = por %p233, %p234
      %p237 = scmp.ne.s32.totalorder %s222, %s236
      %p238 = scmp.eq.s32.totalorder %s25, 0
      %p239 = por %p237, %p238
      %s241 = sadd.s32 %s240, 1
      %p244 = scmp.eq.s32.totalorder %s19, 1
      %p245 = scmp.ne.s32.totalorder %s240, %s242
      %p246 = scmp.eq.s32.totalorder %s19, 0
      %p247 = por %p245, %p246
      %p248 = scmp.ne.s32.totalorder %s240, %s242
      %p249 = scmp.eq.s32.totalorder %s24, 1
      %p250 = por %p248, %p249
      %p251 = scmp.ne.s32.totalorder %s242, %s243
      %p252 = scmp.eq.s32.totalorder %s24, 0
      %p253 = por %p251, %p252
      %p254 = scmp.ne.s32.totalorder %s242, %s243
      %p255 = scmp.eq.s32.totalorder %s25, 1
      %p256 = por %p254, %p255
      %p258 = scmp.ne.s32.totalorder %s243, %s257
      %p259 = scmp.eq.s32.totalorder %s25, 0
      %p260 = por %p258, %p259
      %s261 = ssub.s32 %s26, %s38
      %s262 = ssub.s32 %s27, %s34
      %s263 = sor.u32 %s261, %s262
      %p264 = scmp.eq.s32.totalorder %s263, 0
      %s266 = sadd.s32 %s265, 1
      %s267 = scalar_select %p264, %s265, %s266
      %p270 = pneg %p264
      %p271 = scmp.eq.s32.totalorder %s19, 1
      %p272 = por %p270, %p271
      %p273 = scmp.ne.s32.totalorder %s265, %s268
      %p274 = scmp.eq.s32.totalorder %s19, 0
      %p275 = por %p273, %p274
      %p276 = scmp.ne.s32.totalorder %s265, %s268
      %p277 = scmp.eq.s32.totalorder %s24, 1
      %p278 = por %p276, %p277
      %p279 = scmp.ne.s32.totalorder %s268, %s269
      %p280 = scmp.eq.s32.totalorder %s24, 0
      %p281 = por %p279, %p280
      %p282 = scmp.ne.s32.totalorder %s268, %s269
      %p283 = scmp.eq.s32.totalorder %s25, 1
      %p284 = por %p282, %p283
      %p286 = scmp.ne.s32.totalorder %s269, %s285
      %p287 = scmp.eq.s32.totalorder %s25, 0
      %p288 = por %p286, %p287
      %p289 = scmp.le.s32.totalorder 1, %s19
      %p290 = scmp.lt.s32.totalorder %s19, 3
      %p291 = pnand %p289, %p290
      %p292 = pneg %p291
      // Predicated region
      $region9: #{tpu_custom_call.1} parent=5 // pred_check
        _
      $region10: #{tpu_custom_call.1} parent=5 // pred_check_branch
        %294 = sbr.rel (%p291) target = $region12
      $region11: #{tpu_custom_call.1} parent=5 // pred_region
        %s295 = ssub.s32 %s19, 1
        // Predicated region
        $region13: #{tpu_custom_call.1} parent=11 // pred_check
          %p296 = pneg %p106
        $region14: #{tpu_custom_call.1} parent=11 // pred_check_branch
          %298 = sbr.rel (%p296) target = $region16
        $region15: #{tpu_custom_call.1} parent=11 // pred_region
          _
        $region16: #{tpu_custom_call.1} parent=11 // pred_fallthru
          _
        // Predicated region
        $region17: #{tpu_custom_call.1} parent=11 // pred_check
          %p299 = pneg %p127
        $region18: #{tpu_custom_call.1} parent=11 // pred_check_branch
          %301 = sbr.rel (%p299) target = $region20
        $region19: #{tpu_custom_call.1} parent=11 // pred_region
          _
        $region20: #{tpu_custom_call.1} parent=11 // pred_fallthru
          _
        // Predicated region
        $region21: #{tpu_custom_call.1} parent=11 // pred_check
          %p302 = pneg %p148
        $region22: #{tpu_custom_call.1} parent=11 // pred_check_branch
          %304 = sbr.rel (%p302) target = $region24
        $region23: #{tpu_custom_call.1} parent=11 // pred_region
          _
        $region24: #{tpu_custom_call.1} parent=11 // pred_fallthru
          _
        // Predicated region
        $region25: #{tpu_custom_call.1} parent=11 // pred_check
          %p305 = pneg %p169
        $region26: #{tpu_custom_call.1} parent=11 // pred_check_branch
          %307 = sbr.rel (%p305) target = $region28
        $region27: #{tpu_custom_call.1} parent=11 // pred_region
          _
        $region28: #{tpu_custom_call.1} parent=11 // pred_fallthru
          _
        // Predicated region
        $region29: #{tpu_custom_call.1} parent=11 // pred_check
          %p308 = pneg %p190
        $region30: #{tpu_custom_call.1} parent=11 // pred_check_branch
          %310 = sbr.rel (%p308) target = $region32
        $region31: #{tpu_custom_call.1} parent=11 // pred_region
          _
        $region32: #{tpu_custom_call.1} parent=11 // pred_fallthru
          _
        // Predicated region
        $region33: #{tpu_custom_call.1} parent=11 // pred_check
          %p311 = pneg %p211
        $region34: #{tpu_custom_call.1} parent=11 // pred_check_branch
          %313 = sbr.rel (%p311) target = $region36
        $region35: #{tpu_custom_call.1} parent=11 // pred_region
          _
        $region36: #{tpu_custom_call.1} parent=11 // pred_fallthru
          _
        // Predicated region
        $region37: #{tpu_custom_call.1} parent=11 // pred_check
          %p314 = pneg %p232
        $region38: #{tpu_custom_call.1} parent=11 // pred_check_branch
          %316 = sbr.rel (%p314) target = $region40
        $region39: #{tpu_custom_call.1} parent=11 // pred_region
          _
        $region40: #{tpu_custom_call.1} parent=11 // pred_fallthru
          _
        // Predicated region
        $region41: #{tpu_custom_call.1} parent=11 // pred_check
          %p317 = pneg %p253
        $region42: #{tpu_custom_call.1} parent=11 // pred_check_branch
          %319 = sbr.rel (%p317) target = $region44
        $region43: #{tpu_custom_call.1} parent=11 // pred_region
          _
        $region44: #{tpu_custom_call.1} parent=11 // pred_fallthru
          _
      $region12: #{tpu_custom_call.1} parent=5 // pred_fallthru
        _
      %p320 = scmp.lt.s32.totalorder %s19, 2
      // Predicated region
      $region45: #{tpu_custom_call.1} parent=5 // pred_check
        %p321 = pneg %p320
      $region46: #{tpu_custom_call.1} parent=5 // pred_check_branch
        %323 = sbr.rel (%p321) target = $region48
      $region47: #{tpu_custom_call.1} parent=5 // pred_region
        // Predicated region
        $region49: #{tpu_custom_call.1} parent=47 // pred_check
          %p324 = pneg %p51
        $region50: #{tpu_custom_call.1} parent=47 // pred_check_branch
          %326 = sbr.rel (%p324) target = $region52
        $region51: #{tpu_custom_call.1} parent=47 // pred_region
          %p327 = scmp.lt.s32.totalorder %s26, 1
          %s328 = scalar_select %p327, %s26, 1
          %s329 = smul.addr %s328, 8
          %s330 = scalar_lea.vmem %s0, %s329
        $region52: #{tpu_custom_call.1} parent=47 // pred_fallthru
          _
        // Predicated region
        $region53: #{tpu_custom_call.1} parent=47 // pred_check
          %p331 = pneg %p79
        $region54: #{tpu_custom_call.1} parent=47 // pred_check_branch
          %333 = sbr.rel (%p331) target = $region56
        $region55: #{tpu_custom_call.1} parent=47 // pred_region
          %p334 = scmp.lt.s32.totalorder %s26, 1
          %s335 = scalar_select %p334, %s26, 1
          %p336 = scmp.lt.s32.totalorder %s27, 0
          %s337 = scalar_select %p336, %s27, 0
          %s338 = sadd.s32 %s337, %s335
          %s339 = smul.addr %s338, 8
          %s340 = scalar_lea.vmem %s1, %s339
        $region56: #{tpu_custom_call.1} parent=47 // pred_fallthru
          _
      $region48: #{tpu_custom_call.1} parent=5 // pred_fallthru
        _
      %p341 = scmp.le.s32.totalorder 1, %s19
      %p342 = scmp.lt.s32.totalorder %s19, 3
      %p343 = pnand %p341, %p342
      %p344 = pneg %p343
      // Predicated region
      $region57: #{tpu_custom_call.1} parent=5 // pred_check
        _
      $region58: #{tpu_custom_call.1} parent=5 // pred_check_branch
        %346 = sbr.rel (%p343) target = $region60
      $region59: #{tpu_custom_call.1} parent=5 // pred_region
        %s347 = ssub.s32 %s19, 1
        %p348 = scmp.lt.s32.totalorder %s28, 1
        %s349 = scalar_select %p348, %s28, 1
        %s350 = smul.addr %s349, 8
        %s351 = scalar_lea.vmem %s0, %s350
        %p352 = pneg %p57
        %p353 = pneg %p54
        %p354 = scmp.lt.s32.totalorder %s28, 1
        %s355 = scalar_select %p354, %s28, 1
        %p356 = scmp.lt.s32.totalorder %s29, 0
        %s357 = scalar_select %p356, %s29, 0
        %s358 = sadd.s32 %s357, %s355
        %s359 = smul.addr %s358, 8
        %s360 = scalar_lea.vmem %s1, %s359
        %p361 = pneg %p85
        %p362 = pneg %p82
        %p363 = pneg %p106
        %p364 = pneg %p103
        %p365 = pneg %p127
        %p366 = pneg %p124
        %p367 = pneg %p148
        %p368 = pneg %p145
        %p369 = pneg %p169
        %p370 = pneg %p166
        %p371 = pneg %p190
        %p372 = pneg %p187
        %p373 = pneg %p211
        %p374 = pneg %p208
        %p375 = pneg %p232
        %p376 = pneg %p229
        %p377 = pneg %p253
        %p378 = pneg %p250
        %p379 = pneg %p281
        %p380 = pneg %p278
        %s381 = sand.u32 %s268, 1
        %s382 = scalar_lea.sflag [#allocation5], %s381
        %s383 = sand.u32 %s268, 1
        %s384 = smul.addr %s383, 8
        %s385 = scalar_lea.vmem [#allocation4], %s384
        %p386 = scmp.lt.s32.totalorder %s28, 1
        %s387 = scalar_select %p386, %s28, 1
        %s388 = smul.addr %s387, 8
        %s389 = scalar_lea.vmem %s0, %s388
        %p390 = scmp.lt.s32.totalorder %s28, 1
        %s391 = scalar_select %p390, %s28, 1
        %p392 = scmp.lt.s32.totalorder %s29, 0
        %s393 = scalar_select %p392, %s29, 0
        %s394 = sadd.s32 %s393, %s391
        %s395 = smul.addr %s394, 8
        %s396 = scalar_lea.vmem %s1, %s395
        %p397 = scmp.eq.s32.totalorder %s29, 0
        // Predicated region
        $region61: #{tpu_custom_call.1} parent=59 // pred_check
          %p398 = pneg %p397
        $region62: #{tpu_custom_call.1} parent=59 // pred_check_branch
          %400 = sbr.rel (%p398) target = $region64
        $region63: #{tpu_custom_call.1} parent=59 // pred_region
          %v401 = vld [vmem:[%s389] sm:$0xff]
          %v402 = vld [vmem:[%s4] sm:$0xff]
          %v403 = vld [vmem:[%s4 + $0x8] sm:$0xff]
          %v404 = vld [vmem:[%s4 + $0x10] sm:$0xff]
          %v405 = vld [vmem:[%s4 + $0x18] sm:$0xff]
          %v406 = vld [vmem:[%s5] sm:$0x1]
          %v408 = vperm.slane %v406, 0
          %vm410 = vcmask 261120
          %v412 = vsel %vm410, %v401, 0
          %414 = vmatpush.msra.mxu0 0.0
          %415 = vmatpush.msra.mxu0 0.0
          %416 = vmatpush.msra.mxu0 0.0
          %417 = vmatpush.msra.mxu0 0.0
          %418 = vmatpush.msra.mxu0 0.0
          %419 = vmatpush.msra.mxu0 0.0
          %420 = vmatpush.msra.mxu0 0.0
          %421 = vmatpush.msra.mxu0 0.0
          %422 = vmatpush.msra.mxu0 0.0
          %423 = vmatpush.msra.mxu0 0.0
          %424 = vmatpush.msra.mxu0 0.0
          %425 = vmatpush.msra.mxu0 0.0
          %426 = vmatpush.msra.mxu0 %v405
          %427 = vmatpush.msra.mxu0 %v404
          %428 = vmatpush.msra.mxu0 %v403
          %429 = vmatpush.msra.mxu0 %v402
          %430 = vmatmul.f32.gmra.mxu0 %v412
          %v431 = vpop.f32.mrf.mxu0
          %v432 = vadd.f32 %v408, %v431
          %433 = vdwg.mxu0
          %vm434 = vcmask 64512
          %435 = vst.msk [vmem:[#allocation2] sm:$0xff] %vm434, %v432
          %v436 = vld [vmem:[%s6] sm:$0xff]
          %v437 = vld [vmem:[%s6 + $0x8] sm:$0xff]
          %v438 = vld [vmem:[%s6 + $0x10] sm:$0xff]
          %v439 = vld [vmem:[%s6 + $0x18] sm:$0xff]
          %v440 = vld [vmem:[%s7] sm:$0x1]
          %v442 = vperm.slane %v440, 0
          %444 = vmatpush.msra.mxu0 0.0
          %445 = vmatpush.msra.mxu0 0.0
          %446 = vmatpush.msra.mxu0 0.0
          %447 = vmatpush.msra.mxu0 0.0
          %448 = vmatpush.msra.mxu0 0.0
          %449 = vmatpush.msra.mxu0 0.0
          %450 = vmatpush.msra.mxu0 0.0
          %451 = vmatpush.msra.mxu0 0.0
          %452 = vmatpush.msra.mxu0 0.0
          %453 = vmatpush.msra.mxu0 0.0
          %454 = vmatpush.msra.mxu0 0.0
          %455 = vmatpush.msra.mxu0 0.0
          %456 = vmatpush.msra.mxu0 %v439
          %457 = vmatpush.msra.mxu0 %v438
          %458 = vmatpush.msra.mxu0 %v437
          %459 = vmatpush.msra.mxu0 %v436
          %460 = vmatmul.f32.gmra.mxu0 %v412
          %v461 = vpop.f32.mrf.mxu0
          %v462 = vadd.f32 %v442, %v461
          %463 = vdwg.mxu0
          %464 = vst.msk [vmem:[#allocation3] sm:$0xff] %vm434, %v462
          %s465 = scalar_lea.vmem %s4, 32
          %v466 = vld [vmem:[%s465] sm:$0xff]
          %v467 = vld [vmem:[%s465 + $0x8] sm:$0xff]
          %v468 = vld [vmem:[%s465 + $0x10] sm:$0xff]
          %v469 = vld [vmem:[%s465 + $0x18] sm:$0xff]
          %s470 = scalar_lea.vmem %s5, 1
          %v471 = vld [vmem:[%s470] sm:$0x1]
          %v473 = vperm.slane %v471, 0
          %475 = vmatpush.msra.mxu0 0.0
          %476 = vmatpush.msra.mxu0 0.0
          %477 = vmatpush.msra.mxu0 0.0
          %478 = vmatpush.msra.mxu0 0.0
          %479 = vmatpush.msra.mxu0 0.0
          %480 = vmatpush.msra.mxu0 0.0
          %481 = vmatpush.msra.mxu0 0.0
          %482 = vmatpush.msra.mxu0 0.0
          %483 = vmatpush.msra.mxu0 0.0
          %484 = vmatpush.msra.mxu0 0.0
          %485 = vmatpush.msra.mxu0 0.0
          %486 = vmatpush.msra.mxu0 0.0
          %487 = vmatpush.msra.mxu0 %v469
          %488 = vmatpush.msra.mxu0 %v468
          %489 = vmatpush.msra.mxu0 %v467
          %490 = vmatpush.msra.mxu0 %v466
          %491 = vmatmul.f32.gmra.mxu0 %v412
          %v492 = vpop.f32.mrf.mxu0
          %v493 = vadd.f32 %v473, %v492
          %494 = vdwg.mxu0
          %s495 = scalar_lea.vmem [#allocation2], 8
          %496 = vst.msk [vmem:[%s495] sm:$0xff] %vm434, %v493
          %s497 = scalar_lea.vmem %s6, 32
          %v498 = vld [vmem:[%s497] sm:$0xff]
          %v499 = vld [vmem:[%s497 + $0x8] sm:$0xff]
          %v500 = vld [vmem:[%s497 + $0x10] sm:$0xff]
          %v501 = vld [vmem:[%s497 + $0x18] sm:$0xff]
          %s502 = scalar_lea.vmem %s7, 1
          %v503 = vld [vmem:[%s502] sm:$0x1]
          %v505 = vperm.slane %v503, 0
          %507 = vmatpush.msra.mxu0 0.0
          %508 = vmatpush.msra.mxu0 0.0
          %509 = vmatpush.msra.mxu0 0.0
          %510 = vmatpush.msra.mxu0 0.0
          %511 = vmatpush.msra.mxu0 0.0
          %512 = vmatpush.msra.mxu0 0.0
          %513 = vmatpush.msra.mxu0 0.0
          %514 = vmatpush.msra.mxu0 0.0
          %515 = vmatpush.msra.mxu0 0.0
          %516 = vmatpush.msra.mxu0 0.0
          %517 = vmatpush.msra.mxu0 0.0
          %518 = vmatpush.msra.mxu0 0.0
          %519 = vmatpush.msra.mxu0 %v501
          %520 = vmatpush.msra.mxu0 %v500
          %521 = vmatpush.msra.mxu0 %v499
          %522 = vmatpush.msra.mxu0 %v498
          %523 = vmatmul.f32.gmra.mxu0 %v412
          %v524 = vpop.f32.mrf.mxu0
          %v525 = vadd.f32 %v505, %v524
          %526 = vdwg.mxu0
          %s527 = scalar_lea.vmem [#allocation3], 8
          %528 = vst.msk [vmem:[%s527] sm:$0xff] %vm434, %v525
          %s529 = scalar_lea.vmem %s4, 64
          %v530 = vld [vmem:[%s529] sm:$0xff]
          %v531 = vld [vmem:[%s529 + $0x8] sm:$0xff]
          %v532 = vld [vmem:[%s529 + $0x10] sm:$0xff]
          %v533 = vld [vmem:[%s529 + $0x18] sm:$0xff]
          %s534 = scalar_lea.vmem %s5, 2
          %v535 = vld [vmem:[%s534] sm:$0x1]
          %v537 = vperm.slane %v535, 0
          %539 = vmatpush.msra.mxu0 0.0
          %540 = vmatpush.msra.mxu0 0.0
          %541 = vmatpush.msra.mxu0 0.0
          %542 = vmatpush.msra.mxu0 0.0
          %543 = vmatpush.msra.mxu0 0.0
          %544 = vmatpush.msra.mxu0 0.0
          %545 = vmatpush.msra.mxu0 0.0
          %546 = vmatpush.msra.mxu0 0.0
          %547 = vmatpush.msra.mxu0 0.0
          %548 = vmatpush.msra.mxu0 0.0
          %549 = vmatpush.msra.mxu0 0.0
          %550 = vmatpush.msra.mxu0 0.0
          %551 = vmatpush.msra.mxu0 %v533
          %552 = vmatpush.msra.mxu0 %v532
          %553 = vmatpush.msra.mxu0 %v531
          %554 = vmatpush.msra.mxu0 %v530
          %555 = vmatmul.f32.gmra.mxu0 %v412
          %v556 = vpop.f32.mrf.mxu0
          %v557 = vadd.f32 %v537, %v556
          %558 = vdwg.mxu0
          %s559 = scalar_lea.vmem [#allocation2], 16
          %560 = vst.msk [vmem:[%s559] sm:$0xff] %vm434, %v557
          %s561 = scalar_lea.vmem %s6, 64
          %v562 = vld [vmem:[%s561] sm:$0xff]
          %v563 = vld [vmem:[%s561 + $0x8] sm:$0xff]
          %v564 = vld [vmem:[%s561 + $0x10] sm:$0xff]
          %v565 = vld [vmem:[%s561 + $0x18] sm:$0xff]
          %s566 = scalar_lea.vmem %s7, 2
          %v567 = vld [vmem:[%s566] sm:$0x1]
          %v569 = vperm.slane %v567, 0
          %571 = vmatpush.msra.mxu0 0.0
          %572 = vmatpush.msra.mxu0 0.0
          %573 = vmatpush.msra.mxu0 0.0
          %574 = vmatpush.msra.mxu0 0.0
          %575 = vmatpush.msra.mxu0 0.0
          %576 = vmatpush.msra.mxu0 0.0
          %577 = vmatpush.msra.mxu0 0.0
          %578 = vmatpush.msra.mxu0 0.0
          %579 = vmatpush.msra.mxu0 0.0
          %580 = vmatpush.msra.mxu0 0.0
          %581 = vmatpush.msra.mxu0 0.0
          %582 = vmatpush.msra.mxu0 0.0
          %583 = vmatpush.msra.mxu0 %v565
          %584 = vmatpush.msra.mxu0 %v564
          %585 = vmatpush.msra.mxu0 %v563
          %586 = vmatpush.msra.mxu0 %v562
          %587 = vmatmul.f32.gmra.mxu0 %v412
          %v588 = vpop.f32.mrf.mxu0
          %v589 = vadd.f32 %v569, %v588
          %590 = vdwg.mxu0
          %s591 = scalar_lea.vmem [#allocation3], 16
          %592 = vst.msk [vmem:[%s591] sm:$0xff] %vm434, %v589
          %s593 = scalar_lea.vmem %s4, 96
          %v594 = vld [vmem:[%s593] sm:$0xff]
          %v595 = vld [vmem:[%s593 + $0x8] sm:$0xff]
          %v596 = vld [vmem:[%s593 + $0x10] sm:$0xff]
          %v597 = vld [vmem:[%s593 + $0x18] sm:$0xff]
          %s598 = scalar_lea.vmem %s5, 3
          %v599 = vld [vmem:[%s598] sm:$0x1]
          %v601 = vperm.slane %v599, 0
          %603 = vmatpush.msra.mxu0 0.0
          %604 = vmatpush.msra.mxu0 0.0
          %605 = vmatpush.msra.mxu0 0.0
          %606 = vmatpush.msra.mxu0 0.0
          %607 = vmatpush.msra.mxu0 0.0
          %608 = vmatpush.msra.mxu0 0.0
          %609 = vmatpush.msra.mxu0 0.0
          %610 = vmatpush.msra.mxu0 0.0
          %611 = vmatpush.msra.mxu0 0.0
          %612 = vmatpush.msra.mxu0 0.0
          %613 = vmatpush.msra.mxu0 0.0
          %614 = vmatpush.msra.mxu0 0.0
          %615 = vmatpush.msra.mxu0 %v597
          %616 = vmatpush.msra.mxu0 %v596
          %617 = vmatpush.msra.mxu0 %v595
          %618 = vmatpush.msra.mxu0 %v594
          %619 = vmatmul.f32.gmra.mxu0 %v412
          %v620 = vpop.f32.mrf.mxu0
          %v621 = vadd.f32 %v601, %v620
          %622 = vdwg.mxu0
          %s623 = scalar_lea.vmem [#allocation2], 24
          %624 = vst.msk [vmem:[%s623] sm:$0xff] %vm434, %v621
          %s625 = scalar_lea.vmem %s6, 96
          %v626 = vld [vmem:[%s625] sm:$0xff]
          %v627 = vld [vmem:[%s625 + $0x8] sm:$0xff]
          %v628 = vld [vmem:[%s625 + $0x10] sm:$0xff]
          %v629 = vld [vmem:[%s625 + $0x18] sm:$0xff]
          %s630 = scalar_lea.vmem %s7, 3
          %v631 = vld [vmem:[%s630] sm:$0x1]
          %v633 = vperm.slane %v631, 0
          %635 = vmatpush.msra.mxu0 0.0
          %636 = vmatpush.msra.mxu0 0.0
          %637 = vmatpush.msra.mxu0 0.0
          %638 = vmatpush.msra.mxu0 0.0
          %639 = vmatpush.msra.mxu0 0.0
          %640 = vmatpush.msra.mxu0 0.0
          %641 = vmatpush.msra.mxu0 0.0
          %642 = vmatpush.msra.mxu0 0.0
          %643 = vmatpush.msra.mxu0 0.0
          %644 = vmatpush.msra.mxu0 0.0
          %645 = vmatpush.msra.mxu0 0.0
          %646 = vmatpush.msra.mxu0 0.0
          %647 = vmatpush.msra.mxu0 %v629
          %648 = vmatpush.msra.mxu0 %v628
          %649 = vmatpush.msra.mxu0 %v627
          %650 = vmatpush.msra.mxu0 %v626
          %651 = vmatmul.f32.gmra.mxu0 %v412
          %v652 = vpop.f32.mrf.mxu0
          %v653 = vadd.f32 %v633, %v652
          %654 = vdwg.mxu0
          %s655 = scalar_lea.vmem [#allocation3], 24
          %656 = vst.msk [vmem:[%s655] sm:$0xff] %vm434, %v653
        $region64: #{tpu_custom_call.1} parent=59 // pred_fallthru
          _
        %v657 = vld [vmem:[%s396] sm:$0xff]
        %v658 = vld [vmem:[%s2] sm:$0xff]
        %v659 = vld [vmem:[%s2 + $0x8] sm:$0xff]
        %v660 = vld [vmem:[%s2 + $0x10] sm:$0xff]
        %v661 = vld [vmem:[%s2 + $0x18] sm:$0xff]
        %v662 = vld [vmem:[%s3] sm:$0x1]
        %v664 = vperm.slane %v662, 0
        %vm666 = vcmask 261120
        %v668 = vsel %vm666, %v657, 0
        %670 = vmatpush.msra.mxu0 0.0
        %671 = vmatpush.msra.mxu0 0.0
        %672 = vmatpush.msra.mxu0 0.0
        %673 = vmatpush.msra.mxu0 0.0
        %674 = vmatpush.msra.mxu0 0.0
        %675 = vmatpush.msra.mxu0 0.0
        %676 = vmatpush.msra.mxu0 0.0
        %677 = vmatpush.msra.mxu0 0.0
        %678 = vmatpush.msra.mxu0 0.0
        %679 = vmatpush.msra.mxu0 0.0
        %680 = vmatpush.msra.mxu0 0.0
        %681 = vmatpush.msra.mxu0 0.0
        %682 = vmatpush.msra.mxu0 %v661
        %683 = vmatpush.msra.mxu0 %v660
        %684 = vmatpush.msra.mxu0 %v659
        %685 = vmatpush.msra.mxu0 %v658
        %686 = vmatmul.f32.gmra.mxu0 %v668
        %v687 = vpop.f32.mrf.mxu0
        %v688 = vadd.f32 %v664, %v687
        %689 = vdwg.mxu0
        %v690 = vmul.f32 %v688, 0.35355338
        %v691 = vld [vmem:[#allocation2] sm:$0xff]
        %v692 = vld [vmem:[#allocation3] sm:$0xff]
        %vm693 = vcmask 64512
        %v695 = vsel %vm693, %v690, 0
        %v698 = vsel %vm693, %v691, 0
        %700 = vmatpush.xpose.msra.mxu0 0.0
        %701 = vmatpush.xpose.msra.mxu0 0.0
        %702 = vmatpush.xpose.msra.mxu0 0.0
        %703 = vmatpush.xpose.msra.mxu0 0.0
        %704 = vmatpush.xpose.msra.mxu0 0.0
        %705 = vmatpush.xpose.msra.mxu0 0.0
        %706 = vmatpush.xpose.msra.mxu0 0.0
        %707 = vmatpush.xpose.msra.mxu0 0.0
        %708 = vmatpush.xpose.msra.mxu0 0.0
        %709 = vmatpush.xpose.msra.mxu0 0.0
        %710 = vmatpush.xpose.msra.mxu0 0.0
        %711 = vmatpush.xpose.msra.mxu0 0.0
        %712 = vmatpush.xpose.msra.mxu0 0.0
        %713 = vmatpush.xpose.msra.mxu0 0.0
        %714 = vmatpush.xpose.msra.mxu0 0.0
        %715 = vmatpush.xpose.msra.mxu0 %v698
        %716 = vmatmul.f32.gmra.mxu0 %v695
        %v717 = vpop.f32.mrf.mxu0
        %v718 = vadd.f32 0.0, %v717
        %719 = vdwg.mxu0
        %v720 = vsel %vm693, %v718, -inf
        %721 = vmax.xlane.f32.xlu0 %v720
        %v722 = vpop.xlane.xlu0 %721
        %v723 = vsub.f32 -inf, %v722
        %v724 = vmul.f32 %v723, 1.442695
        %v725 = vpow.pop %v724
        %v726 = vsub.f32 %v718, %v722
        %v727 = vmul.f32 %v726, 1.442695
        %v728 = vpow.pop %v727
        %v729 = vmul.f32 %v725, 0.0
        %v730 = vsel %vm693, %v728, 0.0
        %731 = vadd.xlane.f32.xlu0 %v730
        %v732 = vpop.xlane.xlu0 %731
        %v733 = vadd.f32 %v729, %v732
        %v735 = vsel %vm693, %v728, 0
        %737 = vmatpush.msra.mxu0 0.0
        %738 = vmatpush.msra.mxu0 0.0
        %739 = vmatpush.msra.mxu0 0.0
        %740 = vmatpush.msra.mxu0 0.0
        %741 = vmatpush.msra.mxu0 0.0
        %742 = vmatpush.msra.mxu0 0.0
        %743 = vmatpush.msra.mxu0 0.0
        %744 = vmatpush.msra.mxu0 0.0
        %745 = vmatpush.msra.mxu0 0.0
        %746 = vmatpush.msra.mxu0 0.0
        %747 = vmatpush.msra.mxu0 0.0
        %748 = vmatpush.msra.mxu0 0.0
        %749 = vmatpush.msra.mxu0 0.0
        %750 = vmatpush.msra.mxu0 0.0
        %751 = vmatpush.msra.mxu0 0.0
        %752 = vmatpush.msra.mxu0 %v692
        %753 = vmatmul.f32.gmra.mxu0 %v735
        %v754 = vpop.f32.mrf.mxu0
        %v755 = vadd.f32 0.0, %v754
        %756 = vdwg.mxu0
        %v757 = vadd.f32 %v729, %v755
        %v758 = vrcp.pop %v733
        %v759 = vmul.f32 %v733, %v758
        %v760 = vsub.f32 1.0, %v759
        %v761 = vmul.f32 %v758, %v760
        %v762 = vadd.f32 %v758, %v761
        %vm763 = vweird.f32 %v733
        %vm764 = vweird.f32 %v758
        %vm765 = vmor %vm763, %vm764
        %v766 = vsel %vm765, %v758, %v762
        %v767 = vand.u32 2147483647, %v733
        %vm768 = vcmp.eq.f32.partialorder %v767, 8.507059e+37
        %v769 = vand.u32 %v733, 2147483648
        %v770 = vor.u32 1.1754944e-38, %v769
        %v771 = vsel %vm768, %v770, %v766
        %v772 = vmul.f32 1.0, %v771
        %v773 = vmul.f32 %v757, %v772
        %v774 = vld [vmem:[%s8] sm:$0xff]
        %s775 = scalar_lea.vmem %s2, 32
        %v776 = vld [vmem:[%s775] sm:$0xff]
        %v777 = vld [vmem:[%s775 + $0x8] sm:$0xff]
        %v778 = vld [vmem:[%s775 + $0x10] sm:$0xff]
        %v779 = vld [vmem:[%s775 + $0x18] sm:$0xff]
        %s780 = scalar_lea.vmem %s3, 1
        %v781 = vld [vmem:[%s780] sm:$0x1]
        %v783 = vperm.slane %v781, 0
        %785 = vmatpush.msra.mxu0 0.0
        %786 = vmatpush.msra.mxu0 0.0
        %787 = vmatpush.msra.mxu0 0.0
        %788 = vmatpush.msra.mxu0 0.0
        %789 = vmatpush.msra.mxu0 0.0
        %790 = vmatpush.msra.mxu0 0.0
        %791 = vmatpush.msra.mxu0 0.0
        %792 = vmatpush.msra.mxu0 0.0
        %793 = vmatpush.msra.mxu0 0.0
        %794 = vmatpush.msra.mxu0 0.0
        %795 = vmatpush.msra.mxu0 0.0
        %796 = vmatpush.msra.mxu0 0.0
        %797 = vmatpush.msra.mxu0 %v779
        %798 = vmatpush.msra.mxu0 %v778
        %799 = vmatpush.msra.mxu0 %v777
        %800 = vmatpush.msra.mxu0 %v776
        %801 = vmatmul.f32.gmra.mxu0 %v668
        %v802 = vpop.f32.mrf.mxu0
        %v803 = vadd.f32 %v783, %v802
        %804 = vdwg.mxu0
        %v805 = vmul.f32 %v803, 0.35355338
        %s806 = scalar_lea.vmem [#allocation2], 8
        %v807 = vld [vmem:[%s806] sm:$0xff]
        %s808 = scalar_lea.vmem [#allocation3], 8
        %v809 = vld [vmem:[%s808] sm:$0xff]
        %v811 = vsel %vm693, %v805, 0
        %v814 = vsel %vm693, %v807, 0
        %816 = vmatpush.xpose.msra.mxu0 0.0
        %817 = vmatpush.xpose.msra.mxu0 0.0
        %818 = vmatpush.xpose.msra.mxu0 0.0
        %819 = vmatpush.xpose.msra.mxu0 0.0
        %820 = vmatpush.xpose.msra.mxu0 0.0
        %821 = vmatpush.xpose.msra.mxu0 0.0
        %822 = vmatpush.xpose.msra.mxu0 0.0
        %823 = vmatpush.xpose.msra.mxu0 0.0
        %824 = vmatpush.xpose.msra.mxu0 0.0
        %825 = vmatpush.xpose.msra.mxu0 0.0
        %826 = vmatpush.xpose.msra.mxu0 0.0
        %827 = vmatpush.xpose.msra.mxu0 0.0
        %828 = vmatpush.xpose.msra.mxu0 0.0
        %829 = vmatpush.xpose.msra.mxu0 0.0
        %830 = vmatpush.xpose.msra.mxu0 0.0
        %831 = vmatpush.xpose.msra.mxu0 %v814
        %832 = vmatmul.f32.gmra.mxu0 %v811
        %v833 = vpop.f32.mrf.mxu0
        %v834 = vadd.f32 0.0, %v833
        %835 = vdwg.mxu0
        %v836 = vsel %vm693, %v834, -inf
        %837 = vmax.xlane.f32.xlu0 %v836
        %v838 = vpop.xlane.xlu0 %837
        %v839 = vsub.f32 -inf, %v838
        %v840 = vmul.f32 %v839, 1.442695
        %v841 = vpow.pop %v840
        %v842 = vsub.f32 %v834, %v838
        %v843 = vmul.f32 %v842, 1.442695
        %v844 = vpow.pop %v843
        %v845 = vmul.f32 %v841, 0.0
        %v846 = vsel %vm693, %v844, 0.0
        %847 = vadd.xlane.f32.xlu0 %v846
        %v848 = vpop.xlane.xlu0 %847
        %v849 = vadd.f32 %v845, %v848
        %v851 = vsel %vm693, %v844, 0
        %853 = vmatpush.msra.mxu0 0.0
        %854 = vmatpush.msra.mxu0 0.0
        %855 = vmatpush.msra.mxu0 0.0
        %856 = vmatpush.msra.mxu0 0.0
        %857 = vmatpush.msra.mxu0 0.0
        %858 = vmatpush.msra.mxu0 0.0
        %859 = vmatpush.msra.mxu0 0.0
        %860 = vmatpush.msra.mxu0 0.0
        %861 = vmatpush.msra.mxu0 0.0
        %862 = vmatpush.msra.mxu0 0.0
        %863 = vmatpush.msra.mxu0 0.0
        %864 = vmatpush.msra.mxu0 0.0
        %865 = vmatpush.msra.mxu0 0.0
        %866 = vmatpush.msra.mxu0 0.0
        %867 = vmatpush.msra.mxu0 0.0
        %868 = vmatpush.msra.mxu0 %v809
        %869 = vmatmul.f32.gmra.mxu0 %v851
        %v870 = vpop.f32.mrf.mxu0
        %v871 = vadd.f32 0.0, %v870
        %872 = vdwg.mxu0
        %v873 = vadd.f32 %v845, %v871
        %v874 = vrcp.pop %v849
        %v875 = vmul.f32 %v849, %v874
        %v876 = vsub.f32 1.0, %v875
        %v877 = vmul.f32 %v874, %v876
        %v878 = vadd.f32 %v874, %v877
        %vm879 = vweird.f32 %v849
        %vm880 = vweird.f32 %v874
        %vm881 = vmor %vm879, %vm880
        %v882 = vsel %vm881, %v874, %v878
        %v883 = vand.u32 2147483647, %v849
        %vm884 = vcmp.eq.f32.partialorder %v883, 8.507059e+37
        %v885 = vand.u32 %v849, 2147483648
        %v886 = vor.u32 1.1754944e-38, %v885
        %v887 = vsel %vm884, %v886, %v882
        %v888 = vmul.f32 1.0, %v887
        %v889 = vmul.f32 %v873, %v888
        %s890 = scalar_lea.vmem %s8, 8
        %v891 = vld [vmem:[%s890] sm:$0xff]
        %v893 = vsel %vm693, %v889, 0
        %895 = vmatpush.msra.mxu0 0.0
        %896 = vmatpush.msra.mxu0 0.0
        %897 = vmatpush.msra.mxu0 0.0
        %898 = vmatpush.msra.mxu0 0.0
        %899 = vmatpush.msra.mxu0 0.0
        %900 = vmatpush.msra.mxu0 0.0
        %901 = vmatpush.msra.mxu0 0.0
        %902 = vmatpush.msra.mxu0 0.0
        %903 = vmatpush.msra.mxu0 0.0
        %904 = vmatpush.msra.mxu0 0.0
        %905 = vmatpush.msra.mxu0 0.0
        %906 = vmatpush.msra.mxu0 0.0
        %907 = vmatpush.msra.mxu0 0.0
        %908 = vmatpush.msra.mxu0 0.0
        %909 = vmatpush.msra.mxu0 0.0
        %910 = vmatpush.msra.mxu0 %v891
        %911 = vmatmul.f32.gmra.mxu0 %v893
        %v912 = vpop.f32.mrf.mxu0
        %v913 = vadd.f32 0.0, %v912
        %914 = vdwg.mxu0
        %v916 = vsel %vm693, %v773, 0
        %918 = vmatpush.msra.mxu0 0.0
        %919 = vmatpush.msra.mxu0 0.0
        %920 = vmatpush.msra.mxu0 0.0
        %921 = vmatpush.msra.mxu0 0.0
        %922 = vmatpush.msra.mxu0 0.0
        %923 = vmatpush.msra.mxu0 0.0
        %924 = vmatpush.msra.mxu0 0.0
        %925 = vmatpush.msra.mxu0 0.0
        %926 = vmatpush.msra.mxu0 0.0
        %927 = vmatpush.msra.mxu0 0.0
        %928 = vmatpush.msra.mxu0 0.0
        %929 = vmatpush.msra.mxu0 0.0
        %930 = vmatpush.msra.mxu0 0.0
        %931 = vmatpush.msra.mxu0 0.0
        %932 = vmatpush.msra.mxu0 0.0
        %933 = vmatpush.msra.mxu0 %v774
        %934 = vmatmul.f32.gmra.mxu0 %v916
        %v935 = vpop.f32.mrf.mxu0
        %v936 = vadd.f32 %v913, %v935
        %937 = vdwg.mxu0
        %s938 = scalar_lea.vmem %s2, 64
        %v939 = vld [vmem:[%s938] sm:$0xff]
        %v940 = vld [vmem:[%s938 + $0x8] sm:$0xff]
        %v941 = vld [vmem:[%s938 + $0x10] sm:$0xff]
        %v942 = vld [vmem:[%s938 + $0x18] sm:$0xff]
        %s943 = scalar_lea.vmem %s3, 2
        %v944 = vld [vmem:[%s943] sm:$0x1]
        %v946 = vperm.slane %v944, 0
        %948 = vmatpush.msra.mxu0 0.0
        %949 = vmatpush.msra.mxu0 0.0
        %950 = vmatpush.msra.mxu0 0.0
        %951 = vmatpush.msra.mxu0 0.0
        %952 = vmatpush.msra.mxu0 0.0
        %953 = vmatpush.msra.mxu0 0.0
        %954 = vmatpush.msra.mxu0 0.0
        %955 = vmatpush.msra.mxu0 0.0
        %956 = vmatpush.msra.mxu0 0.0
        %957 = vmatpush.msra.mxu0 0.0
        %958 = vmatpush.msra.mxu0 0.0
        %959 = vmatpush.msra.mxu0 0.0
        %960 = vmatpush.msra.mxu0 %v942
        %961 = vmatpush.msra.mxu0 %v941
        %962 = vmatpush.msra.mxu0 %v940
        %963 = vmatpush.msra.mxu0 %v939
        %964 = vmatmul.f32.gmra.mxu0 %v668
        %v965 = vpop.f32.mrf.mxu0
        %v966 = vadd.f32 %v946, %v965
        %967 = vdwg.mxu0
        %v968 = vmul.f32 %v966, 0.35355338
        %s969 = scalar_lea.vmem [#allocation2], 16
        %v970 = vld [vmem:[%s969] sm:$0xff]
        %s971 = scalar_lea.vmem [#allocation3], 16
        %v972 = vld [vmem:[%s971] sm:$0xff]
        %v974 = vsel %vm693, %v968, 0
        %v977 = vsel %vm693, %v970, 0
        %979 = vmatpush.xpose.msra.mxu0 0.0
        %980 = vmatpush.xpose.msra.mxu0 0.0
        %981 = vmatpush.xpose.msra.mxu0 0.0
        %982 = vmatpush.xpose.msra.mxu0 0.0
        %983 = vmatpush.xpose.msra.mxu0 0.0
        %984 = vmatpush.xpose.msra.mxu0 0.0
        %985 = vmatpush.xpose.msra.mxu0 0.0
        %986 = vmatpush.xpose.msra.mxu0 0.0
        %987 = vmatpush.xpose.msra.mxu0 0.0
        %988 = vmatpush.xpose.msra.mxu0 0.0
        %989 = vmatpush.xpose.msra.mxu0 0.0
        %990 = vmatpush.xpose.msra.mxu0 0.0
        %991 = vmatpush.xpose.msra.mxu0 0.0
        %992 = vmatpush.xpose.msra.mxu0 0.0
        %993 = vmatpush.xpose.msra.mxu0 0.0
        %994 = vmatpush.xpose.msra.mxu0 %v977
        %995 = vmatmul.f32.gmra.mxu0 %v974
        %v996 = vpop.f32.mrf.mxu0
        %v997 = vadd.f32 0.0, %v996
        %998 = vdwg.mxu0
        %v999 = vsel %vm693, %v997, -inf
        %1000 = vmax.xlane.f32.xlu0 %v999
        %v1001 = vpop.xlane.xlu0 %1000
        %v1002 = vsub.f32 -inf, %v1001
        %v1003 = vmul.f32 %v1002, 1.442695
        %v1004 = vpow.pop %v1003
        %v1005 = vsub.f32 %v997, %v1001
        %v1006 = vmul.f32 %v1005, 1.442695
        %v1007 = vpow.pop %v1006
        %v1008 = vmul.f32 %v1004, 0.0
        %v1009 = vsel %vm693, %v1007, 0.0
        %1010 = vadd.xlane.f32.xlu0 %v1009
        %v1011 = vpop.xlane.xlu0 %1010
        %v1012 = vadd.f32 %v1008, %v1011
        %v1014 = vsel %vm693, %v1007, 0
        %1016 = vmatpush.msra.mxu0 0.0
        %1017 = vmatpush.msra.mxu0 0.0
        %1018 = vmatpush.msra.mxu0 0.0
        %1019 = vmatpush.msra.mxu0 0.0
        %1020 = vmatpush.msra.mxu0 0.0
        %1021 = vmatpush.msra.mxu0 0.0
        %1022 = vmatpush.msra.mxu0 0.0
        %1023 = vmatpush.msra.mxu0 0.0
        %1024 = vmatpush.msra.mxu0 0.0
        %1025 = vmatpush.msra.mxu0 0.0
        %1026 = vmatpush.msra.mxu0 0.0
        %1027 = vmatpush.msra.mxu0 0.0
        %1028 = vmatpush.msra.mxu0 0.0
        %1029 = vmatpush.msra.mxu0 0.0
        %1030 = vmatpush.msra.mxu0 0.0
        %1031 = vmatpush.msra.mxu0 %v972
        %1032 = vmatmul.f32.gmra.mxu0 %v1014
        %v1033 = vpop.f32.mrf.mxu0
        %v1034 = vadd.f32 0.0, %v1033
        %1035 = vdwg.mxu0
        %v1036 = vadd.f32 %v1008, %v1034
        %v1037 = vrcp.pop %v1012
        %v1038 = vmul.f32 %v1012, %v1037
        %v1039 = vsub.f32 1.0, %v1038
        %v1040 = vmul.f32 %v1037, %v1039
        %v1041 = vadd.f32 %v1037, %v1040
        %vm1042 = vweird.f32 %v1012
        %vm1043 = vweird.f32 %v1037
        %vm1044 = vmor %vm1042, %vm1043
        %v1045 = vsel %vm1044, %v1037, %v1041
        %v1046 = vand.u32 2147483647, %v1012
        %vm1047 = vcmp.eq.f32.partialorder %v1046, 8.507059e+37
        %v1048 = vand.u32 %v1012, 2147483648
        %v1049 = vor.u32 1.1754944e-38, %v1048
        %v1050 = vsel %vm1047, %v1049, %v1045
        %v1051 = vmul.f32 1.0, %v1050
        %v1052 = vmul.f32 %v1036, %v1051
        %s1053 = scalar_lea.vmem %s8, 16
        %v1054 = vld [vmem:[%s1053] sm:$0xff]
        %v1056 = vsel %vm693, %v1052, 0
        %1058 = vmatpush.msra.mxu0 0.0
        %1059 = vmatpush.msra.mxu0 0.0
        %1060 = vmatpush.msra.mxu0 0.0
        %1061 = vmatpush.msra.mxu0 0.0
        %1062 = vmatpush.msra.mxu0 0.0
        %1063 = vmatpush.msra.mxu0 0.0
        %1064 = vmatpush.msra.mxu0 0.0
        %1065 = vmatpush.msra.mxu0 0.0
        %1066 = vmatpush.msra.mxu0 0.0
        %1067 = vmatpush.msra.mxu0 0.0
        %1068 = vmatpush.msra.mxu0 0.0
        %1069 = vmatpush.msra.mxu0 0.0
        %1070 = vmatpush.msra.mxu0 0.0
        %1071 = vmatpush.msra.mxu0 0.0
        %1072 = vmatpush.msra.mxu0 0.0
        %1073 = vmatpush.msra.mxu0 %v1054
        %1074 = vmatmul.f32.gmra.mxu0 %v1056
        %v1075 = vpop.f32.mrf.mxu0
        %v1076 = vadd.f32 0.0, %v1075
        %1077 = vdwg.mxu0
        %v1078 = vadd.f32 %v936, %v1076
        %s1079 = scalar_lea.vmem %s2, 96
        %v1080 = vld [vmem:[%s1079] sm:$0xff]
        %v1081 = vld [vmem:[%s1079 + $0x8] sm:$0xff]
        %v1082 = vld [vmem:[%s1079 + $0x10] sm:$0xff]
        %v1083 = vld [vmem:[%s1079 + $0x18] sm:$0xff]
        %s1084 = scalar_lea.vmem %s3, 3
        %v1085 = vld [vmem:[%s1084] sm:$0x1]
        %v1087 = vperm.slane %v1085, 0
        %1089 = vmatpush.msra.mxu0 0.0
        %1090 = vmatpush.msra.mxu0 0.0
        %1091 = vmatpush.msra.mxu0 0.0
        %1092 = vmatpush.msra.mxu0 0.0
        %1093 = vmatpush.msra.mxu0 0.0
        %1094 = vmatpush.msra.mxu0 0.0
        %1095 = vmatpush.msra.mxu0 0.0
        %1096 = vmatpush.msra.mxu0 0.0
        %1097 = vmatpush.msra.mxu0 0.0
        %1098 = vmatpush.msra.mxu0 0.0
        %1099 = vmatpush.msra.mxu0 0.0
        %1100 = vmatpush.msra.mxu0 0.0
        %1101 = vmatpush.msra.mxu0 %v1083
        %1102 = vmatpush.msra.mxu0 %v1082
        %1103 = vmatpush.msra.mxu0 %v1081
        %1104 = vmatpush.msra.mxu0 %v1080
        %1105 = vmatmul.f32.gmra.mxu0 %v668
        %v1106 = vpop.f32.mrf.mxu0
        %v1107 = vadd.f32 %v1087, %v1106
        %1108 = vdwg.mxu0
        %v1109 = vmul.f32 %v1107, 0.35355338
        %s1110 = scalar_lea.vmem [#allocation2], 24
        %v1111 = vld [vmem:[%s1110] sm:$0xff]
        %s1112 = scalar_lea.vmem [#allocation3], 24
        %v1113 = vld [vmem:[%s1112] sm:$0xff]
        %v1115 = vsel %vm693, %v1109, 0
        %v1118 = vsel %vm693, %v1111, 0
        %1120 = vmatpush.xpose.msra.mxu0 0.0
        %1121 = vmatpush.xpose.msra.mxu0 0.0
        %1122 = vmatpush.xpose.msra.mxu0 0.0
        %1123 = vmatpush.xpose.msra.mxu0 0.0
        %1124 = vmatpush.xpose.msra.mxu0 0.0
        %1125 = vmatpush.xpose.msra.mxu0 0.0
        %1126 = vmatpush.xpose.msra.mxu0 0.0
        %1127 = vmatpush.xpose.msra.mxu0 0.0
        %1128 = vmatpush.xpose.msra.mxu0 0.0
        %1129 = vmatpush.xpose.msra.mxu0 0.0
        %1130 = vmatpush.xpose.msra.mxu0 0.0
        %1131 = vmatpush.xpose.msra.mxu0 0.0
        %1132 = vmatpush.xpose.msra.mxu0 0.0
        %1133 = vmatpush.xpose.msra.mxu0 0.0
        %1134 = vmatpush.xpose.msra.mxu0 0.0
        %1135 = vmatpush.xpose.msra.mxu0 %v1118
        %1136 = vmatmul.f32.gmra.mxu0 %v1115
        %v1137 = vpop.f32.mrf.mxu0
        %v1138 = vadd.f32 0.0, %v1137
        %1139 = vdwg.mxu0
        %v1140 = vsel %vm693, %v1138, -inf
        %1141 = vmax.xlane.f32.xlu0 %v1140
        %v1142 = vpop.xlane.xlu0 %1141
        %v1143 = vsub.f32 -inf, %v1142
        %v1144 = vmul.f32 %v1143, 1.442695
        %v1145 = vpow.pop %v1144
        %v1146 = vsub.f32 %v1138, %v1142
        %v1147 = vmul.f32 %v1146, 1.442695
        %v1148 = vpow.pop %v1147
        %v1149 = vmul.f32 %v1145, 0.0
        %v1150 = vsel %vm693, %v1148, 0.0
        %1151 = vadd.xlane.f32.xlu0 %v1150
        %v1152 = vpop.xlane.xlu0 %1151
        %v1153 = vadd.f32 %v1149, %v1152
        %v1155 = vsel %vm693, %v1148, 0
        %1157 = vmatpush.msra.mxu0 0.0
        %1158 = vmatpush.msra.mxu0 0.0
        %1159 = vmatpush.msra.mxu0 0.0
        %1160 = vmatpush.msra.mxu0 0.0
        %1161 = vmatpush.msra.mxu0 0.0
        %1162 = vmatpush.msra.mxu0 0.0
        %1163 = vmatpush.msra.mxu0 0.0
        %1164 = vmatpush.msra.mxu0 0.0
        %1165 = vmatpush.msra.mxu0 0.0
        %1166 = vmatpush.msra.mxu0 0.0
        %1167 = vmatpush.msra.mxu0 0.0
        %1168 = vmatpush.msra.mxu0 0.0
        %1169 = vmatpush.msra.mxu0 0.0
        %1170 = vmatpush.msra.mxu0 0.0
        %1171 = vmatpush.msra.mxu0 0.0
        %1172 = vmatpush.msra.mxu0 %v1113
        %1173 = vmatmul.f32.gmra.mxu0 %v1155
        %v1174 = vpop.f32.mrf.mxu0
        %v1175 = vadd.f32 0.0, %v1174
        %1176 = vdwg.mxu0
        %v1177 = vadd.f32 %v1149, %v1175
        %v1178 = vrcp.pop %v1153
        %v1179 = vmul.f32 %v1153, %v1178
        %v1180 = vsub.f32 1.0, %v1179
        %v1181 = vmul.f32 %v1178, %v1180
        %v1182 = vadd.f32 %v1178, %v1181
        %vm1183 = vweird.f32 %v1153
        %vm1184 = vweird.f32 %v1178
        %vm1185 = vmor %vm1183, %vm1184
        %v1186 = vsel %vm1185, %v1178, %v1182
        %v1187 = vand.u32 2147483647, %v1153
        %vm1188 = vcmp.eq.f32.partialorder %v1187, 8.507059e+37
        %v1189 = vand.u32 %v1153, 2147483648
        %v1190 = vor.u32 1.1754944e-38, %v1189
        %v1191 = vsel %vm1188, %v1190, %v1186
        %v1192 = vmul.f32 1.0, %v1191
        %v1193 = vmul.f32 %v1177, %v1192
        %s1194 = scalar_lea.vmem %s8, 24
        %v1195 = vld [vmem:[%s1194] sm:$0xff]
        %v1197 = vsel %vm693, %v1193, 0
        %1199 = vmatpush.msra.mxu0 0.0
        %1200 = vmatpush.msra.mxu0 0.0
        %1201 = vmatpush.msra.mxu0 0.0
        %1202 = vmatpush.msra.mxu0 0.0
        %1203 = vmatpush.msra.mxu0 0.0
        %1204 = vmatpush.msra.mxu0 0.0
        %1205 = vmatpush.msra.mxu0 0.0
        %1206 = vmatpush.msra.mxu0 0.0
        %1207 = vmatpush.msra.mxu0 0.0
        %1208 = vmatpush.msra.mxu0 0.0
        %1209 = vmatpush.msra.mxu0 0.0
        %1210 = vmatpush.msra.mxu0 0.0
        %1211 = vmatpush.msra.mxu0 0.0
        %1212 = vmatpush.msra.mxu0 0.0
        %1213 = vmatpush.msra.mxu0 0.0
        %1214 = vmatpush.msra.mxu0 %v1195
        %1215 = vmatmul.f32.gmra.mxu0 %v1197
        %v1216 = vpop.f32.mrf.mxu0
        %v1217 = vadd.f32 0.0, %v1216
        %1218 = vdwg.mxu0
        %v1219 = vadd.f32 %v1078, %v1217
        %v1220 = vld [vmem:[%s9] sm:$0x1]
        %v1222 = vperm.slane %v1220, 0
        %v1224 = vadd.f32 %v1219, %v1222
        %1225 = vst.msk [vmem:[%s385] sm:$0xff] %vm666, %v1224
        %s1226 = sand.u32 %s268, 1
        %s1227 = scalar_lea.sflag [#allocation5], %s1226
        %s1228 = sand.u32 %s268, 1
        %s1229 = smul.addr %s1228, 8
        %s1230 = scalar_lea.vmem [#allocation4], %s1229
        // Predicated region
        $region65: #{tpu_custom_call.1} parent=59 // pred_check
          %p1231 = pneg %p278
        $region66: #{tpu_custom_call.1} parent=59 // pred_check_branch
          %1233 = sbr.rel (%p1231) target = $region68
        $region67: #{tpu_custom_call.1} parent=59 // pred_region
          %1235 = vsyncadd %s1227, 0
          %s1236 = sadd.s32 %s29, %s28
          %s1237 = smul.addr %s1236, 8
          %s1238 = scalar_lea.hbm %s10, %s1237
          %s1240 = sshll.u32 %s1230, 4
          %s1241 = int_to_ptr.vmem [resolvable:$true] %s1240
          %s1242 = sshll.u32 %s1238, 4
          %s1243 = int_to_ptr.hbm [resolvable:$true] %s1242
          %1245 = dma.vmem_to_hbm [thread:$0]  %s1241, 128, %s1243, %s1227
        $region68: #{tpu_custom_call.1} parent=59 // pred_fallthru
          _
      $region60: #{tpu_custom_call.1} parent=5 // pred_fallthru
        _
      %p1246 = scmp.le.s32.totalorder 2, %s19
      // Predicated region
      $region69: #{tpu_custom_call.1} parent=5 // pred_check
        %p1247 = pneg %p1246
      $region70: #{tpu_custom_call.1} parent=5 // pred_check_branch
        %1249 = sbr.rel (%p1247) target = $region72
      $region71: #{tpu_custom_call.1} parent=5 // pred_region
        %s1250 = ssub.s32 %s19, 2
        // Predicated region
        $region73: #{tpu_custom_call.1} parent=71 // pred_check
          %p1251 = pneg %p284
        $region74: #{tpu_custom_call.1} parent=71 // pred_check_branch
          %1253 = sbr.rel (%p1251) target = $region76
        $region75: #{tpu_custom_call.1} parent=71 // pred_region
          %s1254 = sand.u32 %s269, 1
          %s1255 = scalar_lea.sflag [#allocation5], %s1254
          %s1256 = sand.u32 %s269, 1
          %s1257 = smul.addr %s1256, 8
          %s1258 = scalar_lea.vmem [#allocation4], %s1257
          %1260 = dma.done %s1255, 128
        $region76: #{tpu_custom_call.1} parent=71 // pred_fallthru
          _
      $region72: #{tpu_custom_call.1} parent=5 // pred_fallthru
        _
    $region6: #{tpu_custom_call.1} parent=1 // loop_footer
      %s23 = sadd.s32 1, %s19
    $region7: #{tpu_custom_call.1} parent=1 // loop_footer_branch
      %18 = sbr.rel target = $region3
    $region8: #{tpu_custom_call.1} parent=1 // loop_exit
      _
    %1261 = vsyncpa [#allocation5], 1
    %s1262 = scalar_lea.sflag [#allocation5], 1
    %1263 = vsyncpa %s1262, 1

</llo_original>
